<compile_context>
chip_gen: v7x
topology: tpu7x:2x2x1
jax: 0.10.0
libtpu: 0.0.40
codegen_flags: <defaults>
</compile_context>

<pallas_src>
import functools

import jax
import jax.numpy as jnp
from jax.experimental import pallas as pl
from jax.experimental.pallas import tpu as pltpu


_COMPILER_PARAMS = pltpu.CompilerParams(
    dimension_semantics=("parallel",),
    vmem_limit_bytes=32 * 1024 * 1024,
)


# ---------------------------------------------------------------------------
# tiling helpers (always produce legal, evenly dividing blocks)
# ---------------------------------------------------------------------------
def _batch_tile(b, cap):
    """Largest divisor of b that is <= cap (leading block dims: no alignment rule)."""
    t = min(b, cap)
    while b % t:
        t -= 1
    return t


def _row_tile(b, cap):
    """Row tile for 2-D (rows, feat) blocks: full array, or a multiple-of-8
    divisor of b, so the (8,128) block constraint always holds."""
    if b <= cap:
        return b
    t = (cap // 8) * 8
    while t >= 8:
        if b % t == 0:
            return t
        t -= 8
    return b


# ---------------------------------------------------------------------------
# Kernel 1: fused conv-as-GEMM + bias + ReLU + 2x2 max-pool
# ---------------------------------------------------------------------------
def _conv_pool_kernel(p_ref, w_ref, b_ref, o_ref, *, n_corners, tb):
    # p_ref: (n_corners, tb, R, K) pool-corner-grouped im2col patches
    # w_ref: (K, N)   b_ref: (1, N)   o_ref: (tb, R, N)
    w = w_ref[...]
    b = b_ref[...]
    for t in range(tb):                       # static unroll over images in block
        acc = jnp.dot(p_ref[0, t], w, preferred_element_type=jnp.float32)
        for c in range(1, n_corners):         # max over the 2x2 pool window
            acc = jnp.maximum(
                acc, jnp.dot(p_ref[c, t], w, preferred_element_type=jnp.float32))
        # bias is corner-invariant and ReLU is monotone, so
        # maxpool(relu(conv+b)) == relu(max_corners(GEMM) + b)
        o_ref[t] = jnp.maximum(acc + b, 0.0)


def conv_pool_gemm(patches, w, b):
    """patches: (4, B, R, K); w: (K, N); b: (1, N) -> (B, R, N) pooled+ReLU'd."""
    n_corners, B, R, K = patches.shape
    N = w.shape[1]
    tb = _batch_tile(B, 8)                    # ~1.5k GEMM rows per conv1 block
    kernel = functools.partial(_conv_pool_kernel, n_corners=n_corners, tb=tb)
    return pl.pallas_call(
        kernel,
        out_shape=jax.ShapeDtypeStruct((B, R, N), jnp.float32),
        grid=(B // tb,),
        in_specs=[
            pl.BlockSpec((n_corners, tb, R, K), lambda i: (0, i, 0, 0)),
            pl.BlockSpec((K, N), lambda i: (0, 0)),
            pl.BlockSpec((1, N), lambda i: (0, 0)),
        ],
        out_specs=pl.BlockSpec((tb, R, N), lambda i: (i, 0, 0)),
        compiler_params=_COMPILER_PARAMS,
    )(patches, w, b)


# ---------------------------------------------------------------------------
# Kernel 2: fused FC chain fc1 -> ReLU -> fc2 -> ReLU -> fc3
# ---------------------------------------------------------------------------
def _fc_chain_kernel(x_ref, w1_ref, b1_ref, w2_ref, b2_ref, w3_ref, b3_ref, o_ref):
    h = jnp.dot(x_ref[...], w1_ref[...], preferred_element_type=jnp.float32) + b1_ref[...]
    h = jnp.maximum(h, 0.0)
    h = jnp.dot(h, w2_ref[...], preferred_element_type=jnp.float32) + b2_ref[...]
    h = jnp.maximum(h, 0.0)
    o_ref[...] = jnp.dot(h, w3_ref[...], preferred_element_type=jnp.float32) + b3_ref[...]


def fc_chain(x, params):
    B, K = x.shape
    N1 = params["fc1_w"].shape[1]
    N2 = params["fc2_w"].shape[1]
    N3 = params["fc3_w"].shape[1]
    tb = _row_tile(B, 512)
    return pl.pallas_call(
        _fc_chain_kernel,
        out_shape=jax.ShapeDtypeStruct((B, N3), jnp.float32),
        grid=(B // tb,),
        in_specs=[
            pl.BlockSpec((tb, K), lambda i: (i, 0)),
            pl.BlockSpec((K, N1), lambda i: (0, 0)),
            pl.BlockSpec((1, N1), lambda i: (0, 0)),
            pl.BlockSpec((N1, N2), lambda i: (0, 0)),
            pl.BlockSpec((1, N2), lambda i: (0, 0)),
            pl.BlockSpec((N2, N3), lambda i: (0, 0)),
            pl.BlockSpec((1, N3), lambda i: (0, 0)),
        ],
        out_specs=pl.BlockSpec((tb, N3), lambda i: (i, 0)),
        compiler_params=_COMPILER_PARAMS,
    )(x, params["fc1_w"], params["fc1_b"], params["fc2_w"], params["fc2_b"],
      params["fc3_w"], params["fc3_b"])


# ---------------------------------------------------------------------------
# Glue: pool-corner-grouped im2col (channels-last, valid, stride-1 conv + 2x2/2 pool)
# ---------------------------------------------------------------------------
def pooled_patches(x, kh, kw):
    """x: (B, H, W, C) -> (4, B, Hp*Wp, C*kh*kw).

    Corner c of the output holds the im2col patch matrix of the conv positions
    that corner contributes to the 2x2/stride-2 max pool. Tap order along K is
    (c, i, j), matching PyTorch weight.reshape(out_c, -1)."""
    B, H, W, C = x.shape
    Ho, Wo = H - kh + 1, W - kw + 1
    Hp, Wp = Ho // 2, Wo // 2
    taps = [x[:, i:i + Ho, j:j + Wo, c]
            for c in range(C) for i in range(kh) for j in range(kw)]
    full = jnp.stack(taps, axis=-1)                       # (B, Ho, Wo, C*kh*kw)
    corners = [
        full[:, dh:dh + 2 * Hp:2, dw:dw + 2 * Wp:2, :].reshape(B, Hp * Wp, C * kh * kw)
        for dh in (0, 1) for dw in (0, 1)
    ]
    return jnp.stack(corners, axis=0)                     # (4, B, Hp*Wp, C*kh*kw)


# ---------------------------------------------------------------------------
# Full forward pass (mirrors Net.forward)
# ---------------------------------------------------------------------------
def net_forward(x, params):
    B = x.shape[0]
    x = x.reshape(B, 32, 32, 1)                           # NCHW (C=1) -> NHWC, free

    # conv1 + ReLU + maxpool(2,2), fused
    p1 = pooled_patches(x, 5, 5)                          # (4, B, 196, 25)
    y1 = conv_pool_gemm(p1, params["conv1_w"], params["conv1_b"])   # (B, 196, 6)

    # conv2 + ReLU + maxpool(2), fused (channels-last throughout)
    p2 = pooled_patches(y1.reshape(B, 14, 14, 6), 5, 5)   # (4, B, 25, 150)
    y2 = conv_pool_gemm(p2, params["conv2_w"], params["conv2_b"])   # (B, 25, 16)

    # channels-last flatten; the PyTorch NCHW flatten order is baked into fc1_w
    feats = y2.reshape(B, 400)
    return fc_chain(feats, params)                        # (B, 10)


# ---------------------------------------------------------------------------
# Parameters: PyTorch-layout init + one-time repack into kernel layout
# ---------------------------------------------------------------------------
def init_torch_params(key):
    ks = jax.random.split(key, 10)

    def u(k, shape, fan_in):
        bound = 1.0 / (fan_in ** 0.5)
        return jax.random.uniform(k, shape, jnp.float32, -bound, bound)

    return {
        "conv1_w": u(ks[0], (6, 1, 5, 5), 1 * 5 * 5),
        "conv1_b": u(ks[1], (6,), 1 * 5 * 5),
        "conv2_w": u(ks[2], (16, 6, 5, 5), 6 * 5 * 5),
        "conv2_b": u(ks[3], (16,), 6 * 5 * 5),
        "fc1_w": u(ks[4], (120, 400), 400),
        "fc1_b": u(ks[5], (120,), 400),
        "fc2_w": u(ks[6], (84, 120), 120),
        "fc2_b": u(ks[7], (84,), 120),
        "fc3_w": u(ks[8], (10, 84), 84),
        "fc3_b": u(ks[9], (10,), 84),
    }


def pack_params(p):
    """One-time repack of PyTorch-layout weights into the kernel layout."""
    def conv_w(w):                      # (O, C, kh, kw) -> (C*kh*kw, O), (c,i,j) order
        return w.reshape(w.shape[0], -1).T

    # fc1 consumes the channels-last flatten (h*80 + w*16 + c) instead of the
    # PyTorch NCHW flatten (c*25 + h*5 + w): permute its columns once here.
    fc1_cl = (p["fc1_w"].reshape(120, 16, 5, 5)
              .transpose(0, 2, 3, 1)
              .reshape(120, 400))
    return {
        "conv1_w": conv_w(p["conv1_w"]), "conv1_b": p["conv1_b"].reshape(1, -1),
        "conv2_w": conv_w(p["conv2_w"]), "conv2_b": p["conv2_b"].reshape(1, -1),
        "fc1_w": fc1_cl.T,               "fc1_b": p["fc1_b"].reshape(1, -1),
        "fc2_w": p["fc2_w"].T,           "fc2_b": p["fc2_b"].reshape(1, -1),
        "fc3_w": p["fc3_w"].T,           "fc3_b": p["fc3_b"].reshape(1, -1),
    }


if __name__ == "__main__":
    key = jax.random.PRNGKey(0)
    pkey, xkey = jax.random.split(key)
    params = pack_params(init_torch_params(pkey))
    # Input spatial size must be 32x32 so the flatten is 16*5*5 = 400.
    x = jax.random.normal(xkey, (2, 1, 32, 32), jnp.float32)
    out = jax.jit(net_forward)(x, params)
    jax.block_until_ready(out)
    assert out.shape == (2, 10)
    assert bool(jnp.all(jnp.isfinite(out)))
    print("KERNEL_OK")
</pallas_src>

<mosaic_0001>
module attributes {stable_mosaic.version = 11 : i64} {
  func.func @_conv_pool_kernel(%arg0: i32, %arg1: memref<4x2x196x25xf32, #tpu.memory_space<vmem>>, %arg2: memref<25x6xf32, #tpu.memory_space<vmem>>, %arg3: memref<1x6xf32, #tpu.memory_space<vmem>>, %arg4: memref<2x196x6xf32, #tpu.memory_space<vmem>>) attributes {dimension_semantics = [#tpu.dimension_semantics<parallel>], iteration_bounds = array<i64: 1>, scalar_prefetch = 0 : i64, scratch_operands = 0 : i64, tpu.core_type = #tpu.core_type<tc>, window_params = [{transform_indices = @transform_0, window_bounds = array<i64: 4, 2, 196, 25>}, {pipeline_mode = #tpu.pipeline_mode<synchronous>, transform_indices = @transform_1, window_bounds = array<i64: 25, 6>}, {pipeline_mode = #tpu.pipeline_mode<synchronous>, transform_indices = @transform_2, window_bounds = array<i64: 1, 6>}, {transform_indices = @transform_3, window_bounds = array<i64: 2, 196, 6>}]} {
    %c0 = arith.constant 0 : index
    %c0_0 = arith.constant 0 : index
    %0 = vector.load %arg2[%c0, %c0_0] : memref<25x6xf32, #tpu.memory_space<vmem>>, vector<25x6xf32>
    %c0_1 = arith.constant 0 : index
    %c0_2 = arith.constant 0 : index
    %1 = vector.load %arg3[%c0_1, %c0_2] : memref<1x6xf32, #tpu.memory_space<vmem>>, vector<1x6xf32>
    %c0_3 = arith.constant 0 : index
    %c0_4 = arith.constant 0 : index
    %c0_5 = arith.constant 0 : index
    %c0_6 = arith.constant 0 : index
    %2 = vector.load %arg1[%c0_3, %c0_4, %c0_5, %c0_6] : memref<4x2x196x25xf32, #tpu.memory_space<vmem>>, vector<1x1x196x25xf32>
    %3 = vector.shape_cast %2 : vector<1x1x196x25xf32> to vector<196x25xf32>
    %cst = arith.constant dense<0.000000e+00> : vector<196x6xf32>
    %4 = tpu.matmul %3, %0, %cst {dimension_numbers = #tpu.dot_dimension_numbers<[1], [0], [0], [1], [0, 0, 1, 1], [], []>} : vector<196x25xf32>, vector<25x6xf32>, vector<196x6xf32> -> vector<196x6xf32>
    %c1 = arith.constant 1 : index
    %c0_7 = arith.constant 0 : index
    %c0_8 = arith.constant 0 : index
    %c0_9 = arith.constant 0 : index
    %5 = vector.load %arg1[%c1, %c0_7, %c0_8, %c0_9] : memref<4x2x196x25xf32, #tpu.memory_space<vmem>>, vector<1x1x196x25xf32>
    %6 = vector.shape_cast %5 : vector<1x1x196x25xf32> to vector<196x25xf32>
    %cst_10 = arith.constant dense<0.000000e+00> : vector<196x6xf32>
    %7 = tpu.matmul %6, %0, %cst_10 {dimension_numbers = #tpu.dot_dimension_numbers<[1], [0], [0], [1], [0, 0, 1, 1], [], []>} : vector<196x25xf32>, vector<25x6xf32>, vector<196x6xf32> -> vector<196x6xf32>
    %8 = arith.maximumf %4, %7 : vector<196x6xf32>
    %c2 = arith.constant 2 : index
    %c0_11 = arith.constant 0 : index
    %c0_12 = arith.constant 0 : index
    %c0_13 = arith.constant 0 : index
    %9 = vector.load %arg1[%c2, %c0_11, %c0_12, %c0_13] : memref<4x2x196x25xf32, #tpu.memory_space<vmem>>, vector<1x1x196x25xf32>
    %10 = vector.shape_cast %9 : vector<1x1x196x25xf32> to vector<196x25xf32>
    %cst_14 = arith.constant dense<0.000000e+00> : vector<196x6xf32>
    %11 = tpu.matmul %10, %0, %cst_14 {dimension_numbers = #tpu.dot_dimension_numbers<[1], [0], [0], [1], [0, 0, 1, 1], [], []>} : vector<196x25xf32>, vector<25x6xf32>, vector<196x6xf32> -> vector<196x6xf32>
    %12 = arith.maximumf %8, %11 : vector<196x6xf32>
    %c3 = arith.constant 3 : index
    %c0_15 = arith.constant 0 : index
    %c0_16 = arith.constant 0 : index
    %c0_17 = arith.constant 0 : index
    %13 = vector.load %arg1[%c3, %c0_15, %c0_16, %c0_17] : memref<4x2x196x25xf32, #tpu.memory_space<vmem>>, vector<1x1x196x25xf32>
    %14 = vector.shape_cast %13 : vector<1x1x196x25xf32> to vector<196x25xf32>
    %cst_18 = arith.constant dense<0.000000e+00> : vector<196x6xf32>
    %15 = tpu.matmul %14, %0, %cst_18 {dimension_numbers = #tpu.dot_dimension_numbers<[1], [0], [0], [1], [0, 0, 1, 1], [], []>} : vector<196x25xf32>, vector<25x6xf32>, vector<196x6xf32> -> vector<196x6xf32>
    %16 = arith.maximumf %12, %15 : vector<196x6xf32>
    %17 = vector.broadcast %1 : vector<1x6xf32> to vector<196x6xf32>
    %18 = arith.addf %16, %17 : vector<196x6xf32>
    %cst_19 = arith.constant 0.000000e+00 : f32
    %19 = vector.broadcast %cst_19 : f32 to vector<196x6xf32>
    %20 = arith.maximumf %18, %19 : vector<196x6xf32>
    %c0_20 = arith.constant 0 : index
    %c0_21 = arith.constant 0 : index
    %c0_22 = arith.constant 0 : index
    %21 = vector.load %arg4[%c0_20, %c0_21, %c0_22] : memref<2x196x6xf32, #tpu.memory_space<vmem>>, vector<1x196x6xf32>
    %22 = vector.shape_cast %21 : vector<1x196x6xf32> to vector<196x6xf32>
    %23 = vector.shape_cast %20 : vector<196x6xf32> to vector<1x196x6xf32>
    tpu.vector_store %arg4[%c0_20, %c0_21, %c0_22], %23 {strides = array<i32>} : memref<2x196x6xf32, #tpu.memory_space<vmem>>, vector<1x196x6xf32>,
    %c0_23 = arith.constant 0 : index
    %c1_24 = arith.constant 1 : index
    %c0_25 = arith.constant 0 : index
    %c0_26 = arith.constant 0 : index
    %24 = vector.load %arg1[%c0_23, %c1_24, %c0_25, %c0_26] : memref<4x2x196x25xf32, #tpu.memory_space<vmem>>, vector<1x1x196x25xf32>
    %25 = vector.shape_cast %24 : vector<1x1x196x25xf32> to vector<196x25xf32>
    %cst_27 = arith.constant dense<0.000000e+00> : vector<196x6xf32>
    %26 = tpu.matmul %25, %0, %cst_27 {dimension_numbers = #tpu.dot_dimension_numbers<[1], [0], [0], [1], [0, 0, 1, 1], [], []>} : vector<196x25xf32>, vector<25x6xf32>, vector<196x6xf32> -> vector<196x6xf32>
    %c1_28 = arith.constant 1 : index
    %c1_29 = arith.constant 1 : index
    %c0_30 = arith.constant 0 : index
    %c0_31 = arith.constant 0 : index
    %27 = vector.load %arg1[%c1_28, %c1_29, %c0_30, %c0_31] : memref<4x2x196x25xf32, #tpu.memory_space<vmem>>, vector<1x1x196x25xf32>
    %28 = vector.shape_cast %27 : vector<1x1x196x25xf32> to vector<196x25xf32>
    %cst_32 = arith.constant dense<0.000000e+00> : vector<196x6xf32>
    %29 = tpu.matmul %28, %0, %cst_32 {dimension_numbers = #tpu.dot_dimension_numbers<[1], [0], [0], [1], [0, 0, 1, 1], [], []>} : vector<196x25xf32>, vector<25x6xf32>, vector<196x6xf32> -> vector<196x6xf32>
    %30 = arith.maximumf %26, %29 : vector<196x6xf32>
    %c2_33 = arith.constant 2 : index
    %c1_34 = arith.constant 1 : index
    %c0_35 = arith.constant 0 : index
    %c0_36 = arith.constant 0 : index
    %31 = vector.load %arg1[%c2_33, %c1_34, %c0_35, %c0_36] : memref<4x2x196x25xf32, #tpu.memory_space<vmem>>, vector<1x1x196x25xf32>
    %32 = vector.shape_cast %31 : vector<1x1x196x25xf32> to vector<196x25xf32>
    %cst_37 = arith.constant dense<0.000000e+00> : vector<196x6xf32>
    %33 = tpu.matmul %32, %0, %cst_37 {dimension_numbers = #tpu.dot_dimension_numbers<[1], [0], [0], [1], [0, 0, 1, 1], [], []>} : vector<196x25xf32>, vector<25x6xf32>, vector<196x6xf32> -> vector<196x6xf32>
    %34 = arith.maximumf %30, %33 : vector<196x6xf32>
    %c3_38 = arith.constant 3 : index
    %c1_39 = arith.constant 1 : index
    %c0_40 = arith.constant 0 : index
    %c0_41 = arith.constant 0 : index
    %35 = vector.load %arg1[%c3_38, %c1_39, %c0_40, %c0_41] : memref<4x2x196x25xf32, #tpu.memory_space<vmem>>, vector<1x1x196x25xf32>
    %36 = vector.shape_cast %35 : vector<1x1x196x25xf32> to vector<196x25xf32>
    %cst_42 = arith.constant dense<0.000000e+00> : vector<196x6xf32>
    %37 = tpu.matmul %36, %0, %cst_42 {dimension_numbers = #tpu.dot_dimension_numbers<[1], [0], [0], [1], [0, 0, 1, 1], [], []>} : vector<196x25xf32>, vector<25x6xf32>, vector<196x6xf32> -> vector<196x6xf32>
    %38 = arith.maximumf %34, %37 : vector<196x6xf32>
    %39 = vector.broadcast %1 : vector<1x6xf32> to vector<196x6xf32>
    %40 = arith.addf %38, %39 : vector<196x6xf32>
    %cst_43 = arith.constant 0.000000e+00 : f32
    %41 = vector.broadcast %cst_43 : f32 to vector<196x6xf32>
    %42 = arith.maximumf %40, %41 : vector<196x6xf32>
    %c1_44 = arith.constant 1 : index
    %c0_45 = arith.constant 0 : index
    %c0_46 = arith.constant 0 : index
    %43 = vector.load %arg4[%c1_44, %c0_45, %c0_46] : memref<2x196x6xf32, #tpu.memory_space<vmem>>, vector<1x196x6xf32>
    %44 = vector.shape_cast %43 : vector<1x196x6xf32> to vector<196x6xf32>
    %45 = vector.shape_cast %42 : vector<196x6xf32> to vector<1x196x6xf32>
    tpu.vector_store %arg4[%c1_44, %c0_45, %c0_46], %45 {strides = array<i32>} : memref<2x196x6xf32, #tpu.memory_space<vmem>>, vector<1x196x6xf32>,
    return
  }
  func.func @transform_0(%arg0: i32) -> (i32, i32, i32, i32) {
    %c0_i32 = arith.constant 0 : i32
    %c0_i32_0 = arith.constant 0 : i32
    %c0_i32_1 = arith.constant 0 : i32
    %c0_i32_2 = arith.constant 0 : i32
    return %c0_i32, %arg0, %c0_i32_0, %c0_i32_1 : i32, i32, i32, i32
  }
  func.func @transform_1(%arg0: i32) -> (i32, i32) {
    %c0_i32 = arith.constant 0 : i32
    %c0_i32_0 = arith.constant 0 : i32
    %c0_i32_1 = arith.constant 0 : i32
    return %c0_i32, %c0_i32_0 : i32, i32
  }
  func.func @transform_2(%arg0: i32) -> (i32, i32) {
    %c0_i32 = arith.constant 0 : i32
    %c0_i32_0 = arith.constant 0 : i32
    %c0_i32_1 = arith.constant 0 : i32
    return %c0_i32, %c0_i32_0 : i32, i32
  }
  func.func @transform_3(%arg0: i32) -> (i32, i32, i32) {
    %c0_i32 = arith.constant 0 : i32
    %c0_i32_0 = arith.constant 0 : i32
    %c0_i32_1 = arith.constant 0 : i32
    return %arg0, %c0_i32, %c0_i32_0 : i32, i32, i32
  }
}

module attributes {stable_mosaic.version = 11 : i64} {
  func.func @_conv_pool_kernel(%arg0: i32, %arg1: memref<4x2x25x150xf32, #tpu.memory_space<vmem>>, %arg2: memref<150x16xf32, #tpu.memory_space<vmem>>, %arg3: memref<1x16xf32, #tpu.memory_space<vmem>>, %arg4: memref<2x25x16xf32, #tpu.memory_space<vmem>>) attributes {dimension_semantics = [#tpu.dimension_semantics<parallel>], iteration_bounds = array<i64: 1>, scalar_prefetch = 0 : i64, scratch_operands = 0 : i64, tpu.core_type = #tpu.core_type<tc>, window_params = [{transform_indices = @transform_0, window_bounds = array<i64: 4, 2, 25, 150>}, {pipeline_mode = #tpu.pipeline_mode<synchronous>, transform_indices = @transform_1, window_bounds = array<i64: 150, 16>}, {pipeline_mode = #tpu.pipeline_mode<synchronous>, transform_indices = @transform_2, window_bounds = array<i64: 1, 16>}, {transform_indices = @transform_3, window_bounds = array<i64: 2, 25, 16>}]} {
    %c0 = arith.constant 0 : index
    %c0_0 = arith.constant 0 : index
    %0 = vector.load %arg2[%c0, %c0_0] : memref<150x16xf32, #tpu.memory_space<vmem>>, vector<150x16xf32>
    %c0_1 = arith.constant 0 : index
    %c0_2 = arith.constant 0 : index
    %1 = vector.load %arg3[%c0_1, %c0_2] : memref<1x16xf32, #tpu.memory_space<vmem>>, vector<1x16xf32>
    %c0_3 = arith.constant 0 : index
    %c0_4 = arith.constant 0 : index
    %c0_5 = arith.constant 0 : index
    %c0_6 = arith.constant 0 : index
    %2 = vector.load %arg1[%c0_3, %c0_4, %c0_5, %c0_6] : memref<4x2x25x150xf32, #tpu.memory_space<vmem>>, vector<1x1x25x150xf32>
    %3 = vector.shape_cast %2 : vector<1x1x25x150xf32> to vector<25x150xf32>
    %cst = arith.constant dense<0.000000e+00> : vector<25x16xf32>
    %4 = tpu.matmul %3, %0, %cst {dimension_numbers = #tpu.dot_dimension_numbers<[1], [0], [0], [1], [0, 0, 1, 1], [], []>} : vector<25x150xf32>, vector<150x16xf32>, vector<25x16xf32> -> vector<25x16xf32>
    %c1 = arith.constant 1 : index
    %c0_7 = arith.constant 0 : index
    %c0_8 = arith.constant 0 : index
    %c0_9 = arith.constant 0 : index
    %5 = vector.load %arg1[%c1, %c0_7, %c0_8, %c0_9] : memref<4x2x25x150xf32, #tpu.memory_space<vmem>>, vector<1x1x25x150xf32>
    %6 = vector.shape_cast %5 : vector<1x1x25x150xf32> to vector<25x150xf32>
    %cst_10 = arith.constant dense<0.000000e+00> : vector<25x16xf32>
    %7 = tpu.matmul %6, %0, %cst_10 {dimension_numbers = #tpu.dot_dimension_numbers<[1], [0], [0], [1], [0, 0, 1, 1], [], []>} : vector<25x150xf32>, vector<150x16xf32>, vector<25x16xf32> -> vector<25x16xf32>
    %8 = arith.maximumf %4, %7 : vector<25x16xf32>
    %c2 = arith.constant 2 : index
    %c0_11 = arith.constant 0 : index
    %c0_12 = arith.constant 0 : index
    %c0_13 = arith.constant 0 : index
    %9 = vector.load %arg1[%c2, %c0_11, %c0_12, %c0_13] : memref<4x2x25x150xf32, #tpu.memory_space<vmem>>, vector<1x1x25x150xf32>
    %10 = vector.shape_cast %9 : vector<1x1x25x150xf32> to vector<25x150xf32>
    %cst_14 = arith.constant dense<0.000000e+00> : vector<25x16xf32>
    %11 = tpu.matmul %10, %0, %cst_14 {dimension_numbers = #tpu.dot_dimension_numbers<[1], [0], [0], [1], [0, 0, 1, 1], [], []>} : vector<25x150xf32>, vector<150x16xf32>, vector<25x16xf32> -> vector<25x16xf32>
    %12 = arith.maximumf %8, %11 : vector<25x16xf32>
    %c3 = arith.constant 3 : index
    %c0_15 = arith.constant 0 : index
    %c0_16 = arith.constant 0 : index
    %c0_17 = arith.constant 0 : index
    %13 = vector.load %arg1[%c3, %c0_15, %c0_16, %c0_17] : memref<4x2x25x150xf32, #tpu.memory_space<vmem>>, vector<1x1x25x150xf32>
    %14 = vector.shape_cast %13 : vector<1x1x25x150xf32> to vector<25x150xf32>
    %cst_18 = arith.constant dense<0.000000e+00> : vector<25x16xf32>
    %15 = tpu.matmul %14, %0, %cst_18 {dimension_numbers = #tpu.dot_dimension_numbers<[1], [0], [0], [1], [0, 0, 1, 1], [], []>} : vector<25x150xf32>, vector<150x16xf32>, vector<25x16xf32> -> vector<25x16xf32>
    %16 = arith.maximumf %12, %15 : vector<25x16xf32>
    %17 = vector.broadcast %1 : vector<1x16xf32> to vector<25x16xf32>
    %18 = arith.addf %16, %17 : vector<25x16xf32>
    %cst_19 = arith.constant 0.000000e+00 : f32
    %19 = vector.broadcast %cst_19 : f32 to vector<25x16xf32>
    %20 = arith.maximumf %18, %19 : vector<25x16xf32>
    %c0_20 = arith.constant 0 : index
    %c0_21 = arith.constant 0 : index
    %c0_22 = arith.constant 0 : index
    %21 = vector.load %arg4[%c0_20, %c0_21, %c0_22] : memref<2x25x16xf32, #tpu.memory_space<vmem>>, vector<1x25x16xf32>
    %22 = vector.shape_cast %21 : vector<1x25x16xf32> to vector<25x16xf32>
    %23 = vector.shape_cast %20 : vector<25x16xf32> to vector<1x25x16xf32>
    tpu.vector_store %arg4[%c0_20, %c0_21, %c0_22], %23 {strides = array<i32>} : memref<2x25x16xf32, #tpu.memory_space<vmem>>, vector<1x25x16xf32>,
    %c0_23 = arith.constant 0 : index
    %c1_24 = arith.constant 1 : index
    %c0_25 = arith.constant 0 : index
    %c0_26 = arith.constant 0 : index
    %24 = vector.load %arg1[%c0_23, %c1_24, %c0_25, %c0_26] : memref<4x2x25x150xf32, #tpu.memory_space<vmem>>, vector<1x1x25x150xf32>
    %25 = vector.shape_cast %24 : vector<1x1x25x150xf32> to vector<25x150xf32>
    %cst_27 = arith.constant dense<0.000000e+00> : vector<25x16xf32>
    %26 = tpu.matmul %25, %0, %cst_27 {dimension_numbers = #tpu.dot_dimension_numbers<[1], [0], [0], [1], [0, 0, 1, 1], [], []>} : vector<25x150xf32>, vector<150x16xf32>, vector<25x16xf32> -> vector<25x16xf32>
    %c1_28 = arith.constant 1 : index
    %c1_29 = arith.constant 1 : index
    %c0_30 = arith.constant 0 : index
    %c0_31 = arith.constant 0 : index
    %27 = vector.load %arg1[%c1_28, %c1_29, %c0_30, %c0_31] : memref<4x2x25x150xf32, #tpu.memory_space<vmem>>, vector<1x1x25x150xf32>
    %28 = vector.shape_cast %27 : vector<1x1x25x150xf32> to vector<25x150xf32>
    %cst_32 = arith.constant dense<0.000000e+00> : vector<25x16xf32>
    %29 = tpu.matmul %28, %0, %cst_32 {dimension_numbers = #tpu.dot_dimension_numbers<[1], [0], [0], [1], [0, 0, 1, 1], [], []>} : vector<25x150xf32>, vector<150x16xf32>, vector<25x16xf32> -> vector<25x16xf32>
    %30 = arith.maximumf %26, %29 : vector<25x16xf32>
    %c2_33 = arith.constant 2 : index
    %c1_34 = arith.constant 1 : index
    %c0_35 = arith.constant 0 : index
    %c0_36 = arith.constant 0 : index
    %31 = vector.load %arg1[%c2_33, %c1_34, %c0_35, %c0_36] : memref<4x2x25x150xf32, #tpu.memory_space<vmem>>, vector<1x1x25x150xf32>
    %32 = vector.shape_cast %31 : vector<1x1x25x150xf32> to vector<25x150xf32>
    %cst_37 = arith.constant dense<0.000000e+00> : vector<25x16xf32>
    %33 = tpu.matmul %32, %0, %cst_37 {dimension_numbers = #tpu.dot_dimension_numbers<[1], [0], [0], [1], [0, 0, 1, 1], [], []>} : vector<25x150xf32>, vector<150x16xf32>, vector<25x16xf32> -> vector<25x16xf32>
    %34 = arith.maximumf %30, %33 : vector<25x16xf32>
    %c3_38 = arith.constant 3 : index
    %c1_39 = arith.constant 1 : index
    %c0_40 = arith.constant 0 : index
    %c0_41 = arith.constant 0 : index
    %35 = vector.load %arg1[%c3_38, %c1_39, %c0_40, %c0_41] : memref<4x2x25x150xf32, #tpu.memory_space<vmem>>, vector<1x1x25x150xf32>
    %36 = vector.shape_cast %35 : vector<1x1x25x150xf32> to vector<25x150xf32>
    %cst_42 = arith.constant dense<0.000000e+00> : vector<25x16xf32>
    %37 = tpu.matmul %36, %0, %cst_42 {dimension_numbers = #tpu.dot_dimension_numbers<[1], [0], [0], [1], [0, 0, 1, 1], [], []>} : vector<25x150xf32>, vector<150x16xf32>, vector<25x16xf32> -> vector<25x16xf32>
    %38 = arith.maximumf %34, %37 : vector<25x16xf32>
    %39 = vector.broadcast %1 : vector<1x16xf32> to vector<25x16xf32>
    %40 = arith.addf %38, %39 : vector<25x16xf32>
    %cst_43 = arith.constant 0.000000e+00 : f32
    %41 = vector.broadcast %cst_43 : f32 to vector<25x16xf32>
    %42 = arith.maximumf %40, %41 : vector<25x16xf32>
    %c1_44 = arith.constant 1 : index
    %c0_45 = arith.constant 0 : index
    %c0_46 = arith.constant 0 : index
    %43 = vector.load %arg4[%c1_44, %c0_45, %c0_46] : memref<2x25x16xf32, #tpu.memory_space<vmem>>, vector<1x25x16xf32>
    %44 = vector.shape_cast %43 : vector<1x25x16xf32> to vector<25x16xf32>
    %45 = vector.shape_cast %42 : vector<25x16xf32> to vector<1x25x16xf32>
    tpu.vector_store %arg4[%c1_44, %c0_45, %c0_46], %45 {strides = array<i32>} : memref<2x25x16xf32, #tpu.memory_space<vmem>>, vector<1x25x16xf32>,
    return
  }
  func.func @transform_0(%arg0: i32) -> (i32, i32, i32, i32) {
    %c0_i32 = arith.constant 0 : i32
    %c0_i32_0 = arith.constant 0 : i32
    %c0_i32_1 = arith.constant 0 : i32
    %c0_i32_2 = arith.constant 0 : i32
    return %c0_i32, %arg0, %c0_i32_0, %c0_i32_1 : i32, i32, i32, i32
  }
  func.func @transform_1(%arg0: i32) -> (i32, i32) {
    %c0_i32 = arith.constant 0 : i32
    %c0_i32_0 = arith.constant 0 : i32
    %c0_i32_1 = arith.constant 0 : i32
    return %c0_i32, %c0_i32_0 : i32, i32
  }
  func.func @transform_2(%arg0: i32) -> (i32, i32) {
    %c0_i32 = arith.constant 0 : i32
    %c0_i32_0 = arith.constant 0 : i32
    %c0_i32_1 = arith.constant 0 : i32
    return %c0_i32, %c0_i32_0 : i32, i32
  }
  func.func @transform_3(%arg0: i32) -> (i32, i32, i32) {
    %c0_i32 = arith.constant 0 : i32
    %c0_i32_0 = arith.constant 0 : i32
    %c0_i32_1 = arith.constant 0 : i32
    return %arg0, %c0_i32, %c0_i32_0 : i32, i32, i32
  }
}

module attributes {stable_mosaic.version = 11 : i64} {
  func.func @_fc_chain_kernel(%arg0: i32, %arg1: memref<2x400xf32, #tpu.memory_space<vmem>>, %arg2: memref<400x120xf32, #tpu.memory_space<vmem>>, %arg3: memref<1x120xf32, #tpu.memory_space<vmem>>, %arg4: memref<120x84xf32, #tpu.memory_space<vmem>>, %arg5: memref<1x84xf32, #tpu.memory_space<vmem>>, %arg6: memref<84x10xf32, #tpu.memory_space<vmem>>, %arg7: memref<1x10xf32, #tpu.memory_space<vmem>>, %arg8: memref<2x10xf32, #tpu.memory_space<vmem>>) attributes {dimension_semantics = [#tpu.dimension_semantics<parallel>], iteration_bounds = array<i64: 1>, scalar_prefetch = 0 : i64, scratch_operands = 0 : i64, tpu.core_type = #tpu.core_type<tc>, window_params = [{transform_indices = @transform_0, window_bounds = array<i64: 2, 400>}, {pipeline_mode = #tpu.pipeline_mode<synchronous>, transform_indices = @transform_1, window_bounds = array<i64: 400, 120>}, {pipeline_mode = #tpu.pipeline_mode<synchronous>, transform_indices = @transform_2, window_bounds = array<i64: 1, 120>}, {pipeline_mode = #tpu.pipeline_mode<synchronous>, transform_indices = @transform_3, window_bounds = array<i64: 120, 84>}, {pipeline_mode = #tpu.pipeline_mode<synchronous>, transform_indices = @transform_4, window_bounds = array<i64: 1, 84>}, {pipeline_mode = #tpu.pipeline_mode<synchronous>, transform_indices = @transform_5, window_bounds = array<i64: 84, 10>}, {pipeline_mode = #tpu.pipeline_mode<synchronous>, transform_indices = @transform_6, window_bounds = array<i64: 1, 10>}, {transform_indices = @transform_7, window_bounds = array<i64: 2, 10>}]} {
    %c0 = arith.constant 0 : index
    %c0_0 = arith.constant 0 : index
    %0 = vector.load %arg1[%c0, %c0_0] : memref<2x400xf32, #tpu.memory_space<vmem>>, vector<2x400xf32>
    %c0_1 = arith.constant 0 : index
    %c0_2 = arith.constant 0 : index
    %1 = vector.load %arg2[%c0_1, %c0_2] : memref<400x120xf32, #tpu.memory_space<vmem>>, vector<400x120xf32>
    %cst = arith.constant dense<0.000000e+00> : vector<2x120xf32>
    %2 = tpu.matmul %0, %1, %cst {dimension_numbers = #tpu.dot_dimension_numbers<[1], [0], [0], [1], [0, 0, 1, 1], [], []>} : vector<2x400xf32>, vector<400x120xf32>, vector<2x120xf32> -> vector<2x120xf32>
    %c0_3 = arith.constant 0 : index
    %c0_4 = arith.constant 0 : index
    %3 = vector.load %arg3[%c0_3, %c0_4] : memref<1x120xf32, #tpu.memory_space<vmem>>, vector<1x120xf32>
    %4 = vector.broadcast %3 : vector<1x120xf32> to vector<2x120xf32>
    %5 = arith.addf %2, %4 : vector<2x120xf32>
    %cst_5 = arith.constant 0.000000e+00 : f32
    %6 = vector.broadcast %cst_5 : f32 to vector<2x120xf32>
    %7 = arith.maximumf %5, %6 : vector<2x120xf32>
    %c0_6 = arith.constant 0 : index
    %c0_7 = arith.constant 0 : index
    %8 = vector.load %arg4[%c0_6, %c0_7] : memref<120x84xf32, #tpu.memory_space<vmem>>, vector<120x84xf32>
    %cst_8 = arith.constant dense<0.000000e+00> : vector<2x84xf32>
    %9 = tpu.matmul %7, %8, %cst_8 {dimension_numbers = #tpu.dot_dimension_numbers<[1], [0], [0], [1], [0, 0, 1, 1], [], []>} : vector<2x120xf32>, vector<120x84xf32>, vector<2x84xf32> -> vector<2x84xf32>
    %c0_9 = arith.constant 0 : index
    %c0_10 = arith.constant 0 : index
    %10 = vector.load %arg5[%c0_9, %c0_10] : memref<1x84xf32, #tpu.memory_space<vmem>>, vector<1x84xf32>
    %11 = vector.broadcast %10 : vector<1x84xf32> to vector<2x84xf32>
    %12 = arith.addf %9, %11 : vector<2x84xf32>
    %cst_11 = arith.constant 0.000000e+00 : f32
    %13 = vector.broadcast %cst_11 : f32 to vector<2x84xf32>
    %14 = arith.maximumf %12, %13 : vector<2x84xf32>
    %c0_12 = arith.constant 0 : index
    %c0_13 = arith.constant 0 : index
    %15 = vector.load %arg6[%c0_12, %c0_13] : memref<84x10xf32, #tpu.memory_space<vmem>>, vector<84x10xf32>
    %cst_14 = arith.constant dense<0.000000e+00> : vector<2x10xf32>
    %16 = tpu.matmul %14, %15, %cst_14 {dimension_numbers = #tpu.dot_dimension_numbers<[1], [0], [0], [1], [0, 0, 1, 1], [], []>} : vector<2x84xf32>, vector<84x10xf32>, vector<2x10xf32> -> vector<2x10xf32>
    %c0_15 = arith.constant 0 : index
    %c0_16 = arith.constant 0 : index
    %17 = vector.load %arg7[%c0_15, %c0_16] : memref<1x10xf32, #tpu.memory_space<vmem>>, vector<1x10xf32>
    %18 = vector.broadcast %17 : vector<1x10xf32> to vector<2x10xf32>
    %19 = arith.addf %16, %18 : vector<2x10xf32>
    %c0_17 = arith.constant 0 : index
    %c0_18 = arith.constant 0 : index
    %20 = vector.load %arg8[%c0_17, %c0_18] : memref<2x10xf32, #tpu.memory_space<vmem>>, vector<2x10xf32>
    tpu.vector_store %arg8[%c0_17, %c0_18], %19 {strides = array<i32>} : memref<2x10xf32, #tpu.memory_space<vmem>>, vector<2x10xf32>,
    return
  }
  func.func @transform_0(%arg0: i32) -> (i32, i32) {
    %c0_i32 = arith.constant 0 : i32
    %c0_i32_0 = arith.constant 0 : i32
    return %arg0, %c0_i32 : i32, i32
  }
  func.func @transform_1(%arg0: i32) -> (i32, i32) {
    %c0_i32 = arith.constant 0 : i32
    %c0_i32_0 = arith.constant 0 : i32
    %c0_i32_1 = arith.constant 0 : i32
    return %c0_i32, %c0_i32_0 : i32, i32
  }
  func.func @transform_2(%arg0: i32) -> (i32, i32) {
    %c0_i32 = arith.constant 0 : i32
    %c0_i32_0 = arith.constant 0 : i32
    %c0_i32_1 = arith.constant 0 : i32
    return %c0_i32, %c0_i32_0 : i32, i32
  }
  func.func @transform_3(%arg0: i32) -> (i32, i32) {
    %c0_i32 = arith.constant 0 : i32
    %c0_i32_0 = arith.constant 0 : i32
    %c0_i32_1 = arith.constant 0 : i32
    return %c0_i32, %c0_i32_0 : i32, i32
  }
  func.func @transform_4(%arg0: i32) -> (i32, i32) {
    %c0_i32 = arith.constant 0 : i32
    %c0_i32_0 = arith.constant 0 : i32
    %c0_i32_1 = arith.constant 0 : i32
    return %c0_i32, %c0_i32_0 : i32, i32
  }
  func.func @transform_5(%arg0: i32) -> (i32, i32) {
    %c0_i32 = arith.constant 0 : i32
    %c0_i32_0 = arith.constant 0 : i32
    %c0_i32_1 = arith.constant 0 : i32
    return %c0_i32, %c0_i32_0 : i32, i32
  }
  func.func @transform_6(%arg0: i32) -> (i32, i32) {
    %c0_i32 = arith.constant 0 : i32
    %c0_i32_0 = arith.constant 0 : i32
    %c0_i32_1 = arith.constant 0 : i32
    return %c0_i32, %c0_i32_0 : i32, i32
  }
  func.func @transform_7(%arg0: i32) -> (i32, i32) {
    %c0_i32 = arith.constant 0 : i32
    %c0_i32_0 = arith.constant 0 : i32
    return %arg0, %c0_i32 : i32, i32
  }
}

</mosaic_0001>

<llo_original>
// kernel: net_forward.3
$region0: #{net_forward.3}
  #allocation0 [shape = 'u32[]', space=smem, size = 0x4, offset = 0x4, fixed_abs, tag = 'smem constant byte address 0x4 - core index']
  #allocation1 [shape = 'u32[144,128]{1,0:T(1,128)}', space=vmem, size = 0x12000, scoped, tag = 'internal scratch']
  %s0 = inlined_call_operand.vmem [shape: f32[4,2,196,25], index: 0, kind: input, shape index: {}]
  %s1 = inlined_call_operand.vmem [shape: f32[25,6], index: 1, kind: input, shape index: {}]
  %s2 = inlined_call_operand.vmem [shape: f32[1,6], index: 2, kind: input, shape index: {}]
  %s3 = inlined_call_operand.vmem [shape: f32[2,196,6], index: 3, kind: output, shape index: {}]
  %s4 = sld [smem:[#allocation0]]
  $region22: #{net_forward.3} parent=0
    _
  %s6 = ssub.s32 1, %s4
  %s7 = scalar_select 0, %s6, %s4
  // Predicated region
  $region2: #{net_forward.3} parent=0 // pred_check
    _
  $region3: #{net_forward.3} parent=0 // pred_check_branch
    %9 = sbr.rel (0) target = $region5
  $region4: #{net_forward.3} parent=0 // pred_region
    _
  $region5: #{net_forward.3} parent=0 // pred_fallthru
    _
  // Predicated region
  $region6: #{net_forward.3} parent=0 // pred_check
    _
  $region7: #{net_forward.3} parent=0 // pred_check_branch
    %11 = sbr.rel (0) target = $region9
  $region8: #{net_forward.3} parent=0 // pred_region
    _
  $region9: #{net_forward.3} parent=0 // pred_fallthru
    _
  // Predicated region
  $region10: #{net_forward.3} parent=0 // pred_check
    _
  $region11: #{net_forward.3} parent=0 // pred_check_branch
    %13 = sbr.rel (0) target = $region13
  $region12: #{net_forward.3} parent=0 // pred_region
    _
  $region13: #{net_forward.3} parent=0 // pred_fallthru
    _
  %v14 = vld [vmem:[%s1] sm:$0xff]
  %v15 = vld [vmem:[%s1 + $0x8] sm:$0xff]
  %v16 = vld [vmem:[%s1 + $0x10] sm:$0xff]
  %v17 = vld [vmem:[%s1 + $0x18] sm:$0x1]
  %v18 = vld [vmem:[%s2] sm:$0x1]
  %v19 = vld [vmem:[%s0] sm:$0xff]
  %v20 = vld [vmem:[%s0 + $0x8] sm:$0xff]
  %v21 = vld [vmem:[%s0 + $0x10] sm:$0xff]
  %v22 = vld [vmem:[%s0 + $0x18] sm:$0xff]
  %v23 = vld [vmem:[%s0 + $0x20] sm:$0xff]
  %v24 = vld [vmem:[%s0 + $0x28] sm:$0xff]
  %v25 = vld [vmem:[%s0 + $0x30] sm:$0xff]
  %v26 = vld [vmem:[%s0 + $0x38] sm:$0xff]
  %v27 = vld [vmem:[%s0 + $0x40] sm:$0xff]
  %v28 = vld [vmem:[%s0 + $0x48] sm:$0xff]
  %v29 = vld [vmem:[%s0 + $0x50] sm:$0xff]
  %v30 = vld [vmem:[%s0 + $0x58] sm:$0xff]
  %v31 = vld [vmem:[%s0 + $0x60] sm:$0xff]
  %v32 = vld [vmem:[%s0 + $0x68] sm:$0xff]
  %v33 = vld [vmem:[%s0 + $0x70] sm:$0xff]
  %v34 = vld [vmem:[%s0 + $0x78] sm:$0xff]
  %v35 = vld [vmem:[%s0 + $0x80] sm:$0xff]
  %v36 = vld [vmem:[%s0 + $0x88] sm:$0xff]
  %v37 = vld [vmem:[%s0 + $0x90] sm:$0xff]
  %v38 = vld [vmem:[%s0 + $0x98] sm:$0xff]
  %v39 = vld [vmem:[%s0 + $0xa0] sm:$0xff]
  %v40 = vld [vmem:[%s0 + $0xa8] sm:$0xff]
  %v41 = vld [vmem:[%s0 + $0xb0] sm:$0xff]
  %v42 = vld [vmem:[%s0 + $0xb8] sm:$0xff]
  %v43 = vld [vmem:[%s0 + $0xc0] sm:$0xf]
  %vm44 = vcmask 203776
  %v46 = vsel %vm44, %v19, 0
  %v49 = vsel %vm44, %v20, 0
  %v52 = vsel %vm44, %v21, 0
  %v55 = vsel %vm44, %v22, 0
  %v58 = vsel %vm44, %v23, 0
  %v61 = vsel %vm44, %v24, 0
  %v64 = vsel %vm44, %v25, 0
  %v67 = vsel %vm44, %v26, 0
  %v70 = vsel %vm44, %v27, 0
  %v73 = vsel %vm44, %v28, 0
  %v76 = vsel %vm44, %v29, 0
  %v79 = vsel %vm44, %v30, 0
  %v82 = vsel %vm44, %v31, 0
  %v85 = vsel %vm44, %v32, 0
  %v88 = vsel %vm44, %v33, 0
  %v91 = vsel %vm44, %v34, 0
  %v94 = vsel %vm44, %v35, 0
  %v97 = vsel %vm44, %v36, 0
  %v100 = vsel %vm44, %v37, 0
  %v103 = vsel %vm44, %v38, 0
  %v106 = vsel %vm44, %v39, 0
  %v109 = vsel %vm44, %v40, 0
  %v112 = vsel %vm44, %v41, 0
  %v115 = vsel %vm44, %v42, 0
  %v118 = vsel %vm44, %v43, 0
  %vm120 = vcmask 1040384
  %v122 = vsel %vm120, %v17, 0
  %124 = vmatprep.subr.mxu0 0.0
  %125 = vmatpush1.msra.mxu0 %v14
  %126 = vmatprep.subr.mxu0 0.0
  %127 = vmatpush1.msra.mxu0 %v15
  %128 = vmatprep.subr.mxu0 0.0
  %129 = vmatpush1.msra.mxu0 %v16
  %130 = vmatprep.subr.mxu0 0.0
  %131 = vmatpush1.msra.mxu0 %v122
  %132 = vmatprep.subr.mxu0 0.0
  %133 = vmatpush1.msra.mxu0 0.0
  %134 = vmatprep.subr.mxu0 0.0
  %135 = vmatpush1.msra.mxu0 0.0
  %136 = vmatprep.subr.mxu0 0.0
  %137 = vmatpush1.msra.mxu0 0.0
  %138 = vmatprep.subr.mxu0 0.0
  %139 = vmatpush1.msra.mxu0 0.0
  %140 = vmatprep.subr.mxu0 0.0
  %141 = vmatpush1.msra.mxu0 0.0
  %142 = vmatprep.subr.mxu0 0.0
  %143 = vmatpush1.msra.mxu0 0.0
  %144 = vmatprep.subr.mxu0 0.0
  %145 = vmatpush1.msra.mxu0 0.0
  %146 = vmatprep.subr.mxu0 0.0
  %147 = vmatpush1.msra.mxu0 0.0
  %148 = vmatprep.subr.mxu0 0.0
  %149 = vmatpush1.msra.mxu0 0.0
  %150 = vmatprep.subr.mxu0 0.0
  %151 = vmatpush1.msra.mxu0 0.0
  %152 = vmatprep.subr.mxu0 0.0
  %153 = vmatpush1.msra.mxu0 0.0
  %154 = vmatprep.subr.mxu0 0.0
  %155 = vmatpush1.msra.mxu0 0.0
  %156 = vmatprep.subr.mxu0 0.0
  %157 = vmatpush1.msra.mxu0 0.0
  %158 = vmatprep.subr.mxu0 0.0
  %159 = vmatpush1.msra.mxu0 0.0
  %160 = vmatprep.subr.mxu0 0.0
  %161 = vmatpush1.msra.mxu0 0.0
  %162 = vmatprep.subr.mxu0 0.0
  %163 = vmatpush1.msra.mxu0 0.0
  %164 = vmatprep.subr.mxu0 0.0
  %165 = vmatpush1.msra.mxu0 0.0
  %166 = vmatprep.subr.mxu0 0.0
  %167 = vmatpush1.msra.mxu0 0.0
  %168 = vmatprep.subr.mxu0 0.0
  %169 = vmatpush1.msra.mxu0 0.0
  %170 = vmatprep.subr.mxu0 0.0
  %171 = vmatpush1.msra.mxu0 0.0
  %172 = vmatprep.subr.mxu0 0.0
  %173 = vmatpush1.msra.mxu0 0.0
  %174 = vmatprep.subr.mxu0 0.0
  %175 = vmatpush1.msra.mxu0 0.0
  %176 = vmatprep.subr.mxu0 0.0
  %177 = vmatpush1.msra.mxu0 0.0
  %178 = vmatprep.subr.mxu0 0.0
  %179 = vmatpush1.msra.mxu0 0.0
  %180 = vmatprep.subr.mxu0 0.0
  %181 = vmatpush1.msra.mxu0 0.0
  %182 = vmatprep.subr.mxu0 0.0
  %183 = vmatpush1.msra.mxu0 0.0
  %184 = vmatprep.subr.mxu0 0.0
  %185 = vmatpush1.msra.mxu0 0.0
  %186 = vmatprep.subr.mxu0 0.0
  %187 = vmatpush1.msra.mxu0 0.0
  %188 = vmatprep.mubr.f32.mxu0 0.0
  %189 = vmatmul.mubr.f32.gmra.mrb[0].mxu0 %v46
  %v190 = vpop.f32.mrb[0].mxu0
  %v191 = vadd.f32 0.0, %v190
  %v192 = vpop.f32.mrb[0].mxu0
  %193 = vmatprep.mubr.f32.mxu0 0.0
  %194 = vmatmul.mubr.f32.gmra.mrb[0].mxu0 %v49
  %v195 = vpop.f32.mrb[0].mxu0
  %v196 = vadd.f32 0.0, %v195
  %v197 = vpop.f32.mrb[0].mxu0
  %198 = vmatprep.mubr.f32.mxu0 0.0
  %199 = vmatmul.mubr.f32.gmra.mrb[0].mxu0 %v52
  %v200 = vpop.f32.mrb[0].mxu0
  %v201 = vadd.f32 0.0, %v200
  %v202 = vpop.f32.mrb[0].mxu0
  %203 = vmatprep.mubr.f32.mxu0 0.0
  %204 = vmatmul.mubr.f32.gmra.mrb[0].mxu0 %v55
  %v205 = vpop.f32.mrb[0].mxu0
  %v206 = vadd.f32 0.0, %v205
  %v207 = vpop.f32.mrb[0].mxu0
  %208 = vmatprep.mubr.f32.mxu0 0.0
  %209 = vmatmul.mubr.f32.gmra.mrb[0].mxu0 %v58
  %v210 = vpop.f32.mrb[0].mxu0
  %v211 = vadd.f32 0.0, %v210
  %v212 = vpop.f32.mrb[0].mxu0
  %213 = vmatprep.mubr.f32.mxu0 0.0
  %214 = vmatmul.mubr.f32.gmra.mrb[0].mxu0 %v61
  %v215 = vpop.f32.mrb[0].mxu0
  %v216 = vadd.f32 0.0, %v215
  %v217 = vpop.f32.mrb[0].mxu0
  %218 = vmatprep.mubr.f32.mxu0 0.0
  %219 = vmatmul.mubr.f32.gmra.mrb[0].mxu0 %v64
  %v220 = vpop.f32.mrb[0].mxu0
  %v221 = vadd.f32 0.0, %v220
  %v222 = vpop.f32.mrb[0].mxu0
  %223 = vmatprep.mubr.f32.mxu0 0.0
  %224 = vmatmul.mubr.f32.gmra.mrb[0].mxu0 %v67
  %v225 = vpop.f32.mrb[0].mxu0
  %v226 = vadd.f32 0.0, %v225
  %v227 = vpop.f32.mrb[0].mxu0
  %228 = vmatprep.mubr.f32.mxu0 0.0
  %229 = vmatmul.mubr.f32.gmra.mrb[0].mxu0 %v70
  %v230 = vpop.f32.mrb[0].mxu0
  %v231 = vadd.f32 0.0, %v230
  %v232 = vpop.f32.mrb[0].mxu0
  %233 = vmatprep.mubr.f32.mxu0 0.0
  %234 = vmatmul.mubr.f32.gmra.mrb[0].mxu0 %v73
  %v235 = vpop.f32.mrb[0].mxu0
  %v236 = vadd.f32 0.0, %v235
  %v237 = vpop.f32.mrb[0].mxu0
  %238 = vmatprep.mubr.f32.mxu0 0.0
  %239 = vmatmul.mubr.f32.gmra.mrb[0].mxu0 %v76
  %v240 = vpop.f32.mrb[0].mxu0
  %v241 = vadd.f32 0.0, %v240
  %v242 = vpop.f32.mrb[0].mxu0
  %243 = vmatprep.mubr.f32.mxu0 0.0
  %244 = vmatmul.mubr.f32.gmra.mrb[0].mxu0 %v79
  %v245 = vpop.f32.mrb[0].mxu0
  %v246 = vadd.f32 0.0, %v245
  %v247 = vpop.f32.mrb[0].mxu0
  %248 = vmatprep.mubr.f32.mxu0 0.0
  %249 = vmatmul.mubr.f32.gmra.mrb[0].mxu0 %v82
  %v250 = vpop.f32.mrb[0].mxu0
  %v251 = vadd.f32 0.0, %v250
  %v252 = vpop.f32.mrb[0].mxu0
  %253 = vmatprep.mubr.f32.mxu0 0.0
  %254 = vmatmul.mubr.f32.gmra.mrb[0].mxu0 %v85
  %v255 = vpop.f32.mrb[0].mxu0
  %v256 = vadd.f32 0.0, %v255
  %v257 = vpop.f32.mrb[0].mxu0
  %258 = vmatprep.mubr.f32.mxu0 0.0
  %259 = vmatmul.mubr.f32.gmra.mrb[0].mxu0 %v88
  %v260 = vpop.f32.mrb[0].mxu0
  %v261 = vadd.f32 0.0, %v260
  %v262 = vpop.f32.mrb[0].mxu0
  %263 = vmatprep.mubr.f32.mxu0 0.0
  %264 = vmatmul.mubr.f32.gmra.mrb[0].mxu0 %v91
  %v265 = vpop.f32.mrb[0].mxu0
  %v266 = vadd.f32 0.0, %v265
  %v267 = vpop.f32.mrb[0].mxu0
  %268 = vmatprep.mubr.f32.mxu0 0.0
  %269 = vmatmul.mubr.f32.gmra.mrb[0].mxu0 %v94
  %v270 = vpop.f32.mrb[0].mxu0
  %v271 = vadd.f32 0.0, %v270
  %v272 = vpop.f32.mrb[0].mxu0
  %273 = vmatprep.mubr.f32.mxu0 0.0
  %274 = vmatmul.mubr.f32.gmra.mrb[0].mxu0 %v97
  %v275 = vpop.f32.mrb[0].mxu0
  %v276 = vadd.f32 0.0, %v275
  %v277 = vpop.f32.mrb[0].mxu0
  %278 = vmatprep.mubr.f32.mxu0 0.0
  %279 = vmatmul.mubr.f32.gmra.mrb[0].mxu0 %v100
  %v280 = vpop.f32.mrb[0].mxu0
  %v281 = vadd.f32 0.0, %v280
  %v282 = vpop.f32.mrb[0].mxu0
  %283 = vmatprep.mubr.f32.mxu0 0.0
  %284 = vmatmul.mubr.f32.gmra.mrb[0].mxu0 %v103
  %v285 = vpop.f32.mrb[0].mxu0
  %v286 = vadd.f32 0.0, %v285
  %v287 = vpop.f32.mrb[0].mxu0
  %288 = vmatprep.mubr.f32.mxu0 0.0
  %289 = vmatmul.mubr.f32.gmra.mrb[0].mxu0 %v106
  %v290 = vpop.f32.mrb[0].mxu0
  %v291 = vadd.f32 0.0, %v290
  %v292 = vpop.f32.mrb[0].mxu0
  %293 = vmatprep.mubr.f32.mxu0 0.0
  %294 = vmatmul.mubr.f32.gmra.mrb[0].mxu0 %v109
  %v295 = vpop.f32.mrb[0].mxu0
  %v296 = vadd.f32 0.0, %v295
  %v297 = vpop.f32.mrb[0].mxu0
  %298 = vmatprep.mubr.f32.mxu0 0.0
  %299 = vmatmul.mubr.f32.gmra.mrb[0].mxu0 %v112
  %v300 = vpop.f32.mrb[0].mxu0
  %v301 = vadd.f32 0.0, %v300
  %v302 = vpop.f32.mrb[0].mxu0
  %303 = vmatprep.mubr.f32.mxu0 0.0
  %304 = vmatmul.mubr.f32.gmra.mrb[0].mxu0 %v115
  %v305 = vpop.f32.mrb[0].mxu0
  %v306 = vadd.f32 0.0, %v305
  %v307 = vpop.f32.mrb[0].mxu0
  %308 = vmatprep.mubr.f32.mxu0 0.0
  %309 = vmatmul.mubr.f32.gmra.mrb[0].mxu0 %v118
  %v310 = vpop.f32.mrb[0].mxu0
  %v311 = vadd.f32 0.0, %v310
  %v312 = vpop.f32.mrb[0].mxu0
  %313 = vdwg.mxu0
  %s314 = scalar_lea.vmem %s0, 400
  %v315 = vld [vmem:[%s314] sm:$0xff]
  %v316 = vld [vmem:[%s314 + $0x8] sm:$0xff]
  %v317 = vld [vmem:[%s314 + $0x10] sm:$0xff]
  %v318 = vld [vmem:[%s314 + $0x18] sm:$0xff]
  %v319 = vld [vmem:[%s314 + $0x20] sm:$0xff]
  %v320 = vld [vmem:[%s314 + $0x28] sm:$0xff]
  %v321 = vld [vmem:[%s314 + $0x30] sm:$0xff]
  %v322 = vld [vmem:[%s314 + $0x38] sm:$0xff]
  %v323 = vld [vmem:[%s314 + $0x40] sm:$0xff]
  %v324 = vld [vmem:[%s314 + $0x48] sm:$0xff]
  %v325 = vld [vmem:[%s314 + $0x50] sm:$0xff]
  %v326 = vld [vmem:[%s314 + $0x58] sm:$0xff]
  %v327 = vld [vmem:[%s314 + $0x60] sm:$0xff]
  %v328 = vld [vmem:[%s314 + $0x68] sm:$0xff]
  %v329 = vld [vmem:[%s314 + $0x70] sm:$0xff]
  %v330 = vld [vmem:[%s314 + $0x78] sm:$0xff]
  %v331 = vld [vmem:[%s314 + $0x80] sm:$0xff]
  %v332 = vld [vmem:[%s314 + $0x88] sm:$0xff]
  %v333 = vld [vmem:[%s314 + $0x90] sm:$0xff]
  %v334 = vld [vmem:[%s314 + $0x98] sm:$0xff]
  %v335 = vld [vmem:[%s314 + $0xa0] sm:$0xff]
  %v336 = vld [vmem:[%s314 + $0xa8] sm:$0xff]
  %v337 = vld [vmem:[%s314 + $0xb0] sm:$0xff]
  %v338 = vld [vmem:[%s314 + $0xb8] sm:$0xff]
  %v339 = vld [vmem:[%s314 + $0xc0] sm:$0xf]
  %v341 = vsel %vm44, %v315, 0
  %v344 = vsel %vm44, %v316, 0
  %v347 = vsel %vm44, %v317, 0
  %v350 = vsel %vm44, %v318, 0
  %v353 = vsel %vm44, %v319, 0
  %v356 = vsel %vm44, %v320, 0
  %v359 = vsel %vm44, %v321, 0
  %v362 = vsel %vm44, %v322, 0
  %v365 = vsel %vm44, %v323, 0
  %v368 = vsel %vm44, %v324, 0
  %v371 = vsel %vm44, %v325, 0
  %v374 = vsel %vm44, %v326, 0
  %v377 = vsel %vm44, %v327, 0
  %v380 = vsel %vm44, %v328, 0
  %v383 = vsel %vm44, %v329, 0
  %v386 = vsel %vm44, %v330, 0
  %v389 = vsel %vm44, %v331, 0
  %v392 = vsel %vm44, %v332, 0
  %v395 = vsel %vm44, %v333, 0
  %v398 = vsel %vm44, %v334, 0
  %v401 = vsel %vm44, %v335, 0
  %v404 = vsel %vm44, %v336, 0
  %v407 = vsel %vm44, %v337, 0
  %v410 = vsel %vm44, %v338, 0
  %v413 = vsel %vm44, %v339, 0
  %415 = vmatprep.subr.mxu0 0.0
  %416 = vmatpush1.msra.mxu0 %v14
  %417 = vmatprep.subr.mxu0 0.0
  %418 = vmatpush1.msra.mxu0 %v15
  %419 = vmatprep.subr.mxu0 0.0
  %420 = vmatpush1.msra.mxu0 %v16
  %421 = vmatprep.subr.mxu0 0.0
  %422 = vmatpush1.msra.mxu0 %v122
  %423 = vmatprep.subr.mxu0 0.0
  %424 = vmatpush1.msra.mxu0 0.0
  %425 = vmatprep.subr.mxu0 0.0
  %426 = vmatpush1.msra.mxu0 0.0
  %427 = vmatprep.subr.mxu0 0.0
  %428 = vmatpush1.msra.mxu0 0.0
  %429 = vmatprep.subr.mxu0 0.0
  %430 = vmatpush1.msra.mxu0 0.0
  %431 = vmatprep.subr.mxu0 0.0
  %432 = vmatpush1.msra.mxu0 0.0
  %433 = vmatprep.subr.mxu0 0.0
  %434 = vmatpush1.msra.mxu0 0.0
  %435 = vmatprep.subr.mxu0 0.0
  %436 = vmatpush1.msra.mxu0 0.0
  %437 = vmatprep.subr.mxu0 0.0
  %438 = vmatpush1.msra.mxu0 0.0
  %439 = vmatprep.subr.mxu0 0.0
  %440 = vmatpush1.msra.mxu0 0.0
  %441 = vmatprep.subr.mxu0 0.0
  %442 = vmatpush1.msra.mxu0 0.0
  %443 = vmatprep.subr.mxu0 0.0
  %444 = vmatpush1.msra.mxu0 0.0
  %445 = vmatprep.subr.mxu0 0.0
  %446 = vmatpush1.msra.mxu0 0.0
  %447 = vmatprep.subr.mxu0 0.0
  %448 = vmatpush1.msra.mxu0 0.0
  %449 = vmatprep.subr.mxu0 0.0
  %450 = vmatpush1.msra.mxu0 0.0
  %451 = vmatprep.subr.mxu0 0.0
  %452 = vmatpush1.msra.mxu0 0.0
  %453 = vmatprep.subr.mxu0 0.0
  %454 = vmatpush1.msra.mxu0 0.0
  %455 = vmatprep.subr.mxu0 0.0
  %456 = vmatpush1.msra.mxu0 0.0
  %457 = vmatprep.subr.mxu0 0.0
  %458 = vmatpush1.msra.mxu0 0.0
  %459 = vmatprep.subr.mxu0 0.0
  %460 = vmatpush1.msra.mxu0 0.0
  %461 = vmatprep.subr.mxu0 0.0
  %462 = vmatpush1.msra.mxu0 0.0
  %463 = vmatprep.subr.mxu0 0.0
  %464 = vmatpush1.msra.mxu0 0.0
  %465 = vmatprep.subr.mxu0 0.0
  %466 = vmatpush1.msra.mxu0 0.0
  %467 = vmatprep.subr.mxu0 0.0
  %468 = vmatpush1.msra.mxu0 0.0
  %469 = vmatprep.subr.mxu0 0.0
  %470 = vmatpush1.msra.mxu0 0.0
  %471 = vmatprep.subr.mxu0 0.0
  %472 = vmatpush1.msra.mxu0 0.0
  %473 = vmatprep.subr.mxu0 0.0
  %474 = vmatpush1.msra.mxu0 0.0
  %475 = vmatprep.subr.mxu0 0.0
  %476 = vmatpush1.msra.mxu0 0.0
  %477 = vmatprep.subr.mxu0 0.0
  %478 = vmatpush1.msra.mxu0 0.0
  %479 = vmatprep.mubr.f32.mxu0 0.0
  %480 = vmatmul.mubr.f32.gmra.mrb[0].mxu0 %v341
  %v481 = vpop.f32.mrb[0].mxu0
  %v482 = vadd.f32 0.0, %v481
  %v483 = vpop.f32.mrb[0].mxu0
  %484 = vmatprep.mubr.f32.mxu0 0.0
  %485 = vmatmul.mubr.f32.gmra.mrb[0].mxu0 %v344
  %v486 = vpop.f32.mrb[0].mxu0
  %v487 = vadd.f32 0.0, %v486
  %v488 = vpop.f32.mrb[0].mxu0
  %489 = vmatprep.mubr.f32.mxu0 0.0
  %490 = vmatmul.mubr.f32.gmra.mrb[0].mxu0 %v347
  %v491 = vpop.f32.mrb[0].mxu0
  %v492 = vadd.f32 0.0, %v491
  %v493 = vpop.f32.mrb[0].mxu0
  %494 = vmatprep.mubr.f32.mxu0 0.0
  %495 = vmatmul.mubr.f32.gmra.mrb[0].mxu0 %v350
  %v496 = vpop.f32.mrb[0].mxu0
  %v497 = vadd.f32 0.0, %v496
  %v498 = vpop.f32.mrb[0].mxu0
  %499 = vmatprep.mubr.f32.mxu0 0.0
  %500 = vmatmul.mubr.f32.gmra.mrb[0].mxu0 %v353
  %v501 = vpop.f32.mrb[0].mxu0
  %v502 = vadd.f32 0.0, %v501
  %v503 = vpop.f32.mrb[0].mxu0
  %504 = vmatprep.mubr.f32.mxu0 0.0
  %505 = vmatmul.mubr.f32.gmra.mrb[0].mxu0 %v356
  %v506 = vpop.f32.mrb[0].mxu0
  %v507 = vadd.f32 0.0, %v506
  %v508 = vpop.f32.mrb[0].mxu0
  %509 = vmatprep.mubr.f32.mxu0 0.0
  %510 = vmatmul.mubr.f32.gmra.mrb[0].mxu0 %v359
  %v511 = vpop.f32.mrb[0].mxu0
  %v512 = vadd.f32 0.0, %v511
  %v513 = vpop.f32.mrb[0].mxu0
  %514 = vmatprep.mubr.f32.mxu0 0.0
  %515 = vmatmul.mubr.f32.gmra.mrb[0].mxu0 %v362
  %v516 = vpop.f32.mrb[0].mxu0
  %v517 = vadd.f32 0.0, %v516
  %v518 = vpop.f32.mrb[0].mxu0
  %519 = vmatprep.mubr.f32.mxu0 0.0
  %520 = vmatmul.mubr.f32.gmra.mrb[0].mxu0 %v365
  %v521 = vpop.f32.mrb[0].mxu0
  %v522 = vadd.f32 0.0, %v521
  %v523 = vpop.f32.mrb[0].mxu0
  %524 = vmatprep.mubr.f32.mxu0 0.0
  %525 = vmatmul.mubr.f32.gmra.mrb[0].mxu0 %v368
  %v526 = vpop.f32.mrb[0].mxu0
  %v527 = vadd.f32 0.0, %v526
  %v528 = vpop.f32.mrb[0].mxu0
  %529 = vmatprep.mubr.f32.mxu0 0.0
  %530 = vmatmul.mubr.f32.gmra.mrb[0].mxu0 %v371
  %v531 = vpop.f32.mrb[0].mxu0
  %v532 = vadd.f32 0.0, %v531
  %v533 = vpop.f32.mrb[0].mxu0
  %534 = vmatprep.mubr.f32.mxu0 0.0
  %535 = vmatmul.mubr.f32.gmra.mrb[0].mxu0 %v374
  %v536 = vpop.f32.mrb[0].mxu0
  %v537 = vadd.f32 0.0, %v536
  %v538 = vpop.f32.mrb[0].mxu0
  %539 = vmatprep.mubr.f32.mxu0 0.0
  %540 = vmatmul.mubr.f32.gmra.mrb[0].mxu0 %v377
  %v541 = vpop.f32.mrb[0].mxu0
  %v542 = vadd.f32 0.0, %v541
  %v543 = vpop.f32.mrb[0].mxu0
  %544 = vmatprep.mubr.f32.mxu0 0.0
  %545 = vmatmul.mubr.f32.gmra.mrb[0].mxu0 %v380
  %v546 = vpop.f32.mrb[0].mxu0
  %v547 = vadd.f32 0.0, %v546
  %v548 = vpop.f32.mrb[0].mxu0
  %549 = vmatprep.mubr.f32.mxu0 0.0
  %550 = vmatmul.mubr.f32.gmra.mrb[0].mxu0 %v383
  %v551 = vpop.f32.mrb[0].mxu0
  %v552 = vadd.f32 0.0, %v551
  %v553 = vpop.f32.mrb[0].mxu0
  %554 = vmatprep.mubr.f32.mxu0 0.0
  %555 = vmatmul.mubr.f32.gmra.mrb[0].mxu0 %v386
  %v556 = vpop.f32.mrb[0].mxu0
  %v557 = vadd.f32 0.0, %v556
  %v558 = vpop.f32.mrb[0].mxu0
  %559 = vmatprep.mubr.f32.mxu0 0.0
  %560 = vmatmul.mubr.f32.gmra.mrb[0].mxu0 %v389
  %v561 = vpop.f32.mrb[0].mxu0
  %v562 = vadd.f32 0.0, %v561
  %v563 = vpop.f32.mrb[0].mxu0
  %564 = vmatprep.mubr.f32.mxu0 0.0
  %565 = vmatmul.mubr.f32.gmra.mrb[0].mxu0 %v392
  %v566 = vpop.f32.mrb[0].mxu0
  %v567 = vadd.f32 0.0, %v566
  %v568 = vpop.f32.mrb[0].mxu0
  %569 = vmatprep.mubr.f32.mxu0 0.0
  %570 = vmatmul.mubr.f32.gmra.mrb[0].mxu0 %v395
  %v571 = vpop.f32.mrb[0].mxu0
  %v572 = vadd.f32 0.0, %v571
  %v573 = vpop.f32.mrb[0].mxu0
  %574 = vmatprep.mubr.f32.mxu0 0.0
  %575 = vmatmul.mubr.f32.gmra.mrb[0].mxu0 %v398
  %v576 = vpop.f32.mrb[0].mxu0
  %v577 = vadd.f32 0.0, %v576
  %v578 = vpop.f32.mrb[0].mxu0
  %579 = vmatprep.mubr.f32.mxu0 0.0
  %580 = vmatmul.mubr.f32.gmra.mrb[0].mxu0 %v401
  %v581 = vpop.f32.mrb[0].mxu0
  %v582 = vadd.f32 0.0, %v581
  %v583 = vpop.f32.mrb[0].mxu0
  %584 = vmatprep.mubr.f32.mxu0 0.0
  %585 = vmatmul.mubr.f32.gmra.mrb[0].mxu0 %v404
  %v586 = vpop.f32.mrb[0].mxu0
  %v587 = vadd.f32 0.0, %v586
  %v588 = vpop.f32.mrb[0].mxu0
  %589 = vmatprep.mubr.f32.mxu0 0.0
  %590 = vmatmul.mubr.f32.gmra.mrb[0].mxu0 %v407
  %v591 = vpop.f32.mrb[0].mxu0
  %v592 = vadd.f32 0.0, %v591
  %v593 = vpop.f32.mrb[0].mxu0
  %594 = vmatprep.mubr.f32.mxu0 0.0
  %595 = vmatmul.mubr.f32.gmra.mrb[0].mxu0 %v410
  %v596 = vpop.f32.mrb[0].mxu0
  %v597 = vadd.f32 0.0, %v596
  %v598 = vpop.f32.mrb[0].mxu0
  %599 = vmatprep.mubr.f32.mxu0 0.0
  %600 = vmatmul.mubr.f32.gmra.mrb[0].mxu0 %v413
  %v601 = vpop.f32.mrb[0].mxu0
  %v602 = vadd.f32 0.0, %v601
  %v603 = vpop.f32.mrb[0].mxu0
  %604 = vdwg.mxu0
  %v605 = vmax.f32 %v191, %v482
  %v606 = vmax.f32 %v196, %v487
  %v607 = vmax.f32 %v201, %v492
  %v608 = vmax.f32 %v206, %v497
  %v609 = vmax.f32 %v211, %v502
  %v610 = vmax.f32 %v216, %v507
  %v611 = vmax.f32 %v221, %v512
  %v612 = vmax.f32 %v226, %v517
  %v613 = vmax.f32 %v231, %v522
  %v614 = vmax.f32 %v236, %v527
  %v615 = vmax.f32 %v241, %v532
  %v616 = vmax.f32 %v246, %v537
  %v617 = vmax.f32 %v251, %v542
  %v618 = vmax.f32 %v256, %v547
  %v619 = vmax.f32 %v261, %v552
  %v620 = vmax.f32 %v266, %v557
  %v621 = vmax.f32 %v271, %v562
  %v622 = vmax.f32 %v276, %v567
  %v623 = vmax.f32 %v281, %v572
  %v624 = vmax.f32 %v286, %v577
  %v625 = vmax.f32 %v291, %v582
  %v626 = vmax.f32 %v296, %v587
  %v627 = vmax.f32 %v301, %v592
  %v628 = vmax.f32 %v306, %v597
  %v629 = vmax.f32 %v311, %v602
  %s630 = scalar_lea.vmem %s0, 800
  %v631 = vld [vmem:[%s630] sm:$0xff]
  %v632 = vld [vmem:[%s630 + $0x8] sm:$0xff]
  %v633 = vld [vmem:[%s630 + $0x10] sm:$0xff]
  %v634 = vld [vmem:[%s630 + $0x18] sm:$0xff]
  %v635 = vld [vmem:[%s630 + $0x20] sm:$0xff]
  %v636 = vld [vmem:[%s630 + $0x28] sm:$0xff]
  %v637 = vld [vmem:[%s630 + $0x30] sm:$0xff]
  %v638 = vld [vmem:[%s630 + $0x38] sm:$0xff]
  %v639 = vld [vmem:[%s630 + $0x40] sm:$0xff]
  %v640 = vld [vmem:[%s630 + $0x48] sm:$0xff]
  %v641 = vld [vmem:[%s630 + $0x50] sm:$0xff]
  %v642 = vld [vmem:[%s630 + $0x58] sm:$0xff]
  %v643 = vld [vmem:[%s630 + $0x60] sm:$0xff]
  %v644 = vld [vmem:[%s630 + $0x68] sm:$0xff]
  %v645 = vld [vmem:[%s630 + $0x70] sm:$0xff]
  %v646 = vld [vmem:[%s630 + $0x78] sm:$0xff]
  %v647 = vld [vmem:[%s630 + $0x80] sm:$0xff]
  %v648 = vld [vmem:[%s630 + $0x88] sm:$0xff]
  %v649 = vld [vmem:[%s630 + $0x90] sm:$0xff]
  %v650 = vld [vmem:[%s630 + $0x98] sm:$0xff]
  %v651 = vld [vmem:[%s630 + $0xa0] sm:$0xff]
  %v652 = vld [vmem:[%s630 + $0xa8] sm:$0xff]
  %v653 = vld [vmem:[%s630 + $0xb0] sm:$0xff]
  %v654 = vld [vmem:[%s630 + $0xb8] sm:$0xff]
  %v655 = vld [vmem:[%s630 + $0xc0] sm:$0xf]
  %v657 = vsel %vm44, %v631, 0
  %v660 = vsel %vm44, %v632, 0
  %v663 = vsel %vm44, %v633, 0
  %v666 = vsel %vm44, %v634, 0
  %v669 = vsel %vm44, %v635, 0
  %v672 = vsel %vm44, %v636, 0
  %v675 = vsel %vm44, %v637, 0
  %v678 = vsel %vm44, %v638, 0
  %v681 = vsel %vm44, %v639, 0
  %v684 = vsel %vm44, %v640, 0
  %v687 = vsel %vm44, %v641, 0
  %v690 = vsel %vm44, %v642, 0
  %v693 = vsel %vm44, %v643, 0
  %v696 = vsel %vm44, %v644, 0
  %v699 = vsel %vm44, %v645, 0
  %v702 = vsel %vm44, %v646, 0
  %v705 = vsel %vm44, %v647, 0
  %v708 = vsel %vm44, %v648, 0
  %v711 = vsel %vm44, %v649, 0
  %v714 = vsel %vm44, %v650, 0
  %v717 = vsel %vm44, %v651, 0
  %v720 = vsel %vm44, %v652, 0
  %v723 = vsel %vm44, %v653, 0
  %v726 = vsel %vm44, %v654, 0
  %v729 = vsel %vm44, %v655, 0
  %731 = vmatprep.subr.mxu0 0.0
  %732 = vmatpush1.msra.mxu0 %v14
  %733 = vmatprep.subr.mxu0 0.0
  %734 = vmatpush1.msra.mxu0 %v15
  %735 = vmatprep.subr.mxu0 0.0
  %736 = vmatpush1.msra.mxu0 %v16
  %737 = vmatprep.subr.mxu0 0.0
  %738 = vmatpush1.msra.mxu0 %v122
  %739 = vmatprep.subr.mxu0 0.0
  %740 = vmatpush1.msra.mxu0 0.0
  %741 = vmatprep.subr.mxu0 0.0
  %742 = vmatpush1.msra.mxu0 0.0
  %743 = vmatprep.subr.mxu0 0.0
  %744 = vmatpush1.msra.mxu0 0.0
  %745 = vmatprep.subr.mxu0 0.0
  %746 = vmatpush1.msra.mxu0 0.0
  %747 = vmatprep.subr.mxu0 0.0
  %748 = vmatpush1.msra.mxu0 0.0
  %749 = vmatprep.subr.mxu0 0.0
  %750 = vmatpush1.msra.mxu0 0.0
  %751 = vmatprep.subr.mxu0 0.0
  %752 = vmatpush1.msra.mxu0 0.0
  %753 = vmatprep.subr.mxu0 0.0
  %754 = vmatpush1.msra.mxu0 0.0
  %755 = vmatprep.subr.mxu0 0.0
  %756 = vmatpush1.msra.mxu0 0.0
  %757 = vmatprep.subr.mxu0 0.0
  %758 = vmatpush1.msra.mxu0 0.0
  %759 = vmatprep.subr.mxu0 0.0
  %760 = vmatpush1.msra.mxu0 0.0
  %761 = vmatprep.subr.mxu0 0.0
  %762 = vmatpush1.msra.mxu0 0.0
  %763 = vmatprep.subr.mxu0 0.0
  %764 = vmatpush1.msra.mxu0 0.0
  %765 = vmatprep.subr.mxu0 0.0
  %766 = vmatpush1.msra.mxu0 0.0
  %767 = vmatprep.subr.mxu0 0.0
  %768 = vmatpush1.msra.mxu0 0.0
  %769 = vmatprep.subr.mxu0 0.0
  %770 = vmatpush1.msra.mxu0 0.0
  %771 = vmatprep.subr.mxu0 0.0
  %772 = vmatpush1.msra.mxu0 0.0
  %773 = vmatprep.subr.mxu0 0.0
  %774 = vmatpush1.msra.mxu0 0.0
  %775 = vmatprep.subr.mxu0 0.0
  %776 = vmatpush1.msra.mxu0 0.0
  %777 = vmatprep.subr.mxu0 0.0
  %778 = vmatpush1.msra.mxu0 0.0
  %779 = vmatprep.subr.mxu0 0.0
  %780 = vmatpush1.msra.mxu0 0.0
  %781 = vmatprep.subr.mxu0 0.0
  %782 = vmatpush1.msra.mxu0 0.0
  %783 = vmatprep.subr.mxu0 0.0
  %784 = vmatpush1.msra.mxu0 0.0
  %785 = vmatprep.subr.mxu0 0.0
  %786 = vmatpush1.msra.mxu0 0.0
  %787 = vmatprep.subr.mxu0 0.0
  %788 = vmatpush1.msra.mxu0 0.0
  %789 = vmatprep.subr.mxu0 0.0
  %790 = vmatpush1.msra.mxu0 0.0
  %791 = vmatprep.subr.mxu0 0.0
  %792 = vmatpush1.msra.mxu0 0.0
  %793 = vmatprep.subr.mxu0 0.0
  %794 = vmatpush1.msra.mxu0 0.0
  %795 = vmatprep.mubr.f32.mxu0 0.0
  %796 = vmatmul.mubr.f32.gmra.mrb[0].mxu0 %v657
  %v797 = vpop.f32.mrb[0].mxu0
  %v798 = vadd.f32 0.0, %v797
  %v799 = vpop.f32.mrb[0].mxu0
  %800 = vmatprep.mubr.f32.mxu0 0.0
  %801 = vmatmul.mubr.f32.gmra.mrb[0].mxu0 %v660
  %v802 = vpop.f32.mrb[0].mxu0
  %v803 = vadd.f32 0.0, %v802
  %v804 = vpop.f32.mrb[0].mxu0
  %805 = vmatprep.mubr.f32.mxu0 0.0
  %806 = vmatmul.mubr.f32.gmra.mrb[0].mxu0 %v663
  %v807 = vpop.f32.mrb[0].mxu0
  %v808 = vadd.f32 0.0, %v807
  %v809 = vpop.f32.mrb[0].mxu0
  %810 = vmatprep.mubr.f32.mxu0 0.0
  %811 = vmatmul.mubr.f32.gmra.mrb[0].mxu0 %v666
  %v812 = vpop.f32.mrb[0].mxu0
  %v813 = vadd.f32 0.0, %v812
  %v814 = vpop.f32.mrb[0].mxu0
  %815 = vmatprep.mubr.f32.mxu0 0.0
  %816 = vmatmul.mubr.f32.gmra.mrb[0].mxu0 %v669
  %v817 = vpop.f32.mrb[0].mxu0
  %v818 = vadd.f32 0.0, %v817
  %v819 = vpop.f32.mrb[0].mxu0
  %820 = vmatprep.mubr.f32.mxu0 0.0
  %821 = vmatmul.mubr.f32.gmra.mrb[0].mxu0 %v672
  %v822 = vpop.f32.mrb[0].mxu0
  %v823 = vadd.f32 0.0, %v822
  %v824 = vpop.f32.mrb[0].mxu0
  %825 = vmatprep.mubr.f32.mxu0 0.0
  %826 = vmatmul.mubr.f32.gmra.mrb[0].mxu0 %v675
  %v827 = vpop.f32.mrb[0].mxu0
  %v828 = vadd.f32 0.0, %v827
  %v829 = vpop.f32.mrb[0].mxu0
  %830 = vmatprep.mubr.f32.mxu0 0.0
  %831 = vmatmul.mubr.f32.gmra.mrb[0].mxu0 %v678
  %v832 = vpop.f32.mrb[0].mxu0
  %v833 = vadd.f32 0.0, %v832
  %v834 = vpop.f32.mrb[0].mxu0
  %835 = vmatprep.mubr.f32.mxu0 0.0
  %836 = vmatmul.mubr.f32.gmra.mrb[0].mxu0 %v681
  %v837 = vpop.f32.mrb[0].mxu0
  %v838 = vadd.f32 0.0, %v837
  %v839 = vpop.f32.mrb[0].mxu0
  %840 = vmatprep.mubr.f32.mxu0 0.0
  %841 = vmatmul.mubr.f32.gmra.mrb[0].mxu0 %v684
  %v842 = vpop.f32.mrb[0].mxu0
  %v843 = vadd.f32 0.0, %v842
  %v844 = vpop.f32.mrb[0].mxu0
  %845 = vmatprep.mubr.f32.mxu0 0.0
  %846 = vmatmul.mubr.f32.gmra.mrb[0].mxu0 %v687
  %v847 = vpop.f32.mrb[0].mxu0
  %v848 = vadd.f32 0.0, %v847
  %v849 = vpop.f32.mrb[0].mxu0
  %850 = vmatprep.mubr.f32.mxu0 0.0
  %851 = vmatmul.mubr.f32.gmra.mrb[0].mxu0 %v690
  %v852 = vpop.f32.mrb[0].mxu0
  %v853 = vadd.f32 0.0, %v852
  %v854 = vpop.f32.mrb[0].mxu0
  %855 = vmatprep.mubr.f32.mxu0 0.0
  %856 = vmatmul.mubr.f32.gmra.mrb[0].mxu0 %v693
  %v857 = vpop.f32.mrb[0].mxu0
  %v858 = vadd.f32 0.0, %v857
  %v859 = vpop.f32.mrb[0].mxu0
  %860 = vmatprep.mubr.f32.mxu0 0.0
  %861 = vmatmul.mubr.f32.gmra.mrb[0].mxu0 %v696
  %v862 = vpop.f32.mrb[0].mxu0
  %v863 = vadd.f32 0.0, %v862
  %v864 = vpop.f32.mrb[0].mxu0
  %865 = vmatprep.mubr.f32.mxu0 0.0
  %866 = vmatmul.mubr.f32.gmra.mrb[0].mxu0 %v699
  %v867 = vpop.f32.mrb[0].mxu0
  %v868 = vadd.f32 0.0, %v867
  %v869 = vpop.f32.mrb[0].mxu0
  %870 = vmatprep.mubr.f32.mxu0 0.0
  %871 = vmatmul.mubr.f32.gmra.mrb[0].mxu0 %v702
  %v872 = vpop.f32.mrb[0].mxu0
  %v873 = vadd.f32 0.0, %v872
  %v874 = vpop.f32.mrb[0].mxu0
  %875 = vmatprep.mubr.f32.mxu0 0.0
  %876 = vmatmul.mubr.f32.gmra.mrb[0].mxu0 %v705
  %v877 = vpop.f32.mrb[0].mxu0
  %v878 = vadd.f32 0.0, %v877
  %v879 = vpop.f32.mrb[0].mxu0
  %880 = vmatprep.mubr.f32.mxu0 0.0
  %881 = vmatmul.mubr.f32.gmra.mrb[0].mxu0 %v708
  %v882 = vpop.f32.mrb[0].mxu0
  %v883 = vadd.f32 0.0, %v882
  %v884 = vpop.f32.mrb[0].mxu0
  %885 = vmatprep.mubr.f32.mxu0 0.0
  %886 = vmatmul.mubr.f32.gmra.mrb[0].mxu0 %v711
  %v887 = vpop.f32.mrb[0].mxu0
  %v888 = vadd.f32 0.0, %v887
  %v889 = vpop.f32.mrb[0].mxu0
  %890 = vmatprep.mubr.f32.mxu0 0.0
  %891 = vmatmul.mubr.f32.gmra.mrb[0].mxu0 %v714
  %v892 = vpop.f32.mrb[0].mxu0
  %v893 = vadd.f32 0.0, %v892
  %v894 = vpop.f32.mrb[0].mxu0
  %895 = vmatprep.mubr.f32.mxu0 0.0
  %896 = vmatmul.mubr.f32.gmra.mrb[0].mxu0 %v717
  %v897 = vpop.f32.mrb[0].mxu0
  %v898 = vadd.f32 0.0, %v897
  %v899 = vpop.f32.mrb[0].mxu0
  %900 = vmatprep.mubr.f32.mxu0 0.0
  %901 = vmatmul.mubr.f32.gmra.mrb[0].mxu0 %v720
  %v902 = vpop.f32.mrb[0].mxu0
  %v903 = vadd.f32 0.0, %v902
  %v904 = vpop.f32.mrb[0].mxu0
  %905 = vmatprep.mubr.f32.mxu0 0.0
  %906 = vmatmul.mubr.f32.gmra.mrb[0].mxu0 %v723
  %v907 = vpop.f32.mrb[0].mxu0
  %v908 = vadd.f32 0.0, %v907
  %v909 = vpop.f32.mrb[0].mxu0
  %910 = vmatprep.mubr.f32.mxu0 0.0
  %911 = vmatmul.mubr.f32.gmra.mrb[0].mxu0 %v726
  %v912 = vpop.f32.mrb[0].mxu0
  %v913 = vadd.f32 0.0, %v912
  %v914 = vpop.f32.mrb[0].mxu0
  %915 = vmatprep.mubr.f32.mxu0 0.0
  %916 = vmatmul.mubr.f32.gmra.mrb[0].mxu0 %v729
  %v917 = vpop.f32.mrb[0].mxu0
  %v918 = vadd.f32 0.0, %v917
  %v919 = vpop.f32.mrb[0].mxu0
  %920 = vdwg.mxu0
  %v921 = vmax.f32 %v605, %v798
  %v922 = vmax.f32 %v606, %v803
  %v923 = vmax.f32 %v607, %v808
  %v924 = vmax.f32 %v608, %v813
  %v925 = vmax.f32 %v609, %v818
  %v926 = vmax.f32 %v610, %v823
  %v927 = vmax.f32 %v611, %v828
  %v928 = vmax.f32 %v612, %v833
  %v929 = vmax.f32 %v613, %v838
  %v930 = vmax.f32 %v614, %v843
  %v931 = vmax.f32 %v615, %v848
  %v932 = vmax.f32 %v616, %v853
  %v933 = vmax.f32 %v617, %v858
  %v934 = vmax.f32 %v618, %v863
  %v935 = vmax.f32 %v619, %v868
  %v936 = vmax.f32 %v620, %v873
  %v937 = vmax.f32 %v621, %v878
  %v938 = vmax.f32 %v622, %v883
  %v939 = vmax.f32 %v623, %v888
  %v940 = vmax.f32 %v624, %v893
  %v941 = vmax.f32 %v625, %v898
  %v942 = vmax.f32 %v626, %v903
  %v943 = vmax.f32 %v627, %v908
  %v944 = vmax.f32 %v628, %v913
  %v945 = vmax.f32 %v629, %v918
  %s946 = scalar_lea.vmem %s0, 1200
  %v947 = vld [vmem:[%s946] sm:$0xff]
  %v948 = vld [vmem:[%s946 + $0x8] sm:$0xff]
  %v949 = vld [vmem:[%s946 + $0x10] sm:$0xff]
  %v950 = vld [vmem:[%s946 + $0x18] sm:$0xff]
  %v951 = vld [vmem:[%s946 + $0x20] sm:$0xff]
  %v952 = vld [vmem:[%s946 + $0x28] sm:$0xff]
  %v953 = vld [vmem:[%s946 + $0x30] sm:$0xff]
  %v954 = vld [vmem:[%s946 + $0x38] sm:$0xff]
  %v955 = vld [vmem:[%s946 + $0x40] sm:$0xff]
  %v956 = vld [vmem:[%s946 + $0x48] sm:$0xff]
  %v957 = vld [vmem:[%s946 + $0x50] sm:$0xff]
  %v958 = vld [vmem:[%s946 + $0x58] sm:$0xff]
  %v959 = vld [vmem:[%s946 + $0x60] sm:$0xff]
  %v960 = vld [vmem:[%s946 + $0x68] sm:$0xff]
  %v961 = vld [vmem:[%s946 + $0x70] sm:$0xff]
  %v962 = vld [vmem:[%s946 + $0x78] sm:$0xff]
  %v963 = vld [vmem:[%s946 + $0x80] sm:$0xff]
  %v964 = vld [vmem:[%s946 + $0x88] sm:$0xff]
  %v965 = vld [vmem:[%s946 + $0x90] sm:$0xff]
  %v966 = vld [vmem:[%s946 + $0x98] sm:$0xff]
  %v967 = vld [vmem:[%s946 + $0xa0] sm:$0xff]
  %v968 = vld [vmem:[%s946 + $0xa8] sm:$0xff]
  %v969 = vld [vmem:[%s946 + $0xb0] sm:$0xff]
  %v970 = vld [vmem:[%s946 + $0xb8] sm:$0xff]
  %v971 = vld [vmem:[%s946 + $0xc0] sm:$0xf]
  %v973 = vsel %vm44, %v947, 0
  %v976 = vsel %vm44, %v948, 0
  %v979 = vsel %vm44, %v949, 0
  %v982 = vsel %vm44, %v950, 0
  %v985 = vsel %vm44, %v951, 0
  %v988 = vsel %vm44, %v952, 0
  %v991 = vsel %vm44, %v953, 0
  %v994 = vsel %vm44, %v954, 0
  %v997 = vsel %vm44, %v955, 0
  %v1000 = vsel %vm44, %v956, 0
  %v1003 = vsel %vm44, %v957, 0
  %v1006 = vsel %vm44, %v958, 0
  %v1009 = vsel %vm44, %v959, 0
  %v1012 = vsel %vm44, %v960, 0
  %v1015 = vsel %vm44, %v961, 0
  %v1018 = vsel %vm44, %v962, 0
  %v1021 = vsel %vm44, %v963, 0
  %v1024 = vsel %vm44, %v964, 0
  %v1027 = vsel %vm44, %v965, 0
  %v1030 = vsel %vm44, %v966, 0
  %v1033 = vsel %vm44, %v967, 0
  %v1036 = vsel %vm44, %v968, 0
  %v1039 = vsel %vm44, %v969, 0
  %v1042 = vsel %vm44, %v970, 0
  %v1045 = vsel %vm44, %v971, 0
  %1047 = vmatprep.subr.mxu0 0.0
  %1048 = vmatpush1.msra.mxu0 %v14
  %1049 = vmatprep.subr.mxu0 0.0
  %1050 = vmatpush1.msra.mxu0 %v15
  %1051 = vmatprep.subr.mxu0 0.0
  %1052 = vmatpush1.msra.mxu0 %v16
  %1053 = vmatprep.subr.mxu0 0.0
  %1054 = vmatpush1.msra.mxu0 %v122
  %1055 = vmatprep.subr.mxu0 0.0
  %1056 = vmatpush1.msra.mxu0 0.0
  %1057 = vmatprep.subr.mxu0 0.0
  %1058 = vmatpush1.msra.mxu0 0.0
  %1059 = vmatprep.subr.mxu0 0.0
  %1060 = vmatpush1.msra.mxu0 0.0
  %1061 = vmatprep.subr.mxu0 0.0
  %1062 = vmatpush1.msra.mxu0 0.0
  %1063 = vmatprep.subr.mxu0 0.0
  %1064 = vmatpush1.msra.mxu0 0.0
  %1065 = vmatprep.subr.mxu0 0.0
  %1066 = vmatpush1.msra.mxu0 0.0
  %1067 = vmatprep.subr.mxu0 0.0
  %1068 = vmatpush1.msra.mxu0 0.0
  %1069 = vmatprep.subr.mxu0 0.0
  %1070 = vmatpush1.msra.mxu0 0.0
  %1071 = vmatprep.subr.mxu0 0.0
  %1072 = vmatpush1.msra.mxu0 0.0
  %1073 = vmatprep.subr.mxu0 0.0
  %1074 = vmatpush1.msra.mxu0 0.0
  %1075 = vmatprep.subr.mxu0 0.0
  %1076 = vmatpush1.msra.mxu0 0.0
  %1077 = vmatprep.subr.mxu0 0.0
  %1078 = vmatpush1.msra.mxu0 0.0
  %1079 = vmatprep.subr.mxu0 0.0
  %1080 = vmatpush1.msra.mxu0 0.0
  %1081 = vmatprep.subr.mxu0 0.0
  %1082 = vmatpush1.msra.mxu0 0.0
  %1083 = vmatprep.subr.mxu0 0.0
  %1084 = vmatpush1.msra.mxu0 0.0
  %1085 = vmatprep.subr.mxu0 0.0
  %1086 = vmatpush1.msra.mxu0 0.0
  %1087 = vmatprep.subr.mxu0 0.0
  %1088 = vmatpush1.msra.mxu0 0.0
  %1089 = vmatprep.subr.mxu0 0.0
  %1090 = vmatpush1.msra.mxu0 0.0
  %1091 = vmatprep.subr.mxu0 0.0
  %1092 = vmatpush1.msra.mxu0 0.0
  %1093 = vmatprep.subr.mxu0 0.0
  %1094 = vmatpush1.msra.mxu0 0.0
  %1095 = vmatprep.subr.mxu0 0.0
  %1096 = vmatpush1.msra.mxu0 0.0
  %1097 = vmatprep.subr.mxu0 0.0
  %1098 = vmatpush1.msra.mxu0 0.0
  %1099 = vmatprep.subr.mxu0 0.0
  %1100 = vmatpush1.msra.mxu0 0.0
  %1101 = vmatprep.subr.mxu0 0.0
  %1102 = vmatpush1.msra.mxu0 0.0
  %1103 = vmatprep.subr.mxu0 0.0
  %1104 = vmatpush1.msra.mxu0 0.0
  %1105 = vmatprep.subr.mxu0 0.0
  %1106 = vmatpush1.msra.mxu0 0.0
  %1107 = vmatprep.subr.mxu0 0.0
  %1108 = vmatpush1.msra.mxu0 0.0
  %1109 = vmatprep.subr.mxu0 0.0
  %1110 = vmatpush1.msra.mxu0 0.0
  %1111 = vmatprep.mubr.f32.mxu0 0.0
  %1112 = vmatmul.mubr.f32.gmra.mrb[0].mxu0 %v973
  %v1113 = vpop.f32.mrb[0].mxu0
  %v1114 = vadd.f32 0.0, %v1113
  %v1115 = vpop.f32.mrb[0].mxu0
  %1116 = vmatprep.mubr.f32.mxu0 0.0
  %1117 = vmatmul.mubr.f32.gmra.mrb[0].mxu0 %v976
  %v1118 = vpop.f32.mrb[0].mxu0
  %v1119 = vadd.f32 0.0, %v1118
  %v1120 = vpop.f32.mrb[0].mxu0
  %1121 = vmatprep.mubr.f32.mxu0 0.0
  %1122 = vmatmul.mubr.f32.gmra.mrb[0].mxu0 %v979
  %v1123 = vpop.f32.mrb[0].mxu0
  %v1124 = vadd.f32 0.0, %v1123
  %v1125 = vpop.f32.mrb[0].mxu0
  %1126 = vmatprep.mubr.f32.mxu0 0.0
  %1127 = vmatmul.mubr.f32.gmra.mrb[0].mxu0 %v982
  %v1128 = vpop.f32.mrb[0].mxu0
  %v1129 = vadd.f32 0.0, %v1128
  %v1130 = vpop.f32.mrb[0].mxu0
  %1131 = vmatprep.mubr.f32.mxu0 0.0
  %1132 = vmatmul.mubr.f32.gmra.mrb[0].mxu0 %v985
  %v1133 = vpop.f32.mrb[0].mxu0
  %v1134 = vadd.f32 0.0, %v1133
  %v1135 = vpop.f32.mrb[0].mxu0
  %1136 = vmatprep.mubr.f32.mxu0 0.0
  %1137 = vmatmul.mubr.f32.gmra.mrb[0].mxu0 %v988
  %v1138 = vpop.f32.mrb[0].mxu0
  %v1139 = vadd.f32 0.0, %v1138
  %v1140 = vpop.f32.mrb[0].mxu0
  %1141 = vmatprep.mubr.f32.mxu0 0.0
  %1142 = vmatmul.mubr.f32.gmra.mrb[0].mxu0 %v991
  %v1143 = vpop.f32.mrb[0].mxu0
  %v1144 = vadd.f32 0.0, %v1143
  %v1145 = vpop.f32.mrb[0].mxu0
  %1146 = vmatprep.mubr.f32.mxu0 0.0
  %1147 = vmatmul.mubr.f32.gmra.mrb[0].mxu0 %v994
  %v1148 = vpop.f32.mrb[0].mxu0
  %v1149 = vadd.f32 0.0, %v1148
  %v1150 = vpop.f32.mrb[0].mxu0
  %1151 = vmatprep.mubr.f32.mxu0 0.0
  %1152 = vmatmul.mubr.f32.gmra.mrb[0].mxu0 %v997
  %v1153 = vpop.f32.mrb[0].mxu0
  %v1154 = vadd.f32 0.0, %v1153
  %v1155 = vpop.f32.mrb[0].mxu0
  %1156 = vmatprep.mubr.f32.mxu0 0.0
  %1157 = vmatmul.mubr.f32.gmra.mrb[0].mxu0 %v1000
  %v1158 = vpop.f32.mrb[0].mxu0
  %v1159 = vadd.f32 0.0, %v1158
  %v1160 = vpop.f32.mrb[0].mxu0
  %1161 = vmatprep.mubr.f32.mxu0 0.0
  %1162 = vmatmul.mubr.f32.gmra.mrb[0].mxu0 %v1003
  %v1163 = vpop.f32.mrb[0].mxu0
  %v1164 = vadd.f32 0.0, %v1163
  %v1165 = vpop.f32.mrb[0].mxu0
  %1166 = vmatprep.mubr.f32.mxu0 0.0
  %1167 = vmatmul.mubr.f32.gmra.mrb[0].mxu0 %v1006
  %v1168 = vpop.f32.mrb[0].mxu0
  %v1169 = vadd.f32 0.0, %v1168
  %v1170 = vpop.f32.mrb[0].mxu0
  %1171 = vmatprep.mubr.f32.mxu0 0.0
  %1172 = vmatmul.mubr.f32.gmra.mrb[0].mxu0 %v1009
  %v1173 = vpop.f32.mrb[0].mxu0
  %v1174 = vadd.f32 0.0, %v1173
  %v1175 = vpop.f32.mrb[0].mxu0
  %1176 = vmatprep.mubr.f32.mxu0 0.0
  %1177 = vmatmul.mubr.f32.gmra.mrb[0].mxu0 %v1012
  %v1178 = vpop.f32.mrb[0].mxu0
  %v1179 = vadd.f32 0.0, %v1178
  %v1180 = vpop.f32.mrb[0].mxu0
  %1181 = vmatprep.mubr.f32.mxu0 0.0
  %1182 = vmatmul.mubr.f32.gmra.mrb[0].mxu0 %v1015
  %v1183 = vpop.f32.mrb[0].mxu0
  %v1184 = vadd.f32 0.0, %v1183
  %v1185 = vpop.f32.mrb[0].mxu0
  %1186 = vmatprep.mubr.f32.mxu0 0.0
  %1187 = vmatmul.mubr.f32.gmra.mrb[0].mxu0 %v1018
  %v1188 = vpop.f32.mrb[0].mxu0
  %v1189 = vadd.f32 0.0, %v1188
  %v1190 = vpop.f32.mrb[0].mxu0
  %1191 = vmatprep.mubr.f32.mxu0 0.0
  %1192 = vmatmul.mubr.f32.gmra.mrb[0].mxu0 %v1021
  %v1193 = vpop.f32.mrb[0].mxu0
  %v1194 = vadd.f32 0.0, %v1193
  %v1195 = vpop.f32.mrb[0].mxu0
  %1196 = vmatprep.mubr.f32.mxu0 0.0
  %1197 = vmatmul.mubr.f32.gmra.mrb[0].mxu0 %v1024
  %v1198 = vpop.f32.mrb[0].mxu0
  %v1199 = vadd.f32 0.0, %v1198
  %v1200 = vpop.f32.mrb[0].mxu0
  %1201 = vmatprep.mubr.f32.mxu0 0.0
  %1202 = vmatmul.mubr.f32.gmra.mrb[0].mxu0 %v1027
  %v1203 = vpop.f32.mrb[0].mxu0
  %v1204 = vadd.f32 0.0, %v1203
  %v1205 = vpop.f32.mrb[0].mxu0
  %1206 = vmatprep.mubr.f32.mxu0 0.0
  %1207 = vmatmul.mubr.f32.gmra.mrb[0].mxu0 %v1030
  %v1208 = vpop.f32.mrb[0].mxu0
  %v1209 = vadd.f32 0.0, %v1208
  %v1210 = vpop.f32.mrb[0].mxu0
  %1211 = vmatprep.mubr.f32.mxu0 0.0
  %1212 = vmatmul.mubr.f32.gmra.mrb[0].mxu0 %v1033
  %v1213 = vpop.f32.mrb[0].mxu0
  %v1214 = vadd.f32 0.0, %v1213
  %v1215 = vpop.f32.mrb[0].mxu0
  %1216 = vmatprep.mubr.f32.mxu0 0.0
  %1217 = vmatmul.mubr.f32.gmra.mrb[0].mxu0 %v1036
  %v1218 = vpop.f32.mrb[0].mxu0
  %v1219 = vadd.f32 0.0, %v1218
  %v1220 = vpop.f32.mrb[0].mxu0
  %1221 = vmatprep.mubr.f32.mxu0 0.0
  %1222 = vmatmul.mubr.f32.gmra.mrb[0].mxu0 %v1039
  %v1223 = vpop.f32.mrb[0].mxu0
  %v1224 = vadd.f32 0.0, %v1223
  %v1225 = vpop.f32.mrb[0].mxu0
  %1226 = vmatprep.mubr.f32.mxu0 0.0
  %1227 = vmatmul.mubr.f32.gmra.mrb[0].mxu0 %v1042
  %v1228 = vpop.f32.mrb[0].mxu0
  %v1229 = vadd.f32 0.0, %v1228
  %v1230 = vpop.f32.mrb[0].mxu0
  %1231 = vmatprep.mubr.f32.mxu0 0.0
  %1232 = vmatmul.mubr.f32.gmra.mrb[0].mxu0 %v1045
  %v1233 = vpop.f32.mrb[0].mxu0
  %v1234 = vadd.f32 0.0, %v1233
  %v1235 = vpop.f32.mrb[0].mxu0
  %1236 = vdwg.mxu0
  %v1237 = vmax.f32 %v921, %v1114
  %v1238 = vmax.f32 %v922, %v1119
  %v1239 = vmax.f32 %v923, %v1124
  %v1240 = vmax.f32 %v924, %v1129
  %v1241 = vmax.f32 %v925, %v1134
  %v1242 = vmax.f32 %v926, %v1139
  %v1243 = vmax.f32 %v927, %v1144
  %v1244 = vmax.f32 %v928, %v1149
  %v1245 = vmax.f32 %v929, %v1154
  %v1246 = vmax.f32 %v930, %v1159
  %v1247 = vmax.f32 %v931, %v1164
  %v1248 = vmax.f32 %v932, %v1169
  %v1249 = vmax.f32 %v933, %v1174
  %v1250 = vmax.f32 %v934, %v1179
  %v1251 = vmax.f32 %v935, %v1184
  %v1252 = vmax.f32 %v936, %v1189
  %v1253 = vmax.f32 %v937, %v1194
  %v1254 = vmax.f32 %v938, %v1199
  %v1255 = vmax.f32 %v939, %v1204
  %v1256 = vmax.f32 %v940, %v1209
  %v1257 = vmax.f32 %v941, %v1214
  %v1258 = vmax.f32 %v942, %v1219
  %v1259 = vmax.f32 %v943, %v1224
  %v1260 = vmax.f32 %v944, %v1229
  %v1261 = vmax.f32 %v945, %v1234
  %v1263 = vlaneseq
  %v1264 = vshrl.u32 %v1263, 7
  %v1265 = vsub.s32 0, %v1264
  %v1266 = vrot.slane %v18, %v1265
  %v1268 = vadd.f32 %v1237, %v1266
  %v1269 = vadd.f32 %v1238, %v1266
  %v1270 = vadd.f32 %v1239, %v1266
  %v1271 = vadd.f32 %v1240, %v1266
  %v1272 = vadd.f32 %v1241, %v1266
  %v1273 = vadd.f32 %v1242, %v1266
  %v1274 = vadd.f32 %v1243, %v1266
  %v1275 = vadd.f32 %v1244, %v1266
  %v1276 = vadd.f32 %v1245, %v1266
  %v1277 = vadd.f32 %v1246, %v1266
  %v1278 = vadd.f32 %v1247, %v1266
  %v1279 = vadd.f32 %v1248, %v1266
  %v1280 = vadd.f32 %v1249, %v1266
  %v1281 = vadd.f32 %v1250, %v1266
  %v1282 = vadd.f32 %v1251, %v1266
  %v1283 = vadd.f32 %v1252, %v1266
  %v1284 = vadd.f32 %v1253, %v1266
  %v1285 = vadd.f32 %v1254, %v1266
  %v1286 = vadd.f32 %v1255, %v1266
  %v1287 = vadd.f32 %v1256, %v1266
  %v1288 = vadd.f32 %v1257, %v1266
  %v1289 = vadd.f32 %v1258, %v1266
  %v1290 = vadd.f32 %v1259, %v1266
  %v1291 = vadd.f32 %v1260, %v1266
  %v1292 = vadd.f32 %v1261, %v1266
  %v1293 = vmax.f32 %v1268, 0.0
  %v1294 = vmax.f32 %v1269, 0.0
  %v1295 = vmax.f32 %v1270, 0.0
  %v1296 = vmax.f32 %v1271, 0.0
  %v1297 = vmax.f32 %v1272, 0.0
  %v1298 = vmax.f32 %v1273, 0.0
  %v1299 = vmax.f32 %v1274, 0.0
  %v1300 = vmax.f32 %v1275, 0.0
  %v1301 = vmax.f32 %v1276, 0.0
  %v1302 = vmax.f32 %v1277, 0.0
  %v1303 = vmax.f32 %v1278, 0.0
  %v1304 = vmax.f32 %v1279, 0.0
  %v1305 = vmax.f32 %v1280, 0.0
  %v1306 = vmax.f32 %v1281, 0.0
  %v1307 = vmax.f32 %v1282, 0.0
  %v1308 = vmax.f32 %v1283, 0.0
  %v1309 = vmax.f32 %v1284, 0.0
  %v1310 = vmax.f32 %v1285, 0.0
  %v1311 = vmax.f32 %v1286, 0.0
  %v1312 = vmax.f32 %v1287, 0.0
  %v1313 = vmax.f32 %v1288, 0.0
  %v1314 = vmax.f32 %v1289, 0.0
  %v1315 = vmax.f32 %v1290, 0.0
  %v1316 = vmax.f32 %v1291, 0.0
  %v1317 = vmax.f32 %v1292, 0.0
  %vm1318 = vcmask 48128
  %1319 = vst.msk [vmem:[%s3] sm:$0xff] %vm1318, %v1293
  %1320 = vst.msk [vmem:[%s3 + $0x8] sm:$0xff] %vm1318, %v1294
  %1321 = vst.msk [vmem:[%s3 + $0x10] sm:$0xff] %vm1318, %v1295
  %1322 = vst.msk [vmem:[%s3 + $0x18] sm:$0xff] %vm1318, %v1296
  %1323 = vst.msk [vmem:[%s3 + $0x20] sm:$0xff] %vm1318, %v1297
  %1324 = vst.msk [vmem:[%s3 + $0x28] sm:$0xff] %vm1318, %v1298
  %1325 = vst.msk [vmem:[%s3 + $0x30] sm:$0xff] %vm1318, %v1299
  %1326 = vst.msk [vmem:[%s3 + $0x38] sm:$0xff] %vm1318, %v1300
  %1327 = vst.msk [vmem:[%s3 + $0x40] sm:$0xff] %vm1318, %v1301
  %1328 = vst.msk [vmem:[%s3 + $0x48] sm:$0xff] %vm1318, %v1302
  %1329 = vst.msk [vmem:[%s3 + $0x50] sm:$0xff] %vm1318, %v1303
  %1330 = vst.msk [vmem:[%s3 + $0x58] sm:$0xff] %vm1318, %v1304
  %1331 = vst.msk [vmem:[%s3 + $0x60] sm:$0xff] %vm1318, %v1305
  %1332 = vst.msk [vmem:[%s3 + $0x68] sm:$0xff] %vm1318, %v1306
  %1333 = vst.msk [vmem:[%s3 + $0x70] sm:$0xff] %vm1318, %v1307
  %1334 = vst.msk [vmem:[%s3 + $0x78] sm:$0xff] %vm1318, %v1308
  %1335 = vst.msk [vmem:[%s3 + $0x80] sm:$0xff] %vm1318, %v1309
  %1336 = vst.msk [vmem:[%s3 + $0x88] sm:$0xff] %vm1318, %v1310
  %1337 = vst.msk [vmem:[%s3 + $0x90] sm:$0xff] %vm1318, %v1311
  %1338 = vst.msk [vmem:[%s3 + $0x98] sm:$0xff] %vm1318, %v1312
  %1339 = vst.msk [vmem:[%s3 + $0xa0] sm:$0xff] %vm1318, %v1313
  %1340 = vst.msk [vmem:[%s3 + $0xa8] sm:$0xff] %vm1318, %v1314
  %1341 = vst.msk [vmem:[%s3 + $0xb0] sm:$0xff] %vm1318, %v1315
  %1342 = vst.msk [vmem:[%s3 + $0xb8] sm:$0xff] %vm1318, %v1316
  %vm1343 = vcmask 44032
  %1344 = vst.msk [vmem:[%s3 + $0xc0] sm:$0xf] %vm1343, %v1317
  %s1345 = scalar_lea.vmem %s0, 200
  %v1346 = vld [vmem:[%s1345] sm:$0xff]
  %v1347 = vld [vmem:[%s1345 + $0x8] sm:$0xff]
  %v1348 = vld [vmem:[%s1345 + $0x10] sm:$0xff]
  %v1349 = vld [vmem:[%s1345 + $0x18] sm:$0xff]
  %v1350 = vld [vmem:[%s1345 + $0x20] sm:$0xff]
  %v1351 = vld [vmem:[%s1345 + $0x28] sm:$0xff]
  %v1352 = vld [vmem:[%s1345 + $0x30] sm:$0xff]
  %v1353 = vld [vmem:[%s1345 + $0x38] sm:$0xff]
  %v1354 = vld [vmem:[%s1345 + $0x40] sm:$0xff]
  %v1355 = vld [vmem:[%s1345 + $0x48] sm:$0xff]
  %v1356 = vld [vmem:[%s1345 + $0x50] sm:$0xff]
  %v1357 = vld [vmem:[%s1345 + $0x58] sm:$0xff]
  %v1358 = vld [vmem:[%s1345 + $0x60] sm:$0xff]
  %v1359 = vld [vmem:[%s1345 + $0x68] sm:$0xff]
  %v1360 = vld [vmem:[%s1345 + $0x70] sm:$0xff]
  %v1361 = vld [vmem:[%s1345 + $0x78] sm:$0xff]
  %v1362 = vld [vmem:[%s1345 + $0x80] sm:$0xff]
  %v1363 = vld [vmem:[%s1345 + $0x88] sm:$0xff]
  %v1364 = vld [vmem:[%s1345 + $0x90] sm:$0xff]
  %v1365 = vld [vmem:[%s1345 + $0x98] sm:$0xff]
  %v1366 = vld [vmem:[%s1345 + $0xa0] sm:$0xff]
  %v1367 = vld [vmem:[%s1345 + $0xa8] sm:$0xff]
  %v1368 = vld [vmem:[%s1345 + $0xb0] sm:$0xff]
  %v1369 = vld [vmem:[%s1345 + $0xb8] sm:$0xff]
  %v1370 = vld [vmem:[%s1345 + $0xc0] sm:$0xf]
  %v1372 = vsel %vm44, %v1346, 0
  %v1375 = vsel %vm44, %v1347, 0
  %v1378 = vsel %vm44, %v1348, 0
  %v1381 = vsel %vm44, %v1349, 0
  %v1384 = vsel %vm44, %v1350, 0
  %v1387 = vsel %vm44, %v1351, 0
  %v1390 = vsel %vm44, %v1352, 0
  %v1393 = vsel %vm44, %v1353, 0
  %v1396 = vsel %vm44, %v1354, 0
  %v1399 = vsel %vm44, %v1355, 0
  %v1402 = vsel %vm44, %v1356, 0
  %v1405 = vsel %vm44, %v1357, 0
  %v1408 = vsel %vm44, %v1358, 0
  %v1411 = vsel %vm44, %v1359, 0
  %v1414 = vsel %vm44, %v1360, 0
  %v1417 = vsel %vm44, %v1361, 0
  %v1420 = vsel %vm44, %v1362, 0
  %v1423 = vsel %vm44, %v1363, 0
  %v1426 = vsel %vm44, %v1364, 0
  %v1429 = vsel %vm44, %v1365, 0
  %v1432 = vsel %vm44, %v1366, 0
  %v1435 = vsel %vm44, %v1367, 0
  %v1438 = vsel %vm44, %v1368, 0
  %v1441 = vsel %vm44, %v1369, 0
  %v1444 = vsel %vm44, %v1370, 0
  %1446 = vmatprep.subr.mxu0 0.0
  %1447 = vmatpush1.msra.mxu0 %v14
  %1448 = vmatprep.subr.mxu0 0.0
  %1449 = vmatpush1.msra.mxu0 %v15
  %1450 = vmatprep.subr.mxu0 0.0
  %1451 = vmatpush1.msra.mxu0 %v16
  %1452 = vmatprep.subr.mxu0 0.0
  %1453 = vmatpush1.msra.mxu0 %v122
  %1454 = vmatprep.subr.mxu0 0.0
  %1455 = vmatpush1.msra.mxu0 0.0
  %1456 = vmatprep.subr.mxu0 0.0
  %1457 = vmatpush1.msra.mxu0 0.0
  %1458 = vmatprep.subr.mxu0 0.0
  %1459 = vmatpush1.msra.mxu0 0.0
  %1460 = vmatprep.subr.mxu0 0.0
  %1461 = vmatpush1.msra.mxu0 0.0
  %1462 = vmatprep.subr.mxu0 0.0
  %1463 = vmatpush1.msra.mxu0 0.0
  %1464 = vmatprep.subr.mxu0 0.0
  %1465 = vmatpush1.msra.mxu0 0.0
  %1466 = vmatprep.subr.mxu0 0.0
  %1467 = vmatpush1.msra.mxu0 0.0
  %1468 = vmatprep.subr.mxu0 0.0
  %1469 = vmatpush1.msra.mxu0 0.0
  %1470 = vmatprep.subr.mxu0 0.0
  %1471 = vmatpush1.msra.mxu0 0.0
  %1472 = vmatprep.subr.mxu0 0.0
  %1473 = vmatpush1.msra.mxu0 0.0
  %1474 = vmatprep.subr.mxu0 0.0
  %1475 = vmatpush1.msra.mxu0 0.0
  %1476 = vmatprep.subr.mxu0 0.0
  %1477 = vmatpush1.msra.mxu0 0.0
  %1478 = vmatprep.subr.mxu0 0.0
  %1479 = vmatpush1.msra.mxu0 0.0
  %1480 = vmatprep.subr.mxu0 0.0
  %1481 = vmatpush1.msra.mxu0 0.0
  %1482 = vmatprep.subr.mxu0 0.0
  %1483 = vmatpush1.msra.mxu0 0.0
  %1484 = vmatprep.subr.mxu0 0.0
  %1485 = vmatpush1.msra.mxu0 0.0
  %1486 = vmatprep.subr.mxu0 0.0
  %1487 = vmatpush1.msra.mxu0 0.0
  %1488 = vmatprep.subr.mxu0 0.0
  %1489 = vmatpush1.msra.mxu0 0.0
  %1490 = vmatprep.subr.mxu0 0.0
  %1491 = vmatpush1.msra.mxu0 0.0
  %1492 = vmatprep.subr.mxu0 0.0
  %1493 = vmatpush1.msra.mxu0 0.0
  %1494 = vmatprep.subr.mxu0 0.0
  %1495 = vmatpush1.msra.mxu0 0.0
  %1496 = vmatprep.subr.mxu0 0.0
  %1497 = vmatpush1.msra.mxu0 0.0
  %1498 = vmatprep.subr.mxu0 0.0
  %1499 = vmatpush1.msra.mxu0 0.0
  %1500 = vmatprep.subr.mxu0 0.0
  %1501 = vmatpush1.msra.mxu0 0.0
  %1502 = vmatprep.subr.mxu0 0.0
  %1503 = vmatpush1.msra.mxu0 0.0
  %1504 = vmatprep.subr.mxu0 0.0
  %1505 = vmatpush1.msra.mxu0 0.0
  %1506 = vmatprep.subr.mxu0 0.0
  %1507 = vmatpush1.msra.mxu0 0.0
  %1508 = vmatprep.subr.mxu0 0.0
  %1509 = vmatpush1.msra.mxu0 0.0
  %1510 = vmatprep.mubr.f32.mxu0 0.0
  %1511 = vmatmul.mubr.f32.gmra.mrb[0].mxu0 %v1372
  %v1512 = vpop.f32.mrb[0].mxu0
  %v1513 = vadd.f32 0.0, %v1512
  %v1514 = vpop.f32.mrb[0].mxu0
  %1515 = vmatprep.mubr.f32.mxu0 0.0
  %1516 = vmatmul.mubr.f32.gmra.mrb[0].mxu0 %v1375
  %v1517 = vpop.f32.mrb[0].mxu0
  %v1518 = vadd.f32 0.0, %v1517
  %v1519 = vpop.f32.mrb[0].mxu0
  %1520 = vmatprep.mubr.f32.mxu0 0.0
  %1521 = vmatmul.mubr.f32.gmra.mrb[0].mxu0 %v1378
  %v1522 = vpop.f32.mrb[0].mxu0
  %v1523 = vadd.f32 0.0, %v1522
  %v1524 = vpop.f32.mrb[0].mxu0
  %1525 = vmatprep.mubr.f32.mxu0 0.0
  %1526 = vmatmul.mubr.f32.gmra.mrb[0].mxu0 %v1381
  %v1527 = vpop.f32.mrb[0].mxu0
  %v1528 = vadd.f32 0.0, %v1527
  %v1529 = vpop.f32.mrb[0].mxu0
  %1530 = vmatprep.mubr.f32.mxu0 0.0
  %1531 = vmatmul.mubr.f32.gmra.mrb[0].mxu0 %v1384
  %v1532 = vpop.f32.mrb[0].mxu0
  %v1533 = vadd.f32 0.0, %v1532
  %v1534 = vpop.f32.mrb[0].mxu0
  %1535 = vmatprep.mubr.f32.mxu0 0.0
  %1536 = vmatmul.mubr.f32.gmra.mrb[0].mxu0 %v1387
  %v1537 = vpop.f32.mrb[0].mxu0
  %v1538 = vadd.f32 0.0, %v1537
  %v1539 = vpop.f32.mrb[0].mxu0
  %1540 = vmatprep.mubr.f32.mxu0 0.0
  %1541 = vmatmul.mubr.f32.gmra.mrb[0].mxu0 %v1390
  %v1542 = vpop.f32.mrb[0].mxu0
  %v1543 = vadd.f32 0.0, %v1542
  %v1544 = vpop.f32.mrb[0].mxu0
  %1545 = vmatprep.mubr.f32.mxu0 0.0
  %1546 = vmatmul.mubr.f32.gmra.mrb[0].mxu0 %v1393
  %v1547 = vpop.f32.mrb[0].mxu0
  %v1548 = vadd.f32 0.0, %v1547
  %v1549 = vpop.f32.mrb[0].mxu0
  %1550 = vmatprep.mubr.f32.mxu0 0.0
  %1551 = vmatmul.mubr.f32.gmra.mrb[0].mxu0 %v1396
  %v1552 = vpop.f32.mrb[0].mxu0
  %v1553 = vadd.f32 0.0, %v1552
  %v1554 = vpop.f32.mrb[0].mxu0
  %1555 = vmatprep.mubr.f32.mxu0 0.0
  %1556 = vmatmul.mubr.f32.gmra.mrb[0].mxu0 %v1399
  %v1557 = vpop.f32.mrb[0].mxu0
  %v1558 = vadd.f32 0.0, %v1557
  %v1559 = vpop.f32.mrb[0].mxu0
  %1560 = vmatprep.mubr.f32.mxu0 0.0
  %1561 = vmatmul.mubr.f32.gmra.mrb[0].mxu0 %v1402
  %v1562 = vpop.f32.mrb[0].mxu0
  %v1563 = vadd.f32 0.0, %v1562
  %v1564 = vpop.f32.mrb[0].mxu0
  %1565 = vmatprep.mubr.f32.mxu0 0.0
  %1566 = vmatmul.mubr.f32.gmra.mrb[0].mxu0 %v1405
  %v1567 = vpop.f32.mrb[0].mxu0
  %v1568 = vadd.f32 0.0, %v1567
  %v1569 = vpop.f32.mrb[0].mxu0
  %1570 = vmatprep.mubr.f32.mxu0 0.0
  %1571 = vmatmul.mubr.f32.gmra.mrb[0].mxu0 %v1408
  %v1572 = vpop.f32.mrb[0].mxu0
  %v1573 = vadd.f32 0.0, %v1572
  %v1574 = vpop.f32.mrb[0].mxu0
  %1575 = vmatprep.mubr.f32.mxu0 0.0
  %1576 = vmatmul.mubr.f32.gmra.mrb[0].mxu0 %v1411
  %v1577 = vpop.f32.mrb[0].mxu0
  %v1578 = vadd.f32 0.0, %v1577
  %v1579 = vpop.f32.mrb[0].mxu0
  %1580 = vmatprep.mubr.f32.mxu0 0.0
  %1581 = vmatmul.mubr.f32.gmra.mrb[0].mxu0 %v1414
  %v1582 = vpop.f32.mrb[0].mxu0
  %v1583 = vadd.f32 0.0, %v1582
  %v1584 = vpop.f32.mrb[0].mxu0
  %1585 = vmatprep.mubr.f32.mxu0 0.0
  %1586 = vmatmul.mubr.f32.gmra.mrb[0].mxu0 %v1417
  %v1587 = vpop.f32.mrb[0].mxu0
  %v1588 = vadd.f32 0.0, %v1587
  %v1589 = vpop.f32.mrb[0].mxu0
  %1590 = vmatprep.mubr.f32.mxu0 0.0
  %1591 = vmatmul.mubr.f32.gmra.mrb[0].mxu0 %v1420
  %v1592 = vpop.f32.mrb[0].mxu0
  %v1593 = vadd.f32 0.0, %v1592
  %v1594 = vpop.f32.mrb[0].mxu0
  %1595 = vmatprep.mubr.f32.mxu0 0.0
  %1596 = vmatmul.mubr.f32.gmra.mrb[0].mxu0 %v1423
  %v1597 = vpop.f32.mrb[0].mxu0
  %v1598 = vadd.f32 0.0, %v1597
  %v1599 = vpop.f32.mrb[0].mxu0
  %1600 = vmatprep.mubr.f32.mxu0 0.0
  %1601 = vmatmul.mubr.f32.gmra.mrb[0].mxu0 %v1426
  %v1602 = vpop.f32.mrb[0].mxu0
  %v1603 = vadd.f32 0.0, %v1602
  %v1604 = vpop.f32.mrb[0].mxu0
  %1605 = vmatprep.mubr.f32.mxu0 0.0
  %1606 = vmatmul.mubr.f32.gmra.mrb[0].mxu0 %v1429
  %v1607 = vpop.f32.mrb[0].mxu0
  %v1608 = vadd.f32 0.0, %v1607
  %v1609 = vpop.f32.mrb[0].mxu0
  %1610 = vmatprep.mubr.f32.mxu0 0.0
  %1611 = vmatmul.mubr.f32.gmra.mrb[0].mxu0 %v1432
  %v1612 = vpop.f32.mrb[0].mxu0
  %v1613 = vadd.f32 0.0, %v1612
  %v1614 = vpop.f32.mrb[0].mxu0
  %1615 = vmatprep.mubr.f32.mxu0 0.0
  %1616 = vmatmul.mubr.f32.gmra.mrb[0].mxu0 %v1435
  %v1617 = vpop.f32.mrb[0].mxu0
  %v1618 = vadd.f32 0.0, %v1617
  %v1619 = vpop.f32.mrb[0].mxu0
  %1620 = vmatprep.mubr.f32.mxu0 0.0
  %1621 = vmatmul.mubr.f32.gmra.mrb[0].mxu0 %v1438
  %v1622 = vpop.f32.mrb[0].mxu0
  %v1623 = vadd.f32 0.0, %v1622
  %v1624 = vpop.f32.mrb[0].mxu0
  %1625 = vmatprep.mubr.f32.mxu0 0.0
  %1626 = vmatmul.mubr.f32.gmra.mrb[0].mxu0 %v1441
  %v1627 = vpop.f32.mrb[0].mxu0
  %v1628 = vadd.f32 0.0, %v1627
  %v1629 = vpop.f32.mrb[0].mxu0
  %1630 = vmatprep.mubr.f32.mxu0 0.0
  %1631 = vmatmul.mubr.f32.gmra.mrb[0].mxu0 %v1444
  %v1632 = vpop.f32.mrb[0].mxu0
  %v1633 = vadd.f32 0.0, %v1632
  %v1634 = vpop.f32.mrb[0].mxu0
  %1635 = vdwg.mxu0
  %s1636 = scalar_lea.vmem %s0, 600
  %v1637 = vld [vmem:[%s1636] sm:$0xff]
  %v1638 = vld [vmem:[%s1636 + $0x8] sm:$0xff]
  %v1639 = vld [vmem:[%s1636 + $0x10] sm:$0xff]
  %v1640 = vld [vmem:[%s1636 + $0x18] sm:$0xff]
  %v1641 = vld [vmem:[%s1636 + $0x20] sm:$0xff]
  %v1642 = vld [vmem:[%s1636 + $0x28] sm:$0xff]
  %v1643 = vld [vmem:[%s1636 + $0x30] sm:$0xff]
  %v1644 = vld [vmem:[%s1636 + $0x38] sm:$0xff]
  %v1645 = vld [vmem:[%s1636 + $0x40] sm:$0xff]
  %v1646 = vld [vmem:[%s1636 + $0x48] sm:$0xff]
  %v1647 = vld [vmem:[%s1636 + $0x50] sm:$0xff]
  %v1648 = vld [vmem:[%s1636 + $0x58] sm:$0xff]
  %v1649 = vld [vmem:[%s1636 + $0x60] sm:$0xff]
  %v1650 = vld [vmem:[%s1636 + $0x68] sm:$0xff]
  %v1651 = vld [vmem:[%s1636 + $0x70] sm:$0xff]
  %v1652 = vld [vmem:[%s1636 + $0x78] sm:$0xff]
  %v1653 = vld [vmem:[%s1636 + $0x80] sm:$0xff]
  %v1654 = vld [vmem:[%s1636 + $0x88] sm:$0xff]
  %v1655 = vld [vmem:[%s1636 + $0x90] sm:$0xff]
  %v1656 = vld [vmem:[%s1636 + $0x98] sm:$0xff]
  %v1657 = vld [vmem:[%s1636 + $0xa0] sm:$0xff]
  %v1658 = vld [vmem:[%s1636 + $0xa8] sm:$0xff]
  %v1659 = vld [vmem:[%s1636 + $0xb0] sm:$0xff]
  %v1660 = vld [vmem:[%s1636 + $0xb8] sm:$0xff]
  %v1661 = vld [vmem:[%s1636 + $0xc0] sm:$0xf]
  %v1663 = vsel %vm44, %v1637, 0
  %v1666 = vsel %vm44, %v1638, 0
  %v1669 = vsel %vm44, %v1639, 0
  %v1672 = vsel %vm44, %v1640, 0
  %v1675 = vsel %vm44, %v1641, 0
  %v1678 = vsel %vm44, %v1642, 0
  %v1681 = vsel %vm44, %v1643, 0
  %v1684 = vsel %vm44, %v1644, 0
  %v1687 = vsel %vm44, %v1645, 0
  %v1690 = vsel %vm44, %v1646, 0
  %v1693 = vsel %vm44, %v1647, 0
  %v1696 = vsel %vm44, %v1648, 0
  %v1699 = vsel %vm44, %v1649, 0
  %v1702 = vsel %vm44, %v1650, 0
  %v1705 = vsel %vm44, %v1651, 0
  %v1708 = vsel %vm44, %v1652, 0
  %v1711 = vsel %vm44, %v1653, 0
  %v1714 = vsel %vm44, %v1654, 0
  %v1717 = vsel %vm44, %v1655, 0
  %v1720 = vsel %vm44, %v1656, 0
  %v1723 = vsel %vm44, %v1657, 0
  %v1726 = vsel %vm44, %v1658, 0
  %v1729 = vsel %vm44, %v1659, 0
  %v1732 = vsel %vm44, %v1660, 0
  %v1735 = vsel %vm44, %v1661, 0
  %1737 = vmatprep.subr.mxu0 0.0
  %1738 = vmatpush1.msra.mxu0 %v14
  %1739 = vmatprep.subr.mxu0 0.0
  %1740 = vmatpush1.msra.mxu0 %v15
  %1741 = vmatprep.subr.mxu0 0.0
  %1742 = vmatpush1.msra.mxu0 %v16
  %1743 = vmatprep.subr.mxu0 0.0
  %1744 = vmatpush1.msra.mxu0 %v122
  %1745 = vmatprep.subr.mxu0 0.0
  %1746 = vmatpush1.msra.mxu0 0.0
  %1747 = vmatprep.subr.mxu0 0.0
  %1748 = vmatpush1.msra.mxu0 0.0
  %1749 = vmatprep.subr.mxu0 0.0
  %1750 = vmatpush1.msra.mxu0 0.0
  %1751 = vmatprep.subr.mxu0 0.0
  %1752 = vmatpush1.msra.mxu0 0.0
  %1753 = vmatprep.subr.mxu0 0.0
  %1754 = vmatpush1.msra.mxu0 0.0
  %1755 = vmatprep.subr.mxu0 0.0
  %1756 = vmatpush1.msra.mxu0 0.0
  %1757 = vmatprep.subr.mxu0 0.0
  %1758 = vmatpush1.msra.mxu0 0.0
  %1759 = vmatprep.subr.mxu0 0.0
  %1760 = vmatpush1.msra.mxu0 0.0
  %1761 = vmatprep.subr.mxu0 0.0
  %1762 = vmatpush1.msra.mxu0 0.0
  %1763 = vmatprep.subr.mxu0 0.0
  %1764 = vmatpush1.msra.mxu0 0.0
  %1765 = vmatprep.subr.mxu0 0.0
  %1766 = vmatpush1.msra.mxu0 0.0
  %1767 = vmatprep.subr.mxu0 0.0
  %1768 = vmatpush1.msra.mxu0 0.0
  %1769 = vmatprep.subr.mxu0 0.0
  %1770 = vmatpush1.msra.mxu0 0.0
  %1771 = vmatprep.subr.mxu0 0.0
  %1772 = vmatpush1.msra.mxu0 0.0
  %1773 = vmatprep.subr.mxu0 0.0
  %1774 = vmatpush1.msra.mxu0 0.0
  %1775 = vmatprep.subr.mxu0 0.0
  %1776 = vmatpush1.msra.mxu0 0.0
  %1777 = vmatprep.subr.mxu0 0.0
  %1778 = vmatpush1.msra.mxu0 0.0
  %1779 = vmatprep.subr.mxu0 0.0
  %1780 = vmatpush1.msra.mxu0 0.0
  %1781 = vmatprep.subr.mxu0 0.0
  %1782 = vmatpush1.msra.mxu0 0.0
  %1783 = vmatprep.subr.mxu0 0.0
  %1784 = vmatpush1.msra.mxu0 0.0
  %1785 = vmatprep.subr.mxu0 0.0
  %1786 = vmatpush1.msra.mxu0 0.0
  %1787 = vmatprep.subr.mxu0 0.0
  %1788 = vmatpush1.msra.mxu0 0.0
  %1789 = vmatprep.subr.mxu0 0.0
  %1790 = vmatpush1.msra.mxu0 0.0
  %1791 = vmatprep.subr.mxu0 0.0
  %1792 = vmatpush1.msra.mxu0 0.0
  %1793 = vmatprep.subr.mxu0 0.0
  %1794 = vmatpush1.msra.mxu0 0.0
  %1795 = vmatprep.subr.mxu0 0.0
  %1796 = vmatpush1.msra.mxu0 0.0
  %1797 = vmatprep.subr.mxu0 0.0
  %1798 = vmatpush1.msra.mxu0 0.0
  %1799 = vmatprep.subr.mxu0 0.0
  %1800 = vmatpush1.msra.mxu0 0.0
  %1801 = vmatprep.mubr.f32.mxu0 0.0
  %1802 = vmatmul.mubr.f32.gmra.mrb[0].mxu0 %v1663
  %v1803 = vpop.f32.mrb[0].mxu0
  %v1804 = vadd.f32 0.0, %v1803
  %v1805 = vpop.f32.mrb[0].mxu0
  %1806 = vmatprep.mubr.f32.mxu0 0.0
  %1807 = vmatmul.mubr.f32.gmra.mrb[0].mxu0 %v1666
  %v1808 = vpop.f32.mrb[0].mxu0
  %v1809 = vadd.f32 0.0, %v1808
  %v1810 = vpop.f32.mrb[0].mxu0
  %1811 = vmatprep.mubr.f32.mxu0 0.0
  %1812 = vmatmul.mubr.f32.gmra.mrb[0].mxu0 %v1669
  %v1813 = vpop.f32.mrb[0].mxu0
  %v1814 = vadd.f32 0.0, %v1813
  %v1815 = vpop.f32.mrb[0].mxu0
  %1816 = vmatprep.mubr.f32.mxu0 0.0
  %1817 = vmatmul.mubr.f32.gmra.mrb[0].mxu0 %v1672
  %v1818 = vpop.f32.mrb[0].mxu0
  %v1819 = vadd.f32 0.0, %v1818
  %v1820 = vpop.f32.mrb[0].mxu0
  %1821 = vmatprep.mubr.f32.mxu0 0.0
  %1822 = vmatmul.mubr.f32.gmra.mrb[0].mxu0 %v1675
  %v1823 = vpop.f32.mrb[0].mxu0
  %v1824 = vadd.f32 0.0, %v1823
  %v1825 = vpop.f32.mrb[0].mxu0
  %1826 = vmatprep.mubr.f32.mxu0 0.0
  %1827 = vmatmul.mubr.f32.gmra.mrb[0].mxu0 %v1678
  %v1828 = vpop.f32.mrb[0].mxu0
  %v1829 = vadd.f32 0.0, %v1828
  %v1830 = vpop.f32.mrb[0].mxu0
  %1831 = vmatprep.mubr.f32.mxu0 0.0
  %1832 = vmatmul.mubr.f32.gmra.mrb[0].mxu0 %v1681
  %v1833 = vpop.f32.mrb[0].mxu0
  %v1834 = vadd.f32 0.0, %v1833
  %v1835 = vpop.f32.mrb[0].mxu0
  %1836 = vmatprep.mubr.f32.mxu0 0.0
  %1837 = vmatmul.mubr.f32.gmra.mrb[0].mxu0 %v1684
  %v1838 = vpop.f32.mrb[0].mxu0
  %v1839 = vadd.f32 0.0, %v1838
  %v1840 = vpop.f32.mrb[0].mxu0
  %1841 = vmatprep.mubr.f32.mxu0 0.0
  %1842 = vmatmul.mubr.f32.gmra.mrb[0].mxu0 %v1687
  %v1843 = vpop.f32.mrb[0].mxu0
  %v1844 = vadd.f32 0.0, %v1843
  %v1845 = vpop.f32.mrb[0].mxu0
  %1846 = vmatprep.mubr.f32.mxu0 0.0
  %1847 = vmatmul.mubr.f32.gmra.mrb[0].mxu0 %v1690
  %v1848 = vpop.f32.mrb[0].mxu0
  %v1849 = vadd.f32 0.0, %v1848
  %v1850 = vpop.f32.mrb[0].mxu0
  %1851 = vmatprep.mubr.f32.mxu0 0.0
  %1852 = vmatmul.mubr.f32.gmra.mrb[0].mxu0 %v1693
  %v1853 = vpop.f32.mrb[0].mxu0
  %v1854 = vadd.f32 0.0, %v1853
  %v1855 = vpop.f32.mrb[0].mxu0
  %1856 = vmatprep.mubr.f32.mxu0 0.0
  %1857 = vmatmul.mubr.f32.gmra.mrb[0].mxu0 %v1696
  %v1858 = vpop.f32.mrb[0].mxu0
  %v1859 = vadd.f32 0.0, %v1858
  %v1860 = vpop.f32.mrb[0].mxu0
  %1861 = vmatprep.mubr.f32.mxu0 0.0
  %1862 = vmatmul.mubr.f32.gmra.mrb[0].mxu0 %v1699
  %v1863 = vpop.f32.mrb[0].mxu0
  %v1864 = vadd.f32 0.0, %v1863
  %v1865 = vpop.f32.mrb[0].mxu0
  %1866 = vmatprep.mubr.f32.mxu0 0.0
  %1867 = vmatmul.mubr.f32.gmra.mrb[0].mxu0 %v1702
  %v1868 = vpop.f32.mrb[0].mxu0
  %v1869 = vadd.f32 0.0, %v1868
  %v1870 = vpop.f32.mrb[0].mxu0
  %1871 = vmatprep.mubr.f32.mxu0 0.0
  %1872 = vmatmul.mubr.f32.gmra.mrb[0].mxu0 %v1705
  %v1873 = vpop.f32.mrb[0].mxu0
  %v1874 = vadd.f32 0.0, %v1873
  %v1875 = vpop.f32.mrb[0].mxu0
  %1876 = vmatprep.mubr.f32.mxu0 0.0
  %1877 = vmatmul.mubr.f32.gmra.mrb[0].mxu0 %v1708
  %v1878 = vpop.f32.mrb[0].mxu0
  %v1879 = vadd.f32 0.0, %v1878
  %v1880 = vpop.f32.mrb[0].mxu0
  %1881 = vmatprep.mubr.f32.mxu0 0.0
  %1882 = vmatmul.mubr.f32.gmra.mrb[0].mxu0 %v1711
  %v1883 = vpop.f32.mrb[0].mxu0
  %v1884 = vadd.f32 0.0, %v1883
  %v1885 = vpop.f32.mrb[0].mxu0
  %1886 = vmatprep.mubr.f32.mxu0 0.0
  %1887 = vmatmul.mubr.f32.gmra.mrb[0].mxu0 %v1714
  %v1888 = vpop.f32.mrb[0].mxu0
  %v1889 = vadd.f32 0.0, %v1888
  %v1890 = vpop.f32.mrb[0].mxu0
  %1891 = vmatprep.mubr.f32.mxu0 0.0
  %1892 = vmatmul.mubr.f32.gmra.mrb[0].mxu0 %v1717
  %v1893 = vpop.f32.mrb[0].mxu0
  %v1894 = vadd.f32 0.0, %v1893
  %v1895 = vpop.f32.mrb[0].mxu0
  %1896 = vmatprep.mubr.f32.mxu0 0.0
  %1897 = vmatmul.mubr.f32.gmra.mrb[0].mxu0 %v1720
  %v1898 = vpop.f32.mrb[0].mxu0
  %v1899 = vadd.f32 0.0, %v1898
  %v1900 = vpop.f32.mrb[0].mxu0
  %1901 = vmatprep.mubr.f32.mxu0 0.0
  %1902 = vmatmul.mubr.f32.gmra.mrb[0].mxu0 %v1723
  %v1903 = vpop.f32.mrb[0].mxu0
  %v1904 = vadd.f32 0.0, %v1903
  %v1905 = vpop.f32.mrb[0].mxu0
  %1906 = vmatprep.mubr.f32.mxu0 0.0
  %1907 = vmatmul.mubr.f32.gmra.mrb[0].mxu0 %v1726
  %v1908 = vpop.f32.mrb[0].mxu0
  %v1909 = vadd.f32 0.0, %v1908
  %v1910 = vpop.f32.mrb[0].mxu0
  %1911 = vmatprep.mubr.f32.mxu0 0.0
  %1912 = vmatmul.mubr.f32.gmra.mrb[0].mxu0 %v1729
  %v1913 = vpop.f32.mrb[0].mxu0
  %v1914 = vadd.f32 0.0, %v1913
  %v1915 = vpop.f32.mrb[0].mxu0
  %1916 = vmatprep.mubr.f32.mxu0 0.0
  %1917 = vmatmul.mubr.f32.gmra.mrb[0].mxu0 %v1732
  %v1918 = vpop.f32.mrb[0].mxu0
  %v1919 = vadd.f32 0.0, %v1918
  %v1920 = vpop.f32.mrb[0].mxu0
  %1921 = vmatprep.mubr.f32.mxu0 0.0
  %1922 = vmatmul.mubr.f32.gmra.mrb[0].mxu0 %v1735
  %v1923 = vpop.f32.mrb[0].mxu0
  %v1924 = vadd.f32 0.0, %v1923
  %v1925 = vpop.f32.mrb[0].mxu0
  %1926 = vdwg.mxu0
  %v1927 = vmax.f32 %v1513, %v1804
  %v1928 = vmax.f32 %v1518, %v1809
  %v1929 = vmax.f32 %v1523, %v1814
  %v1930 = vmax.f32 %v1528, %v1819
  %v1931 = vmax.f32 %v1533, %v1824
  %v1932 = vmax.f32 %v1538, %v1829
  %v1933 = vmax.f32 %v1543, %v1834
  %v1934 = vmax.f32 %v1548, %v1839
  %v1935 = vmax.f32 %v1553, %v1844
  %v1936 = vmax.f32 %v1558, %v1849
  %v1937 = vmax.f32 %v1563, %v1854
  %v1938 = vmax.f32 %v1568, %v1859
  %v1939 = vmax.f32 %v1573, %v1864
  %v1940 = vmax.f32 %v1578, %v1869
  %v1941 = vmax.f32 %v1583, %v1874
  %v1942 = vmax.f32 %v1588, %v1879
  %v1943 = vmax.f32 %v1593, %v1884
  %v1944 = vmax.f32 %v1598, %v1889
  %v1945 = vmax.f32 %v1603, %v1894
  %v1946 = vmax.f32 %v1608, %v1899
  %v1947 = vmax.f32 %v1613, %v1904
  %v1948 = vmax.f32 %v1618, %v1909
  %v1949 = vmax.f32 %v1623, %v1914
  %v1950 = vmax.f32 %v1628, %v1919
  %v1951 = vmax.f32 %v1633, %v1924
  %s1952 = scalar_lea.vmem %s0, 1000
  %v1953 = vld [vmem:[%s1952] sm:$0xff]
  %v1954 = vld [vmem:[%s1952 + $0x8] sm:$0xff]
  %v1955 = vld [vmem:[%s1952 + $0x10] sm:$0xff]
  %v1956 = vld [vmem:[%s1952 + $0x18] sm:$0xff]
  %v1957 = vld [vmem:[%s1952 + $0x20] sm:$0xff]
  %v1958 = vld [vmem:[%s1952 + $0x28] sm:$0xff]
  %v1959 = vld [vmem:[%s1952 + $0x30] sm:$0xff]
  %v1960 = vld [vmem:[%s1952 + $0x38] sm:$0xff]
  %v1961 = vld [vmem:[%s1952 + $0x40] sm:$0xff]
  %v1962 = vld [vmem:[%s1952 + $0x48] sm:$0xff]
  %v1963 = vld [vmem:[%s1952 + $0x50] sm:$0xff]
  %v1964 = vld [vmem:[%s1952 + $0x58] sm:$0xff]
  %v1965 = vld [vmem:[%s1952 + $0x60] sm:$0xff]
  %v1966 = vld [vmem:[%s1952 + $0x68] sm:$0xff]
  %v1967 = vld [vmem:[%s1952 + $0x70] sm:$0xff]
  %v1968 = vld [vmem:[%s1952 + $0x78] sm:$0xff]
  %v1969 = vld [vmem:[%s1952 + $0x80] sm:$0xff]
  %v1970 = vld [vmem:[%s1952 + $0x88] sm:$0xff]
  %v1971 = vld [vmem:[%s1952 + $0x90] sm:$0xff]
  %v1972 = vld [vmem:[%s1952 + $0x98] sm:$0xff]
  %v1973 = vld [vmem:[%s1952 + $0xa0] sm:$0xff]
  %v1974 = vld [vmem:[%s1952 + $0xa8] sm:$0xff]
  %v1975 = vld [vmem:[%s1952 + $0xb0] sm:$0xff]
  %v1976 = vld [vmem:[%s1952 + $0xb8] sm:$0xff]
  %v1977 = vld [vmem:[%s1952 + $0xc0] sm:$0xf]
  %v1979 = vsel %vm44, %v1953, 0
  %v1982 = vsel %vm44, %v1954, 0
  %v1985 = vsel %vm44, %v1955, 0
  %v1988 = vsel %vm44, %v1956, 0
  %v1991 = vsel %vm44, %v1957, 0
  %v1994 = vsel %vm44, %v1958, 0
  %v1997 = vsel %vm44, %v1959, 0
  %v2000 = vsel %vm44, %v1960, 0
  %v2003 = vsel %vm44, %v1961, 0
  %v2006 = vsel %vm44, %v1962, 0
  %v2009 = vsel %vm44, %v1963, 0
  %v2012 = vsel %vm44, %v1964, 0
  %v2015 = vsel %vm44, %v1965, 0
  %v2018 = vsel %vm44, %v1966, 0
  %v2021 = vsel %vm44, %v1967, 0
  %v2024 = vsel %vm44, %v1968, 0
  %v2027 = vsel %vm44, %v1969, 0
  %v2030 = vsel %vm44, %v1970, 0
  %v2033 = vsel %vm44, %v1971, 0
  %v2036 = vsel %vm44, %v1972, 0
  %v2039 = vsel %vm44, %v1973, 0
  %v2042 = vsel %vm44, %v1974, 0
  %v2045 = vsel %vm44, %v1975, 0
  %v2048 = vsel %vm44, %v1976, 0
  %v2051 = vsel %vm44, %v1977, 0
  %2053 = vmatprep.subr.mxu0 0.0
  %2054 = vmatpush1.msra.mxu0 %v14
  %2055 = vmatprep.subr.mxu0 0.0
  %2056 = vmatpush1.msra.mxu0 %v15
  %2057 = vmatprep.subr.mxu0 0.0
  %2058 = vmatpush1.msra.mxu0 %v16
  %2059 = vmatprep.subr.mxu0 0.0
  %2060 = vmatpush1.msra.mxu0 %v122
  %2061 = vmatprep.subr.mxu0 0.0
  %2062 = vmatpush1.msra.mxu0 0.0
  %2063 = vmatprep.subr.mxu0 0.0
  %2064 = vmatpush1.msra.mxu0 0.0
  %2065 = vmatprep.subr.mxu0 0.0
  %2066 = vmatpush1.msra.mxu0 0.0
  %2067 = vmatprep.subr.mxu0 0.0
  %2068 = vmatpush1.msra.mxu0 0.0
  %2069 = vmatprep.subr.mxu0 0.0
  %2070 = vmatpush1.msra.mxu0 0.0
  %2071 = vmatprep.subr.mxu0 0.0
  %2072 = vmatpush1.msra.mxu0 0.0
  %2073 = vmatprep.subr.mxu0 0.0
  %2074 = vmatpush1.msra.mxu0 0.0
  %2075 = vmatprep.subr.mxu0 0.0
  %2076 = vmatpush1.msra.mxu0 0.0
  %2077 = vmatprep.subr.mxu0 0.0
  %2078 = vmatpush1.msra.mxu0 0.0
  %2079 = vmatprep.subr.mxu0 0.0
  %2080 = vmatpush1.msra.mxu0 0.0
  %2081 = vmatprep.subr.mxu0 0.0
  %2082 = vmatpush1.msra.mxu0 0.0
  %2083 = vmatprep.subr.mxu0 0.0
  %2084 = vmatpush1.msra.mxu0 0.0
  %2085 = vmatprep.subr.mxu0 0.0
  %2086 = vmatpush1.msra.mxu0 0.0
  %2087 = vmatprep.subr.mxu0 0.0
  %2088 = vmatpush1.msra.mxu0 0.0
  %2089 = vmatprep.subr.mxu0 0.0
  %2090 = vmatpush1.msra.mxu0 0.0
  %2091 = vmatprep.subr.mxu0 0.0
  %2092 = vmatpush1.msra.mxu0 0.0
  %2093 = vmatprep.subr.mxu0 0.0
  %2094 = vmatpush1.msra.mxu0 0.0
  %2095 = vmatprep.subr.mxu0 0.0
  %2096 = vmatpush1.msra.mxu0 0.0
  %2097 = vmatprep.subr.mxu0 0.0
  %2098 = vmatpush1.msra.mxu0 0.0
  %2099 = vmatprep.subr.mxu0 0.0
  %2100 = vmatpush1.msra.mxu0 0.0
  %2101 = vmatprep.subr.mxu0 0.0
  %2102 = vmatpush1.msra.mxu0 0.0
  %2103 = vmatprep.subr.mxu0 0.0
  %2104 = vmatpush1.msra.mxu0 0.0
  %2105 = vmatprep.subr.mxu0 0.0
  %2106 = vmatpush1.msra.mxu0 0.0
  %2107 = vmatprep.subr.mxu0 0.0
  %2108 = vmatpush1.msra.mxu0 0.0
  %2109 = vmatprep.subr.mxu0 0.0
  %2110 = vmatpush1.msra.mxu0 0.0
  %2111 = vmatprep.subr.mxu0 0.0
  %2112 = vmatpush1.msra.mxu0 0.0
  %2113 = vmatprep.subr.mxu0 0.0
  %2114 = vmatpush1.msra.mxu0 0.0
  %2115 = vmatprep.subr.mxu0 0.0
  %2116 = vmatpush1.msra.mxu0 0.0
  %2117 = vmatprep.mubr.f32.mxu0 0.0
  %2118 = vmatmul.mubr.f32.gmra.mrb[0].mxu0 %v1979
  %v2119 = vpop.f32.mrb[0].mxu0
  %v2120 = vadd.f32 0.0, %v2119
  %v2121 = vpop.f32.mrb[0].mxu0
  %2122 = vmatprep.mubr.f32.mxu0 0.0
  %2123 = vmatmul.mubr.f32.gmra.mrb[0].mxu0 %v1982
  %v2124 = vpop.f32.mrb[0].mxu0
  %v2125 = vadd.f32 0.0, %v2124
  %v2126 = vpop.f32.mrb[0].mxu0
  %2127 = vmatprep.mubr.f32.mxu0 0.0
  %2128 = vmatmul.mubr.f32.gmra.mrb[0].mxu0 %v1985
  %v2129 = vpop.f32.mrb[0].mxu0
  %v2130 = vadd.f32 0.0, %v2129
  %v2131 = vpop.f32.mrb[0].mxu0
  %2132 = vmatprep.mubr.f32.mxu0 0.0
  %2133 = vmatmul.mubr.f32.gmra.mrb[0].mxu0 %v1988
  %v2134 = vpop.f32.mrb[0].mxu0
  %v2135 = vadd.f32 0.0, %v2134
  %v2136 = vpop.f32.mrb[0].mxu0
  %2137 = vmatprep.mubr.f32.mxu0 0.0
  %2138 = vmatmul.mubr.f32.gmra.mrb[0].mxu0 %v1991
  %v2139 = vpop.f32.mrb[0].mxu0
  %v2140 = vadd.f32 0.0, %v2139
  %v2141 = vpop.f32.mrb[0].mxu0
  %2142 = vmatprep.mubr.f32.mxu0 0.0
  %2143 = vmatmul.mubr.f32.gmra.mrb[0].mxu0 %v1994
  %v2144 = vpop.f32.mrb[0].mxu0
  %v2145 = vadd.f32 0.0, %v2144
  %v2146 = vpop.f32.mrb[0].mxu0
  %2147 = vmatprep.mubr.f32.mxu0 0.0
  %2148 = vmatmul.mubr.f32.gmra.mrb[0].mxu0 %v1997
  %v2149 = vpop.f32.mrb[0].mxu0
  %v2150 = vadd.f32 0.0, %v2149
  %v2151 = vpop.f32.mrb[0].mxu0
  %2152 = vmatprep.mubr.f32.mxu0 0.0
  %2153 = vmatmul.mubr.f32.gmra.mrb[0].mxu0 %v2000
  %v2154 = vpop.f32.mrb[0].mxu0
  %v2155 = vadd.f32 0.0, %v2154
  %v2156 = vpop.f32.mrb[0].mxu0
  %2157 = vmatprep.mubr.f32.mxu0 0.0
  %2158 = vmatmul.mubr.f32.gmra.mrb[0].mxu0 %v2003
  %v2159 = vpop.f32.mrb[0].mxu0
  %v2160 = vadd.f32 0.0, %v2159
  %v2161 = vpop.f32.mrb[0].mxu0
  %2162 = vmatprep.mubr.f32.mxu0 0.0
  %2163 = vmatmul.mubr.f32.gmra.mrb[0].mxu0 %v2006
  %v2164 = vpop.f32.mrb[0].mxu0
  %v2165 = vadd.f32 0.0, %v2164
  %v2166 = vpop.f32.mrb[0].mxu0
  %2167 = vmatprep.mubr.f32.mxu0 0.0
  %2168 = vmatmul.mubr.f32.gmra.mrb[0].mxu0 %v2009
  %v2169 = vpop.f32.mrb[0].mxu0
  %v2170 = vadd.f32 0.0, %v2169
  %v2171 = vpop.f32.mrb[0].mxu0
  %2172 = vmatprep.mubr.f32.mxu0 0.0
  %2173 = vmatmul.mubr.f32.gmra.mrb[0].mxu0 %v2012
  %v2174 = vpop.f32.mrb[0].mxu0
  %v2175 = vadd.f32 0.0, %v2174
  %v2176 = vpop.f32.mrb[0].mxu0
  %2177 = vmatprep.mubr.f32.mxu0 0.0
  %2178 = vmatmul.mubr.f32.gmra.mrb[0].mxu0 %v2015
  %v2179 = vpop.f32.mrb[0].mxu0
  %v2180 = vadd.f32 0.0, %v2179
  %v2181 = vpop.f32.mrb[0].mxu0
  %2182 = vmatprep.mubr.f32.mxu0 0.0
  %2183 = vmatmul.mubr.f32.gmra.mrb[0].mxu0 %v2018
  %v2184 = vpop.f32.mrb[0].mxu0
  %v2185 = vadd.f32 0.0, %v2184
  %v2186 = vpop.f32.mrb[0].mxu0
  %2187 = vmatprep.mubr.f32.mxu0 0.0
  %2188 = vmatmul.mubr.f32.gmra.mrb[0].mxu0 %v2021
  %v2189 = vpop.f32.mrb[0].mxu0
  %v2190 = vadd.f32 0.0, %v2189
  %v2191 = vpop.f32.mrb[0].mxu0
  %2192 = vmatprep.mubr.f32.mxu0 0.0
  %2193 = vmatmul.mubr.f32.gmra.mrb[0].mxu0 %v2024
  %v2194 = vpop.f32.mrb[0].mxu0
  %v2195 = vadd.f32 0.0, %v2194
  %v2196 = vpop.f32.mrb[0].mxu0
  %2197 = vmatprep.mubr.f32.mxu0 0.0
  %2198 = vmatmul.mubr.f32.gmra.mrb[0].mxu0 %v2027
  %v2199 = vpop.f32.mrb[0].mxu0
  %v2200 = vadd.f32 0.0, %v2199
  %v2201 = vpop.f32.mrb[0].mxu0
  %2202 = vmatprep.mubr.f32.mxu0 0.0
  %2203 = vmatmul.mubr.f32.gmra.mrb[0].mxu0 %v2030
  %v2204 = vpop.f32.mrb[0].mxu0
  %v2205 = vadd.f32 0.0, %v2204
  %v2206 = vpop.f32.mrb[0].mxu0
  %2207 = vmatprep.mubr.f32.mxu0 0.0
  %2208 = vmatmul.mubr.f32.gmra.mrb[0].mxu0 %v2033
  %v2209 = vpop.f32.mrb[0].mxu0
  %v2210 = vadd.f32 0.0, %v2209
  %v2211 = vpop.f32.mrb[0].mxu0
  %2212 = vmatprep.mubr.f32.mxu0 0.0
  %2213 = vmatmul.mubr.f32.gmra.mrb[0].mxu0 %v2036
  %v2214 = vpop.f32.mrb[0].mxu0
  %v2215 = vadd.f32 0.0, %v2214
  %v2216 = vpop.f32.mrb[0].mxu0
  %2217 = vmatprep.mubr.f32.mxu0 0.0
  %2218 = vmatmul.mubr.f32.gmra.mrb[0].mxu0 %v2039
  %v2219 = vpop.f32.mrb[0].mxu0
  %v2220 = vadd.f32 0.0, %v2219
  %v2221 = vpop.f32.mrb[0].mxu0
  %2222 = vmatprep.mubr.f32.mxu0 0.0
  %2223 = vmatmul.mubr.f32.gmra.mrb[0].mxu0 %v2042
  %v2224 = vpop.f32.mrb[0].mxu0
  %v2225 = vadd.f32 0.0, %v2224
  %v2226 = vpop.f32.mrb[0].mxu0
  %2227 = vmatprep.mubr.f32.mxu0 0.0
  %2228 = vmatmul.mubr.f32.gmra.mrb[0].mxu0 %v2045
  %v2229 = vpop.f32.mrb[0].mxu0
  %v2230 = vadd.f32 0.0, %v2229
  %v2231 = vpop.f32.mrb[0].mxu0
  %2232 = vmatprep.mubr.f32.mxu0 0.0
  %2233 = vmatmul.mubr.f32.gmra.mrb[0].mxu0 %v2048
  %v2234 = vpop.f32.mrb[0].mxu0
  %v2235 = vadd.f32 0.0, %v2234
  %v2236 = vpop.f32.mrb[0].mxu0
  %2237 = vmatprep.mubr.f32.mxu0 0.0
  %2238 = vmatmul.mubr.f32.gmra.mrb[0].mxu0 %v2051
  %v2239 = vpop.f32.mrb[0].mxu0
  %v2240 = vadd.f32 0.0, %v2239
  %v2241 = vpop.f32.mrb[0].mxu0
  %2242 = vdwg.mxu0
  %v2243 = vmax.f32 %v1927, %v2120
  %v2244 = vmax.f32 %v1928, %v2125
  %v2245 = vmax.f32 %v1929, %v2130
  %v2246 = vmax.f32 %v1930, %v2135
  %v2247 = vmax.f32 %v1931, %v2140
  %v2248 = vmax.f32 %v1932, %v2145
  %v2249 = vmax.f32 %v1933, %v2150
  %v2250 = vmax.f32 %v1934, %v2155
  %v2251 = vmax.f32 %v1935, %v2160
  %v2252 = vmax.f32 %v1936, %v2165
  %v2253 = vmax.f32 %v1937, %v2170
  %v2254 = vmax.f32 %v1938, %v2175
  %v2255 = vmax.f32 %v1939, %v2180
  %v2256 = vmax.f32 %v1940, %v2185
  %v2257 = vmax.f32 %v1941, %v2190
  %v2258 = vmax.f32 %v1942, %v2195
  %v2259 = vmax.f32 %v1943, %v2200
  %v2260 = vmax.f32 %v1944, %v2205
  %v2261 = vmax.f32 %v1945, %v2210
  %v2262 = vmax.f32 %v1946, %v2215
  %v2263 = vmax.f32 %v1947, %v2220
  %v2264 = vmax.f32 %v1948, %v2225
  %v2265 = vmax.f32 %v1949, %v2230
  %v2266 = vmax.f32 %v1950, %v2235
  %v2267 = vmax.f32 %v1951, %v2240
  %s2268 = scalar_lea.vmem %s0, 1400
  %v2269 = vld [vmem:[%s2268] sm:$0xff]
  %v2270 = vld [vmem:[%s2268 + $0x8] sm:$0xff]
  %v2271 = vld [vmem:[%s2268 + $0x10] sm:$0xff]
  %v2272 = vld [vmem:[%s2268 + $0x18] sm:$0xff]
  %v2273 = vld [vmem:[%s2268 + $0x20] sm:$0xff]
  %v2274 = vld [vmem:[%s2268 + $0x28] sm:$0xff]
  %v2275 = vld [vmem:[%s2268 + $0x30] sm:$0xff]
  %v2276 = vld [vmem:[%s2268 + $0x38] sm:$0xff]
  %v2277 = vld [vmem:[%s2268 + $0x40] sm:$0xff]
  %v2278 = vld [vmem:[%s2268 + $0x48] sm:$0xff]
  %v2279 = vld [vmem:[%s2268 + $0x50] sm:$0xff]
  %v2280 = vld [vmem:[%s2268 + $0x58] sm:$0xff]
  %v2281 = vld [vmem:[%s2268 + $0x60] sm:$0xff]
  %v2282 = vld [vmem:[%s2268 + $0x68] sm:$0xff]
  %v2283 = vld [vmem:[%s2268 + $0x70] sm:$0xff]
  %v2284 = vld [vmem:[%s2268 + $0x78] sm:$0xff]
  %v2285 = vld [vmem:[%s2268 + $0x80] sm:$0xff]
  %v2286 = vld [vmem:[%s2268 + $0x88] sm:$0xff]
  %v2287 = vld [vmem:[%s2268 + $0x90] sm:$0xff]
  %v2288 = vld [vmem:[%s2268 + $0x98] sm:$0xff]
  %v2289 = vld [vmem:[%s2268 + $0xa0] sm:$0xff]
  %v2290 = vld [vmem:[%s2268 + $0xa8] sm:$0xff]
  %v2291 = vld [vmem:[%s2268 + $0xb0] sm:$0xff]
  %v2292 = vld [vmem:[%s2268 + $0xb8] sm:$0xff]
  %v2293 = vld [vmem:[%s2268 + $0xc0] sm:$0xf]
  %v2295 = vsel %vm44, %v2269, 0
  %v2298 = vsel %vm44, %v2270, 0
  %v2301 = vsel %vm44, %v2271, 0
  %v2304 = vsel %vm44, %v2272, 0
  %v2307 = vsel %vm44, %v2273, 0
  %v2310 = vsel %vm44, %v2274, 0
  %v2313 = vsel %vm44, %v2275, 0
  %v2316 = vsel %vm44, %v2276, 0
  %v2319 = vsel %vm44, %v2277, 0
  %v2322 = vsel %vm44, %v2278, 0
  %v2325 = vsel %vm44, %v2279, 0
  %v2328 = vsel %vm44, %v2280, 0
  %v2331 = vsel %vm44, %v2281, 0
  %v2334 = vsel %vm44, %v2282, 0
  %v2337 = vsel %vm44, %v2283, 0
  %v2340 = vsel %vm44, %v2284, 0
  %v2343 = vsel %vm44, %v2285, 0
  %v2346 = vsel %vm44, %v2286, 0
  %v2349 = vsel %vm44, %v2287, 0
  %v2352 = vsel %vm44, %v2288, 0
  %v2355 = vsel %vm44, %v2289, 0
  %v2358 = vsel %vm44, %v2290, 0
  %v2361 = vsel %vm44, %v2291, 0
  %v2364 = vsel %vm44, %v2292, 0
  %v2367 = vsel %vm44, %v2293, 0
  %2369 = vmatprep.subr.mxu0 0.0
  %2370 = vmatpush1.msra.mxu0 %v14
  %2371 = vmatprep.subr.mxu0 0.0
  %2372 = vmatpush1.msra.mxu0 %v15
  %2373 = vmatprep.subr.mxu0 0.0
  %2374 = vmatpush1.msra.mxu0 %v16
  %2375 = vmatprep.subr.mxu0 0.0
  %2376 = vmatpush1.msra.mxu0 %v122
  %2377 = vmatprep.subr.mxu0 0.0
  %2378 = vmatpush1.msra.mxu0 0.0
  %2379 = vmatprep.subr.mxu0 0.0
  %2380 = vmatpush1.msra.mxu0 0.0
  %2381 = vmatprep.subr.mxu0 0.0
  %2382 = vmatpush1.msra.mxu0 0.0
  %2383 = vmatprep.subr.mxu0 0.0
  %2384 = vmatpush1.msra.mxu0 0.0
  %2385 = vmatprep.subr.mxu0 0.0
  %2386 = vmatpush1.msra.mxu0 0.0
  %2387 = vmatprep.subr.mxu0 0.0
  %2388 = vmatpush1.msra.mxu0 0.0
  %2389 = vmatprep.subr.mxu0 0.0
  %2390 = vmatpush1.msra.mxu0 0.0
  %2391 = vmatprep.subr.mxu0 0.0
  %2392 = vmatpush1.msra.mxu0 0.0
  %2393 = vmatprep.subr.mxu0 0.0
  %2394 = vmatpush1.msra.mxu0 0.0
  %2395 = vmatprep.subr.mxu0 0.0
  %2396 = vmatpush1.msra.mxu0 0.0
  %2397 = vmatprep.subr.mxu0 0.0
  %2398 = vmatpush1.msra.mxu0 0.0
  %2399 = vmatprep.subr.mxu0 0.0
  %2400 = vmatpush1.msra.mxu0 0.0
  %2401 = vmatprep.subr.mxu0 0.0
  %2402 = vmatpush1.msra.mxu0 0.0
  %2403 = vmatprep.subr.mxu0 0.0
  %2404 = vmatpush1.msra.mxu0 0.0
  %2405 = vmatprep.subr.mxu0 0.0
  %2406 = vmatpush1.msra.mxu0 0.0
  %2407 = vmatprep.subr.mxu0 0.0
  %2408 = vmatpush1.msra.mxu0 0.0
  %2409 = vmatprep.subr.mxu0 0.0
  %2410 = vmatpush1.msra.mxu0 0.0
  %2411 = vmatprep.subr.mxu0 0.0
  %2412 = vmatpush1.msra.mxu0 0.0
  %2413 = vmatprep.subr.mxu0 0.0
  %2414 = vmatpush1.msra.mxu0 0.0
  %2415 = vmatprep.subr.mxu0 0.0
  %2416 = vmatpush1.msra.mxu0 0.0
  %2417 = vmatprep.subr.mxu0 0.0
  %2418 = vmatpush1.msra.mxu0 0.0
  %2419 = vmatprep.subr.mxu0 0.0
  %2420 = vmatpush1.msra.mxu0 0.0
  %2421 = vmatprep.subr.mxu0 0.0
  %2422 = vmatpush1.msra.mxu0 0.0
  %2423 = vmatprep.subr.mxu0 0.0
  %2424 = vmatpush1.msra.mxu0 0.0
  %2425 = vmatprep.subr.mxu0 0.0
  %2426 = vmatpush1.msra.mxu0 0.0
  %2427 = vmatprep.subr.mxu0 0.0
  %2428 = vmatpush1.msra.mxu0 0.0
  %2429 = vmatprep.subr.mxu0 0.0
  %2430 = vmatpush1.msra.mxu0 0.0
  %2431 = vmatprep.subr.mxu0 0.0
  %2432 = vmatpush1.msra.mxu0 0.0
  %2433 = vmatprep.mubr.f32.mxu0 0.0
  %2434 = vmatmul.mubr.f32.gmra.mrb[0].mxu0 %v2295
  %v2435 = vpop.f32.mrb[0].mxu0
  %v2436 = vadd.f32 0.0, %v2435
  %v2437 = vpop.f32.mrb[0].mxu0
  %2438 = vmatprep.mubr.f32.mxu0 0.0
  %2439 = vmatmul.mubr.f32.gmra.mrb[0].mxu0 %v2298
  %v2440 = vpop.f32.mrb[0].mxu0
  %v2441 = vadd.f32 0.0, %v2440
  %v2442 = vpop.f32.mrb[0].mxu0
  %2443 = vmatprep.mubr.f32.mxu0 0.0
  %2444 = vmatmul.mubr.f32.gmra.mrb[0].mxu0 %v2301
  %v2445 = vpop.f32.mrb[0].mxu0
  %v2446 = vadd.f32 0.0, %v2445
  %v2447 = vpop.f32.mrb[0].mxu0
  %2448 = vmatprep.mubr.f32.mxu0 0.0
  %2449 = vmatmul.mubr.f32.gmra.mrb[0].mxu0 %v2304
  %v2450 = vpop.f32.mrb[0].mxu0
  %v2451 = vadd.f32 0.0, %v2450
  %v2452 = vpop.f32.mrb[0].mxu0
  %2453 = vmatprep.mubr.f32.mxu0 0.0
  %2454 = vmatmul.mubr.f32.gmra.mrb[0].mxu0 %v2307
  %v2455 = vpop.f32.mrb[0].mxu0
  %v2456 = vadd.f32 0.0, %v2455
  %v2457 = vpop.f32.mrb[0].mxu0
  %2458 = vmatprep.mubr.f32.mxu0 0.0
  %2459 = vmatmul.mubr.f32.gmra.mrb[0].mxu0 %v2310
  %v2460 = vpop.f32.mrb[0].mxu0
  %v2461 = vadd.f32 0.0, %v2460
  %v2462 = vpop.f32.mrb[0].mxu0
  %2463 = vmatprep.mubr.f32.mxu0 0.0
  %2464 = vmatmul.mubr.f32.gmra.mrb[0].mxu0 %v2313
  %v2465 = vpop.f32.mrb[0].mxu0
  %v2466 = vadd.f32 0.0, %v2465
  %v2467 = vpop.f32.mrb[0].mxu0
  %2468 = vmatprep.mubr.f32.mxu0 0.0
  %2469 = vmatmul.mubr.f32.gmra.mrb[0].mxu0 %v2316
  %v2470 = vpop.f32.mrb[0].mxu0
  %v2471 = vadd.f32 0.0, %v2470
  %v2472 = vpop.f32.mrb[0].mxu0
  %2473 = vmatprep.mubr.f32.mxu0 0.0
  %2474 = vmatmul.mubr.f32.gmra.mrb[0].mxu0 %v2319
  %v2475 = vpop.f32.mrb[0].mxu0
  %v2476 = vadd.f32 0.0, %v2475
  %v2477 = vpop.f32.mrb[0].mxu0
  %2478 = vmatprep.mubr.f32.mxu0 0.0
  %2479 = vmatmul.mubr.f32.gmra.mrb[0].mxu0 %v2322
  %v2480 = vpop.f32.mrb[0].mxu0
  %v2481 = vadd.f32 0.0, %v2480
  %v2482 = vpop.f32.mrb[0].mxu0
  %2483 = vmatprep.mubr.f32.mxu0 0.0
  %2484 = vmatmul.mubr.f32.gmra.mrb[0].mxu0 %v2325
  %v2485 = vpop.f32.mrb[0].mxu0
  %v2486 = vadd.f32 0.0, %v2485
  %v2487 = vpop.f32.mrb[0].mxu0
  %2488 = vmatprep.mubr.f32.mxu0 0.0
  %2489 = vmatmul.mubr.f32.gmra.mrb[0].mxu0 %v2328
  %v2490 = vpop.f32.mrb[0].mxu0
  %v2491 = vadd.f32 0.0, %v2490
  %v2492 = vpop.f32.mrb[0].mxu0
  %2493 = vmatprep.mubr.f32.mxu0 0.0
  %2494 = vmatmul.mubr.f32.gmra.mrb[0].mxu0 %v2331
  %v2495 = vpop.f32.mrb[0].mxu0
  %v2496 = vadd.f32 0.0, %v2495
  %v2497 = vpop.f32.mrb[0].mxu0
  %2498 = vmatprep.mubr.f32.mxu0 0.0
  %2499 = vmatmul.mubr.f32.gmra.mrb[0].mxu0 %v2334
  %v2500 = vpop.f32.mrb[0].mxu0
  %v2501 = vadd.f32 0.0, %v2500
  %v2502 = vpop.f32.mrb[0].mxu0
  %2503 = vmatprep.mubr.f32.mxu0 0.0
  %2504 = vmatmul.mubr.f32.gmra.mrb[0].mxu0 %v2337
  %v2505 = vpop.f32.mrb[0].mxu0
  %v2506 = vadd.f32 0.0, %v2505
  %v2507 = vpop.f32.mrb[0].mxu0
  %2508 = vmatprep.mubr.f32.mxu0 0.0
  %2509 = vmatmul.mubr.f32.gmra.mrb[0].mxu0 %v2340
  %v2510 = vpop.f32.mrb[0].mxu0
  %v2511 = vadd.f32 0.0, %v2510
  %v2512 = vpop.f32.mrb[0].mxu0
  %2513 = vmatprep.mubr.f32.mxu0 0.0
  %2514 = vmatmul.mubr.f32.gmra.mrb[0].mxu0 %v2343
  %v2515 = vpop.f32.mrb[0].mxu0
  %v2516 = vadd.f32 0.0, %v2515
  %v2517 = vpop.f32.mrb[0].mxu0
  %2518 = vmatprep.mubr.f32.mxu0 0.0
  %2519 = vmatmul.mubr.f32.gmra.mrb[0].mxu0 %v2346
  %v2520 = vpop.f32.mrb[0].mxu0
  %v2521 = vadd.f32 0.0, %v2520
  %v2522 = vpop.f32.mrb[0].mxu0
  %2523 = vmatprep.mubr.f32.mxu0 0.0
  %2524 = vmatmul.mubr.f32.gmra.mrb[0].mxu0 %v2349
  %v2525 = vpop.f32.mrb[0].mxu0
  %v2526 = vadd.f32 0.0, %v2525
  %v2527 = vpop.f32.mrb[0].mxu0
  %2528 = vmatprep.mubr.f32.mxu0 0.0
  %2529 = vmatmul.mubr.f32.gmra.mrb[0].mxu0 %v2352
  %v2530 = vpop.f32.mrb[0].mxu0
  %v2531 = vadd.f32 0.0, %v2530
  %v2532 = vpop.f32.mrb[0].mxu0
  %2533 = vmatprep.mubr.f32.mxu0 0.0
  %2534 = vmatmul.mubr.f32.gmra.mrb[0].mxu0 %v2355
  %v2535 = vpop.f32.mrb[0].mxu0
  %v2536 = vadd.f32 0.0, %v2535
  %v2537 = vpop.f32.mrb[0].mxu0
  %2538 = vmatprep.mubr.f32.mxu0 0.0
  %2539 = vmatmul.mubr.f32.gmra.mrb[0].mxu0 %v2358
  %v2540 = vpop.f32.mrb[0].mxu0
  %v2541 = vadd.f32 0.0, %v2540
  %v2542 = vpop.f32.mrb[0].mxu0
  %2543 = vmatprep.mubr.f32.mxu0 0.0
  %2544 = vmatmul.mubr.f32.gmra.mrb[0].mxu0 %v2361
  %v2545 = vpop.f32.mrb[0].mxu0
  %v2546 = vadd.f32 0.0, %v2545
  %v2547 = vpop.f32.mrb[0].mxu0
  %2548 = vmatprep.mubr.f32.mxu0 0.0
  %2549 = vmatmul.mubr.f32.gmra.mrb[0].mxu0 %v2364
  %v2550 = vpop.f32.mrb[0].mxu0
  %v2551 = vadd.f32 0.0, %v2550
  %v2552 = vpop.f32.mrb[0].mxu0
  %2553 = vmatprep.mubr.f32.mxu0 0.0
  %2554 = vmatmul.mubr.f32.gmra.mrb[0].mxu0 %v2367
  %v2555 = vpop.f32.mrb[0].mxu0
  %v2556 = vadd.f32 0.0, %v2555
  %v2557 = vpop.f32.mrb[0].mxu0
  %2558 = vdwg.mxu0
  %v2559 = vmax.f32 %v2243, %v2436
  %v2560 = vmax.f32 %v2244, %v2441
  %v2561 = vmax.f32 %v2245, %v2446
  %v2562 = vmax.f32 %v2246, %v2451
  %v2563 = vmax.f32 %v2247, %v2456
  %v2564 = vmax.f32 %v2248, %v2461
  %v2565 = vmax.f32 %v2249, %v2466
  %v2566 = vmax.f32 %v2250, %v2471
  %v2567 = vmax.f32 %v2251, %v2476
  %v2568 = vmax.f32 %v2252, %v2481
  %v2569 = vmax.f32 %v2253, %v2486
  %v2570 = vmax.f32 %v2254, %v2491
  %v2571 = vmax.f32 %v2255, %v2496
  %v2572 = vmax.f32 %v2256, %v2501
  %v2573 = vmax.f32 %v2257, %v2506
  %v2574 = vmax.f32 %v2258, %v2511
  %v2575 = vmax.f32 %v2259, %v2516
  %v2576 = vmax.f32 %v2260, %v2521
  %v2577 = vmax.f32 %v2261, %v2526
  %v2578 = vmax.f32 %v2262, %v2531
  %v2579 = vmax.f32 %v2263, %v2536
  %v2580 = vmax.f32 %v2264, %v2541
  %v2581 = vmax.f32 %v2265, %v2546
  %v2582 = vmax.f32 %v2266, %v2551
  %v2583 = vmax.f32 %v2267, %v2556
  %v2584 = vadd.f32 %v2559, %v1266
  %v2585 = vadd.f32 %v2560, %v1266
  %v2586 = vadd.f32 %v2561, %v1266
  %v2587 = vadd.f32 %v2562, %v1266
  %v2588 = vadd.f32 %v2563, %v1266
  %v2589 = vadd.f32 %v2564, %v1266
  %v2590 = vadd.f32 %v2565, %v1266
  %v2591 = vadd.f32 %v2566, %v1266
  %v2592 = vadd.f32 %v2567, %v1266
  %v2593 = vadd.f32 %v2568, %v1266
  %v2594 = vadd.f32 %v2569, %v1266
  %v2595 = vadd.f32 %v2570, %v1266
  %v2596 = vadd.f32 %v2571, %v1266
  %v2597 = vadd.f32 %v2572, %v1266
  %v2598 = vadd.f32 %v2573, %v1266
  %v2599 = vadd.f32 %v2574, %v1266
  %v2600 = vadd.f32 %v2575, %v1266
  %v2601 = vadd.f32 %v2576, %v1266
  %v2602 = vadd.f32 %v2577, %v1266
  %v2603 = vadd.f32 %v2578, %v1266
  %v2604 = vadd.f32 %v2579, %v1266
  %v2605 = vadd.f32 %v2580, %v1266
  %v2606 = vadd.f32 %v2581, %v1266
  %v2607 = vadd.f32 %v2582, %v1266
  %v2608 = vadd.f32 %v2583, %v1266
  %v2609 = vmax.f32 %v2584, 0.0
  %v2610 = vmax.f32 %v2585, 0.0
  %v2611 = vmax.f32 %v2586, 0.0
  %v2612 = vmax.f32 %v2587, 0.0
  %v2613 = vmax.f32 %v2588, 0.0
  %v2614 = vmax.f32 %v2589, 0.0
  %v2615 = vmax.f32 %v2590, 0.0
  %v2616 = vmax.f32 %v2591, 0.0
  %v2617 = vmax.f32 %v2592, 0.0
  %v2618 = vmax.f32 %v2593, 0.0
  %v2619 = vmax.f32 %v2594, 0.0
  %v2620 = vmax.f32 %v2595, 0.0
  %v2621 = vmax.f32 %v2596, 0.0
  %v2622 = vmax.f32 %v2597, 0.0
  %v2623 = vmax.f32 %v2598, 0.0
  %v2624 = vmax.f32 %v2599, 0.0
  %v2625 = vmax.f32 %v2600, 0.0
  %v2626 = vmax.f32 %v2601, 0.0
  %v2627 = vmax.f32 %v2602, 0.0
  %v2628 = vmax.f32 %v2603, 0.0
  %v2629 = vmax.f32 %v2604, 0.0
  %v2630 = vmax.f32 %v2605, 0.0
  %v2631 = vmax.f32 %v2606, 0.0
  %v2632 = vmax.f32 %v2607, 0.0
  %v2633 = vmax.f32 %v2608, 0.0
  %s2634 = scalar_lea.vmem %s3, 200
  %2635 = vst.msk [vmem:[%s2634] sm:$0xff] %vm1318, %v2609
  %2636 = vst.msk [vmem:[%s2634 + $0x8] sm:$0xff] %vm1318, %v2610
  %2637 = vst.msk [vmem:[%s2634 + $0x10] sm:$0xff] %vm1318, %v2611
  %2638 = vst.msk [vmem:[%s2634 + $0x18] sm:$0xff] %vm1318, %v2612
  %2639 = vst.msk [vmem:[%s2634 + $0x20] sm:$0xff] %vm1318, %v2613
  %2640 = vst.msk [vmem:[%s2634 + $0x28] sm:$0xff] %vm1318, %v2614
  %2641 = vst.msk [vmem:[%s2634 + $0x30] sm:$0xff] %vm1318, %v2615
  %2642 = vst.msk [vmem:[%s2634 + $0x38] sm:$0xff] %vm1318, %v2616
  %2643 = vst.msk [vmem:[%s2634 + $0x40] sm:$0xff] %vm1318, %v2617
  %2644 = vst.msk [vmem:[%s2634 + $0x48] sm:$0xff] %vm1318, %v2618
  %2645 = vst.msk [vmem:[%s2634 + $0x50] sm:$0xff] %vm1318, %v2619
  %2646 = vst.msk [vmem:[%s2634 + $0x58] sm:$0xff] %vm1318, %v2620
  %2647 = vst.msk [vmem:[%s2634 + $0x60] sm:$0xff] %vm1318, %v2621
  %2648 = vst.msk [vmem:[%s2634 + $0x68] sm:$0xff] %vm1318, %v2622
  %2649 = vst.msk [vmem:[%s2634 + $0x70] sm:$0xff] %vm1318, %v2623
  %2650 = vst.msk [vmem:[%s2634 + $0x78] sm:$0xff] %vm1318, %v2624
  %2651 = vst.msk [vmem:[%s2634 + $0x80] sm:$0xff] %vm1318, %v2625
  %2652 = vst.msk [vmem:[%s2634 + $0x88] sm:$0xff] %vm1318, %v2626
  %2653 = vst.msk [vmem:[%s2634 + $0x90] sm:$0xff] %vm1318, %v2627
  %2654 = vst.msk [vmem:[%s2634 + $0x98] sm:$0xff] %vm1318, %v2628
  %2655 = vst.msk [vmem:[%s2634 + $0xa0] sm:$0xff] %vm1318, %v2629
  %2656 = vst.msk [vmem:[%s2634 + $0xa8] sm:$0xff] %vm1318, %v2630
  %2657 = vst.msk [vmem:[%s2634 + $0xb0] sm:$0xff] %vm1318, %v2631
  %2658 = vst.msk [vmem:[%s2634 + $0xb8] sm:$0xff] %vm1318, %v2632
  %2659 = vst.msk [vmem:[%s2634 + $0xc0] sm:$0xf] %vm1343, %v2633
  // Predicated region
  $region14: #{net_forward.3} parent=0 // pred_check
    _
  $region15: #{net_forward.3} parent=0 // pred_check_branch
    %2661 = sbr.rel (0) target = $region17
  $region16: #{net_forward.3} parent=0 // pred_region
    _
  $region17: #{net_forward.3} parent=0 // pred_fallthru
    _
  // Predicated region
  $region18: #{net_forward.3} parent=0 // pred_check
    _
  $region19: #{net_forward.3} parent=0 // pred_check_branch
    %2663 = sbr.rel (0) target = $region21
  $region20: #{net_forward.3} parent=0 // pred_region
    _
  $region21: #{net_forward.3} parent=0 // pred_fallthru
    _

// kernel: net_forward.5
$region0: #{net_forward.5}
  #allocation0 [shape = 'u32[]', space=smem, size = 0x4, offset = 0x4, fixed_abs, tag = 'smem constant byte address 0x4 - core index']
  #allocation1 [shape = 'u32[144,128]{1,0:T(1,128)}', space=vmem, size = 0x12000, scoped, tag = 'internal scratch']
  %s0 = inlined_call_operand.vmem [shape: f32[2,400], index: 0, kind: input, shape index: {}]
  %s1 = inlined_call_operand.vmem [shape: f32[400,120], index: 1, kind: input, shape index: {}]
  %s2 = inlined_call_operand.vmem [shape: f32[1,120], index: 2, kind: input, shape index: {}]
  %s3 = inlined_call_operand.vmem [shape: f32[120,84], index: 3, kind: input, shape index: {}]
  %s4 = inlined_call_operand.vmem [shape: f32[1,84], index: 4, kind: input, shape index: {}]
  %s5 = inlined_call_operand.vmem [shape: f32[84,10], index: 5, kind: input, shape index: {}]
  %s6 = inlined_call_operand.vmem [shape: f32[1,10], index: 6, kind: input, shape index: {}]
  %s7 = inlined_call_operand.hbm [shape: f32[2,10], index: 7, kind: output, shape index: {}]
  %s8 = sld [smem:[#allocation0]]
  $region38: #{net_forward.5} parent=0
    _
  %s10 = ssub.s32 1, %s8
  %s11 = scalar_select 0, %s10, %s8
  $region1: #{net_forward.5} parent=0
    #allocation2 [shape = 'u8[1024]{0}', space=vmem, size = 0x400, scoped, tag = 'output window, operand 0, single buffered']
    #allocation3 [shape = 's32[1]{0}', space=sflag, size = 0x4, scoped, tag = 'scoped memory for net_forward.5']
    %12 = vsyncpa [#allocation3], 0
    // Predicated region
    $region2: #{net_forward.5} parent=1 // pred_check
      _
    $region3: #{net_forward.5} parent=1 // pred_check_branch
      %14 = sbr.rel (0) target = $region5
    $region4: #{net_forward.5} parent=1 // pred_region
      _
    $region5: #{net_forward.5} parent=1 // pred_fallthru
      _
    // Predicated region
    $region6: #{net_forward.5} parent=1 // pred_check
      _
    $region7: #{net_forward.5} parent=1 // pred_check_branch
      %16 = sbr.rel (0) target = $region9
    $region8: #{net_forward.5} parent=1 // pred_region
      _
    $region9: #{net_forward.5} parent=1 // pred_fallthru
      _
    // Predicated region
    $region10: #{net_forward.5} parent=1 // pred_check
      _
    $region11: #{net_forward.5} parent=1 // pred_check_branch
      %18 = sbr.rel (0) target = $region13
    $region12: #{net_forward.5} parent=1 // pred_region
      _
    $region13: #{net_forward.5} parent=1 // pred_fallthru
      _
    // Predicated region
    $region14: #{net_forward.5} parent=1 // pred_check
      _
    $region15: #{net_forward.5} parent=1 // pred_check_branch
      %20 = sbr.rel (0) target = $region17
    $region16: #{net_forward.5} parent=1 // pred_region
      _
    $region17: #{net_forward.5} parent=1 // pred_fallthru
      _
    // Predicated region
    $region18: #{net_forward.5} parent=1 // pred_check
      _
    $region19: #{net_forward.5} parent=1 // pred_check_branch
      %22 = sbr.rel (0) target = $region21
    $region20: #{net_forward.5} parent=1 // pred_region
      _
    $region21: #{net_forward.5} parent=1 // pred_fallthru
      _
    // Predicated region
    $region22: #{net_forward.5} parent=1 // pred_check
      _
    $region23: #{net_forward.5} parent=1 // pred_check_branch
      %24 = sbr.rel (0) target = $region25
    $region24: #{net_forward.5} parent=1 // pred_region
      _
    $region25: #{net_forward.5} parent=1 // pred_fallthru
      _
    // Predicated region
    $region26: #{net_forward.5} parent=1 // pred_check
      _
    $region27: #{net_forward.5} parent=1 // pred_check_branch
      %26 = sbr.rel (0) target = $region29
    $region28: #{net_forward.5} parent=1 // pred_region
      _
    $region29: #{net_forward.5} parent=1 // pred_fallthru
      _
    %v27 = vld [vmem:[%s0] sm:$0xff]
    %v28 = vld [vmem:[%s1] sm:$0xff]
    %v29 = vld [vmem:[%s1 + $0x8] sm:$0xff]
    %v30 = vld [vmem:[%s1 + $0x10] sm:$0xff]
    %v31 = vld [vmem:[%s1 + $0x18] sm:$0xff]
    %v32 = vld [vmem:[%s1 + $0x20] sm:$0xff]
    %v33 = vld [vmem:[%s1 + $0x28] sm:$0xff]
    %v34 = vld [vmem:[%s1 + $0x30] sm:$0xff]
    %v35 = vld [vmem:[%s1 + $0x38] sm:$0xff]
    %v36 = vld [vmem:[%s1 + $0x40] sm:$0xff]
    %v37 = vld [vmem:[%s1 + $0x48] sm:$0xff]
    %v38 = vld [vmem:[%s1 + $0x50] sm:$0xff]
    %v39 = vld [vmem:[%s1 + $0x58] sm:$0xff]
    %v40 = vld [vmem:[%s1 + $0x60] sm:$0xff]
    %v41 = vld [vmem:[%s1 + $0x68] sm:$0xff]
    %v42 = vld [vmem:[%s1 + $0x70] sm:$0xff]
    %v43 = vld [vmem:[%s1 + $0x78] sm:$0xff]
    %v44 = vld [vmem:[%s1 + $0x80] sm:$0xff]
    %v45 = vld [vmem:[%s1 + $0x88] sm:$0xff]
    %v46 = vld [vmem:[%s1 + $0x90] sm:$0xff]
    %v47 = vld [vmem:[%s1 + $0x98] sm:$0xff]
    %v48 = vld [vmem:[%s1 + $0xa0] sm:$0xff]
    %v49 = vld [vmem:[%s1 + $0xa8] sm:$0xff]
    %v50 = vld [vmem:[%s1 + $0xb0] sm:$0xff]
    %v51 = vld [vmem:[%s1 + $0xb8] sm:$0xff]
    %v52 = vld [vmem:[%s1 + $0xc0] sm:$0xff]
    %v53 = vld [vmem:[%s1 + $0xc8] sm:$0xff]
    %v54 = vld [vmem:[%s1 + $0xd0] sm:$0xff]
    %v55 = vld [vmem:[%s1 + $0xd8] sm:$0xff]
    %v56 = vld [vmem:[%s1 + $0xe0] sm:$0xff]
    %v57 = vld [vmem:[%s1 + $0xe8] sm:$0xff]
    %v58 = vld [vmem:[%s1 + $0xf0] sm:$0xff]
    %v59 = vld [vmem:[%s1 + $0xf8] sm:$0xff]
    %v60 = vld [vmem:[%s1 + $0x100] sm:$0xff]
    %v61 = vld [vmem:[%s1 + $0x108] sm:$0xff]
    %v62 = vld [vmem:[%s1 + $0x110] sm:$0xff]
    %v63 = vld [vmem:[%s1 + $0x118] sm:$0xff]
    %v64 = vld [vmem:[%s1 + $0x120] sm:$0xff]
    %v65 = vld [vmem:[%s1 + $0x128] sm:$0xff]
    %v66 = vld [vmem:[%s1 + $0x130] sm:$0xff]
    %v67 = vld [vmem:[%s1 + $0x138] sm:$0xff]
    %v68 = vld [vmem:[%s1 + $0x140] sm:$0xff]
    %v69 = vld [vmem:[%s1 + $0x148] sm:$0xff]
    %v70 = vld [vmem:[%s1 + $0x150] sm:$0xff]
    %v71 = vld [vmem:[%s1 + $0x158] sm:$0xff]
    %v72 = vld [vmem:[%s1 + $0x160] sm:$0xff]
    %v73 = vld [vmem:[%s1 + $0x168] sm:$0xff]
    %v74 = vld [vmem:[%s1 + $0x170] sm:$0xff]
    %v75 = vld [vmem:[%s1 + $0x178] sm:$0xff]
    %v76 = vld [vmem:[%s1 + $0x180] sm:$0xff]
    %v77 = vld [vmem:[%s1 + $0x188] sm:$0xff]
    %v78 = vld [vmem:[%s2] sm:$0x1]
    %v80 = vlaneseq
    %v81 = vshrl.u32 %v80, 7
    %v82 = vsub.s32 0, %v81
    %v83 = vrot.slane %v78, %v82
    %v86 = vcombine.high %v27, %v27
    %v88 = vunpack.c.l.s4 1983009808
    %v89 = vunpack.c.0.s8 %v88
    %v90 = vlaneseq
    %v91 = vshrl.u32 %v90, 7
    %v92 = vsub.s32 %v89, %v91
    %v93 = vrot.slane %v27, %v92
    %v95 = vunpack.c.l.s4 1983009808
    %v96 = vunpack.c.0.s8 %v95
    %v97 = vlaneseq
    %v98 = vshrl.u32 %v97, 7
    %v99 = vsub.s32 %v96, %v98
    %v100 = vrot.slane %v86, %v99
    %v101 = vcombine.high %v93, %v93
    %v102 = vcombine.high %v100, %v100
    %vm106 = vcmask 130048
    %v107 = vsel %vm106, %v102, 0
    %109 = vmatprep.subr.mxu0 0.0
    %110 = vmatpush1.msra.mxu0 %v28
    %111 = vmatprep.subr.mxu0 0.0
    %112 = vmatpush1.msra.mxu0 %v29
    %113 = vmatprep.subr.mxu0 0.0
    %114 = vmatpush1.msra.mxu0 %v30
    %115 = vmatprep.subr.mxu0 0.0
    %116 = vmatpush1.msra.mxu0 %v31
    %117 = vmatprep.subr.mxu0 0.0
    %118 = vmatpush1.msra.mxu0 %v32
    %119 = vmatprep.subr.mxu0 0.0
    %120 = vmatpush1.msra.mxu0 %v33
    %121 = vmatprep.subr.mxu0 0.0
    %122 = vmatpush1.msra.mxu0 %v34
    %123 = vmatprep.subr.mxu0 0.0
    %124 = vmatpush1.msra.mxu0 %v35
    %125 = vmatprep.subr.mxu0 0.0
    %126 = vmatpush1.msra.mxu0 %v36
    %127 = vmatprep.subr.mxu0 0.0
    %128 = vmatpush1.msra.mxu0 %v37
    %129 = vmatprep.subr.mxu0 0.0
    %130 = vmatpush1.msra.mxu0 %v38
    %131 = vmatprep.subr.mxu0 0.0
    %132 = vmatpush1.msra.mxu0 %v39
    %133 = vmatprep.subr.mxu0 0.0
    %134 = vmatpush1.msra.mxu0 %v40
    %135 = vmatprep.subr.mxu0 0.0
    %136 = vmatpush1.msra.mxu0 %v41
    %137 = vmatprep.subr.mxu0 0.0
    %138 = vmatpush1.msra.mxu0 %v42
    %139 = vmatprep.subr.mxu0 0.0
    %140 = vmatpush1.msra.mxu0 %v43
    %141 = vmatprep.subr.mxu0 0.0
    %142 = vmatpush1.msra.mxu0 %v44
    %143 = vmatprep.subr.mxu0 0.0
    %144 = vmatpush1.msra.mxu0 %v45
    %145 = vmatprep.subr.mxu0 0.0
    %146 = vmatpush1.msra.mxu0 %v46
    %147 = vmatprep.subr.mxu0 0.0
    %148 = vmatpush1.msra.mxu0 %v47
    %149 = vmatprep.subr.mxu0 0.0
    %150 = vmatpush1.msra.mxu0 %v48
    %151 = vmatprep.subr.mxu0 0.0
    %152 = vmatpush1.msra.mxu0 %v49
    %153 = vmatprep.subr.mxu0 0.0
    %154 = vmatpush1.msra.mxu0 %v50
    %155 = vmatprep.subr.mxu0 0.0
    %156 = vmatpush1.msra.mxu0 %v51
    %157 = vmatprep.subr.mxu0 0.0
    %158 = vmatpush1.msra.mxu0 %v52
    %159 = vmatprep.subr.mxu0 0.0
    %160 = vmatpush1.msra.mxu0 %v53
    %161 = vmatprep.subr.mxu0 0.0
    %162 = vmatpush1.msra.mxu0 %v54
    %163 = vmatprep.subr.mxu0 0.0
    %164 = vmatpush1.msra.mxu0 %v55
    %165 = vmatprep.subr.mxu0 0.0
    %166 = vmatpush1.msra.mxu0 %v56
    %167 = vmatprep.subr.mxu0 0.0
    %168 = vmatpush1.msra.mxu0 %v57
    %169 = vmatprep.subr.mxu0 0.0
    %170 = vmatpush1.msra.mxu0 %v58
    %171 = vmatprep.subr.mxu0 0.0
    %172 = vmatpush1.msra.mxu0 %v59
    %173 = vmatprep.mubr.f32.mxu0 %v101
    %174 = vmatmul.mubr.f32.gmra.mrb[0].mxu0 %v93
    %v175 = vpop.f32.mrb[0].mxu0
    %v176 = vadd.f32 %v83, %v175
    %v177 = vpop.f32.mrb[0].mxu0
    %178 = vdwg.mxu0
    %179 = vmatprep.subr.mxu0 0.0
    %180 = vmatpush1.msra.mxu0 %v60
    %181 = vmatprep.subr.mxu0 0.0
    %182 = vmatpush1.msra.mxu0 %v61
    %183 = vmatprep.subr.mxu0 0.0
    %184 = vmatpush1.msra.mxu0 %v62
    %185 = vmatprep.subr.mxu0 0.0
    %186 = vmatpush1.msra.mxu0 %v63
    %187 = vmatprep.subr.mxu0 0.0
    %188 = vmatpush1.msra.mxu0 %v64
    %189 = vmatprep.subr.mxu0 0.0
    %190 = vmatpush1.msra.mxu0 %v65
    %191 = vmatprep.subr.mxu0 0.0
    %192 = vmatpush1.msra.mxu0 %v66
    %193 = vmatprep.subr.mxu0 0.0
    %194 = vmatpush1.msra.mxu0 %v67
    %195 = vmatprep.subr.mxu0 0.0
    %196 = vmatpush1.msra.mxu0 %v68
    %197 = vmatprep.subr.mxu0 0.0
    %198 = vmatpush1.msra.mxu0 %v69
    %199 = vmatprep.subr.mxu0 0.0
    %200 = vmatpush1.msra.mxu0 %v70
    %201 = vmatprep.subr.mxu0 0.0
    %202 = vmatpush1.msra.mxu0 %v71
    %203 = vmatprep.subr.mxu0 0.0
    %204 = vmatpush1.msra.mxu0 %v72
    %205 = vmatprep.subr.mxu0 0.0
    %206 = vmatpush1.msra.mxu0 %v73
    %207 = vmatprep.subr.mxu0 0.0
    %208 = vmatpush1.msra.mxu0 %v74
    %209 = vmatprep.subr.mxu0 0.0
    %210 = vmatpush1.msra.mxu0 %v75
    %211 = vmatprep.subr.mxu0 0.0
    %212 = vmatpush1.msra.mxu0 %v76
    %213 = vmatprep.subr.mxu0 0.0
    %214 = vmatpush1.msra.mxu0 %v77
    %215 = vmatprep.subr.mxu0 0.0
    %216 = vmatpush1.msra.mxu0 0.0
    %217 = vmatprep.subr.mxu0 0.0
    %218 = vmatpush1.msra.mxu0 0.0
    %219 = vmatprep.subr.mxu0 0.0
    %220 = vmatpush1.msra.mxu0 0.0
    %221 = vmatprep.subr.mxu0 0.0
    %222 = vmatpush1.msra.mxu0 0.0
    %223 = vmatprep.subr.mxu0 0.0
    %224 = vmatpush1.msra.mxu0 0.0
    %225 = vmatprep.subr.mxu0 0.0
    %226 = vmatpush1.msra.mxu0 0.0
    %227 = vmatprep.subr.mxu0 0.0
    %228 = vmatpush1.msra.mxu0 0.0
    %229 = vmatprep.subr.mxu0 0.0
    %230 = vmatpush1.msra.mxu0 0.0
    %231 = vmatprep.subr.mxu0 0.0
    %232 = vmatpush1.msra.mxu0 0.0
    %233 = vmatprep.subr.mxu0 0.0
    %234 = vmatpush1.msra.mxu0 0.0
    %235 = vmatprep.subr.mxu0 0.0
    %236 = vmatpush1.msra.mxu0 0.0
    %237 = vmatprep.subr.mxu0 0.0
    %238 = vmatpush1.msra.mxu0 0.0
    %239 = vmatprep.subr.mxu0 0.0
    %240 = vmatpush1.msra.mxu0 0.0
    %241 = vmatprep.subr.mxu0 0.0
    %242 = vmatpush1.msra.mxu0 0.0
    %243 = vmatprep.mubr.f32.mxu0 %v107
    %244 = vmatmul.mubr.f32.gmra.mrb[0].mxu0 %v100
    %v245 = vpop.f32.mrb[0].mxu0
    %v246 = vadd.f32 %v176, %v245
    %v247 = vpop.f32.mrb[0].mxu0
    %248 = vdwg.mxu0
    %v249 = vmax.f32 %v246, 0.0
    %v250 = vld [vmem:[%s3] sm:$0xff]
    %v251 = vld [vmem:[%s3 + $0x8] sm:$0xff]
    %v252 = vld [vmem:[%s3 + $0x10] sm:$0xff]
    %v253 = vld [vmem:[%s3 + $0x18] sm:$0xff]
    %v254 = vld [vmem:[%s3 + $0x20] sm:$0xff]
    %v255 = vld [vmem:[%s3 + $0x28] sm:$0xff]
    %v256 = vld [vmem:[%s3 + $0x30] sm:$0xff]
    %v257 = vld [vmem:[%s3 + $0x38] sm:$0xff]
    %v258 = vld [vmem:[%s3 + $0x40] sm:$0xff]
    %v259 = vld [vmem:[%s3 + $0x48] sm:$0xff]
    %v260 = vld [vmem:[%s3 + $0x50] sm:$0xff]
    %v261 = vld [vmem:[%s3 + $0x58] sm:$0xff]
    %v262 = vld [vmem:[%s3 + $0x60] sm:$0xff]
    %v263 = vld [vmem:[%s3 + $0x68] sm:$0xff]
    %v264 = vld [vmem:[%s3 + $0x70] sm:$0xff]
    %v265 = vld [vmem:[%s4] sm:$0x1]
    %v267 = vlaneseq
    %v268 = vshrl.u32 %v267, 7
    %v269 = vsub.s32 0, %v268
    %v270 = vrot.slane %v265, %v269
    %vm272 = vcmask 982016
    %v274 = vsel %vm272, %v249, 0
    %276 = vmatprep.subr.mxu0 0.0
    %277 = vmatpush1.msra.mxu0 %v250
    %278 = vmatprep.subr.mxu0 0.0
    %279 = vmatpush1.msra.mxu0 %v251
    %280 = vmatprep.subr.mxu0 0.0
    %281 = vmatpush1.msra.mxu0 %v252
    %282 = vmatprep.subr.mxu0 0.0
    %283 = vmatpush1.msra.mxu0 %v253
    %284 = vmatprep.subr.mxu0 0.0
    %285 = vmatpush1.msra.mxu0 %v254
    %286 = vmatprep.subr.mxu0 0.0
    %287 = vmatpush1.msra.mxu0 %v255
    %288 = vmatprep.subr.mxu0 0.0
    %289 = vmatpush1.msra.mxu0 %v256
    %290 = vmatprep.subr.mxu0 0.0
    %291 = vmatpush1.msra.mxu0 %v257
    %292 = vmatprep.subr.mxu0 0.0
    %293 = vmatpush1.msra.mxu0 %v258
    %294 = vmatprep.subr.mxu0 0.0
    %295 = vmatpush1.msra.mxu0 %v259
    %296 = vmatprep.subr.mxu0 0.0
    %297 = vmatpush1.msra.mxu0 %v260
    %298 = vmatprep.subr.mxu0 0.0
    %299 = vmatpush1.msra.mxu0 %v261
    %300 = vmatprep.subr.mxu0 0.0
    %301 = vmatpush1.msra.mxu0 %v262
    %302 = vmatprep.subr.mxu0 0.0
    %303 = vmatpush1.msra.mxu0 %v263
    %304 = vmatprep.subr.mxu0 0.0
    %305 = vmatpush1.msra.mxu0 %v264
    %306 = vmatprep.subr.mxu0 0.0
    %307 = vmatpush1.msra.mxu0 0.0
    %308 = vmatprep.subr.mxu0 0.0
    %309 = vmatpush1.msra.mxu0 0.0
    %310 = vmatprep.subr.mxu0 0.0
    %311 = vmatpush1.msra.mxu0 0.0
    %312 = vmatprep.subr.mxu0 0.0
    %313 = vmatpush1.msra.mxu0 0.0
    %314 = vmatprep.subr.mxu0 0.0
    %315 = vmatpush1.msra.mxu0 0.0
    %316 = vmatprep.subr.mxu0 0.0
    %317 = vmatpush1.msra.mxu0 0.0
    %318 = vmatprep.subr.mxu0 0.0
    %319 = vmatpush1.msra.mxu0 0.0
    %320 = vmatprep.subr.mxu0 0.0
    %321 = vmatpush1.msra.mxu0 0.0
    %322 = vmatprep.subr.mxu0 0.0
    %323 = vmatpush1.msra.mxu0 0.0
    %324 = vmatprep.subr.mxu0 0.0
    %325 = vmatpush1.msra.mxu0 0.0
    %326 = vmatprep.subr.mxu0 0.0
    %327 = vmatpush1.msra.mxu0 0.0
    %328 = vmatprep.subr.mxu0 0.0
    %329 = vmatpush1.msra.mxu0 0.0
    %330 = vmatprep.subr.mxu0 0.0
    %331 = vmatpush1.msra.mxu0 0.0
    %332 = vmatprep.subr.mxu0 0.0
    %333 = vmatpush1.msra.mxu0 0.0
    %334 = vmatprep.subr.mxu0 0.0
    %335 = vmatpush1.msra.mxu0 0.0
    %336 = vmatprep.subr.mxu0 0.0
    %337 = vmatpush1.msra.mxu0 0.0
    %338 = vmatprep.subr.mxu0 0.0
    %339 = vmatpush1.msra.mxu0 0.0
    %340 = vmatprep.mubr.f32.mxu0 0.0
    %341 = vmatmul.mubr.f32.gmra.mrb[0].mxu0 %v274
    %v342 = vpop.f32.mrb[0].mxu0
    %v343 = vadd.f32 %v270, %v342
    %v344 = vpop.f32.mrb[0].mxu0
    %345 = vdwg.mxu0
    %v346 = vmax.f32 %v343, 0.0
    %v347 = vld [vmem:[%s5] sm:$0xff]
    %v348 = vld [vmem:[%s5 + $0x8] sm:$0xff]
    %v349 = vld [vmem:[%s5 + $0x10] sm:$0xff]
    %v350 = vld [vmem:[%s5 + $0x18] sm:$0xff]
    %v351 = vld [vmem:[%s5 + $0x20] sm:$0xff]
    %v352 = vld [vmem:[%s5 + $0x28] sm:$0xff]
    %v353 = vld [vmem:[%s5 + $0x30] sm:$0xff]
    %v354 = vld [vmem:[%s5 + $0x38] sm:$0xff]
    %v355 = vld [vmem:[%s5 + $0x40] sm:$0xff]
    %v356 = vld [vmem:[%s5 + $0x48] sm:$0xff]
    %v357 = vld [vmem:[%s5 + $0x50] sm:$0xf]
    %v358 = vld [vmem:[%s6] sm:$0x1]
    %v360 = vlaneseq
    %v361 = vshrl.u32 %v360, 7
    %v362 = vsub.s32 0, %v361
    %v363 = vrot.slane %v358, %v362
    %vm365 = vcmask 687104
    %v367 = vsel %vm365, %v346, 0
    %vm369 = vcmask 1043456
    %v371 = vsel %vm369, %v357, 0
    %373 = vmatprep.subr.mxu0 0.0
    %374 = vmatpush1.msra.mxu0 %v347
    %375 = vmatprep.subr.mxu0 0.0
    %376 = vmatpush1.msra.mxu0 %v348
    %377 = vmatprep.subr.mxu0 0.0
    %378 = vmatpush1.msra.mxu0 %v349
    %379 = vmatprep.subr.mxu0 0.0
    %380 = vmatpush1.msra.mxu0 %v350
    %381 = vmatprep.subr.mxu0 0.0
    %382 = vmatpush1.msra.mxu0 %v351
    %383 = vmatprep.subr.mxu0 0.0
    %384 = vmatpush1.msra.mxu0 %v352
    %385 = vmatprep.subr.mxu0 0.0
    %386 = vmatpush1.msra.mxu0 %v353
    %387 = vmatprep.subr.mxu0 0.0
    %388 = vmatpush1.msra.mxu0 %v354
    %389 = vmatprep.subr.mxu0 0.0
    %390 = vmatpush1.msra.mxu0 %v355
    %391 = vmatprep.subr.mxu0 0.0
    %392 = vmatpush1.msra.mxu0 %v356
    %393 = vmatprep.subr.mxu0 0.0
    %394 = vmatpush1.msra.mxu0 %v371
    %395 = vmatprep.subr.mxu0 0.0
    %396 = vmatpush1.msra.mxu0 0.0
    %397 = vmatprep.subr.mxu0 0.0
    %398 = vmatpush1.msra.mxu0 0.0
    %399 = vmatprep.subr.mxu0 0.0
    %400 = vmatpush1.msra.mxu0 0.0
    %401 = vmatprep.subr.mxu0 0.0
    %402 = vmatpush1.msra.mxu0 0.0
    %403 = vmatprep.subr.mxu0 0.0
    %404 = vmatpush1.msra.mxu0 0.0
    %405 = vmatprep.subr.mxu0 0.0
    %406 = vmatpush1.msra.mxu0 0.0
    %407 = vmatprep.subr.mxu0 0.0
    %408 = vmatpush1.msra.mxu0 0.0
    %409 = vmatprep.subr.mxu0 0.0
    %410 = vmatpush1.msra.mxu0 0.0
    %411 = vmatprep.subr.mxu0 0.0
    %412 = vmatpush1.msra.mxu0 0.0
    %413 = vmatprep.subr.mxu0 0.0
    %414 = vmatpush1.msra.mxu0 0.0
    %415 = vmatprep.subr.mxu0 0.0
    %416 = vmatpush1.msra.mxu0 0.0
    %417 = vmatprep.subr.mxu0 0.0
    %418 = vmatpush1.msra.mxu0 0.0
    %419 = vmatprep.subr.mxu0 0.0
    %420 = vmatpush1.msra.mxu0 0.0
    %421 = vmatprep.subr.mxu0 0.0
    %422 = vmatpush1.msra.mxu0 0.0
    %423 = vmatprep.subr.mxu0 0.0
    %424 = vmatpush1.msra.mxu0 0.0
    %425 = vmatprep.subr.mxu0 0.0
    %426 = vmatpush1.msra.mxu0 0.0
    %427 = vmatprep.subr.mxu0 0.0
    %428 = vmatpush1.msra.mxu0 0.0
    %429 = vmatprep.subr.mxu0 0.0
    %430 = vmatpush1.msra.mxu0 0.0
    %431 = vmatprep.subr.mxu0 0.0
    %432 = vmatpush1.msra.mxu0 0.0
    %433 = vmatprep.subr.mxu0 0.0
    %434 = vmatpush1.msra.mxu0 0.0
    %435 = vmatprep.subr.mxu0 0.0
    %436 = vmatpush1.msra.mxu0 0.0
    %437 = vmatprep.mubr.f32.mxu0 0.0
    %438 = vmatmul.mubr.f32.gmra.mrb[0].mxu0 %v367
    %v439 = vpop.f32.mrb[0].mxu0
    %v440 = vadd.f32 %v363, %v439
    %v441 = vpop.f32.mrb[0].mxu0
    %442 = vdwg.mxu0
    %vm443 = vcmask 74752
    %444 = vst.msk [vmem:[#allocation2] sm:$0x3] %vm443, %v440
    // Predicated region
    $region30: #{net_forward.5} parent=1 // pred_check
      _
    $region31: #{net_forward.5} parent=1 // pred_check_branch
      %446 = sbr.rel (0) target = $region33
    $region32: #{net_forward.5} parent=1 // pred_region
      %s448 = ssub.s32 32, 32
      %449 = vsyncadd [#allocation3], %s448
      %s451 = sshll.u32 [#allocation2], 4
      %s452 = int_to_ptr.vmem [resolvable:$true] %s451
      %454 = dma.vmem_to_hbm [thread:$0]  %s452, 32, %s7, [#allocation3]
    $region33: #{net_forward.5} parent=1 // pred_fallthru
      _
    // Predicated region
    $region34: #{net_forward.5} parent=1 // pred_check
      _
    $region35: #{net_forward.5} parent=1 // pred_check_branch
      %456 = sbr.rel (0) target = $region37
    $region36: #{net_forward.5} parent=1 // pred_region
      %457 = dma.done [#allocation3], 32
    $region37: #{net_forward.5} parent=1 // pred_fallthru
      _
    %458 = vsyncpa [#allocation3], 1

// kernel: net_forward.4
$region0: #{net_forward.4}
  #allocation0 [shape = 'u32[]', space=smem, size = 0x4, offset = 0x4, fixed_abs, tag = 'smem constant byte address 0x4 - core index']
  #allocation1 [shape = 'u32[144,128]{1,0:T(1,128)}', space=vmem, size = 0x12000, scoped, tag = 'internal scratch']
  %s0 = inlined_call_operand.vmem [shape: f32[4,2,25,150], index: 0, kind: input, shape index: {}]
  %s1 = inlined_call_operand.vmem [shape: f32[150,16], index: 1, kind: input, shape index: {}]
  %s2 = inlined_call_operand.vmem [shape: f32[1,16], index: 2, kind: input, shape index: {}]
  %s3 = inlined_call_operand.vmem [shape: f32[2,25,16], index: 3, kind: output, shape index: {}]
  %s4 = sld [smem:[#allocation0]]
  $region22: #{net_forward.4} parent=0
    _
  %s6 = ssub.s32 1, %s4
  %s7 = scalar_select 0, %s6, %s4
  // Predicated region
  $region2: #{net_forward.4} parent=0 // pred_check
    _
  $region3: #{net_forward.4} parent=0 // pred_check_branch
    %9 = sbr.rel (0) target = $region5
  $region4: #{net_forward.4} parent=0 // pred_region
    _
  $region5: #{net_forward.4} parent=0 // pred_fallthru
    _
  // Predicated region
  $region6: #{net_forward.4} parent=0 // pred_check
    _
  $region7: #{net_forward.4} parent=0 // pred_check_branch
    %11 = sbr.rel (0) target = $region9
  $region8: #{net_forward.4} parent=0 // pred_region
    _
  $region9: #{net_forward.4} parent=0 // pred_fallthru
    _
  // Predicated region
  $region10: #{net_forward.4} parent=0 // pred_check
    _
  $region11: #{net_forward.4} parent=0 // pred_check_branch
    %13 = sbr.rel (0) target = $region13
  $region12: #{net_forward.4} parent=0 // pred_region
    _
  $region13: #{net_forward.4} parent=0 // pred_fallthru
    _
  %v14 = vld [vmem:[%s1] sm:$0xff]
  %v15 = vld [vmem:[%s1 + $0x8] sm:$0xff]
  %v16 = vld [vmem:[%s1 + $0x10] sm:$0xff]
  %v17 = vld [vmem:[%s1 + $0x18] sm:$0xff]
  %v18 = vld [vmem:[%s1 + $0x20] sm:$0xff]
  %v19 = vld [vmem:[%s1 + $0x28] sm:$0xff]
  %v20 = vld [vmem:[%s1 + $0x30] sm:$0xff]
  %v21 = vld [vmem:[%s1 + $0x38] sm:$0xff]
  %v22 = vld [vmem:[%s1 + $0x40] sm:$0xff]
  %v23 = vld [vmem:[%s1 + $0x48] sm:$0xff]
  %v24 = vld [vmem:[%s1 + $0x50] sm:$0xff]
  %v25 = vld [vmem:[%s1 + $0x58] sm:$0xff]
  %v26 = vld [vmem:[%s1 + $0x60] sm:$0xff]
  %v27 = vld [vmem:[%s1 + $0x68] sm:$0xff]
  %v28 = vld [vmem:[%s1 + $0x70] sm:$0xff]
  %v29 = vld [vmem:[%s1 + $0x78] sm:$0xff]
  %v30 = vld [vmem:[%s1 + $0x80] sm:$0xff]
  %v31 = vld [vmem:[%s1 + $0x88] sm:$0xff]
  %v32 = vld [vmem:[%s1 + $0x90] sm:$0x3f]
  %v33 = vld [vmem:[%s2] sm:$0x1]
  %v34 = vld [vmem:[%s0] sm:$0xff]
  %v35 = vld [vmem:[%s0 + $0x8] sm:$0xff]
  %v36 = vld [vmem:[%s0 + $0x10] sm:$0xff]
  %v37 = vld [vmem:[%s0 + $0x18] sm:$0xff]
  %v38 = vld [vmem:[%s0 + $0x20] sm:$0xff]
  %v39 = vld [vmem:[%s0 + $0x28] sm:$0xff]
  %v40 = vld [vmem:[%s0 + $0x30] sm:$0x1]
  %v41 = vld [vmem:[%s0 + $0x38] sm:$0x1]
  %vm42 = vcmask 179200
  %v44 = vsel %vm42, %v35, 0
  %v47 = vsel %vm42, %v37, 0
  %v50 = vsel %vm42, %v39, 0
  %v53 = vsel %vm42, %v41, 0
  %vm55 = vcmask 1045504
  %v57 = vsel %vm55, %v32, 0
  %59 = vmatprep.subr.mxu0 0.0
  %60 = vmatpush1.msra.mxu0 %v14
  %61 = vmatprep.subr.mxu0 0.0
  %62 = vmatpush1.msra.mxu0 %v15
  %63 = vmatprep.subr.mxu0 0.0
  %64 = vmatpush1.msra.mxu0 %v16
  %65 = vmatprep.subr.mxu0 0.0
  %66 = vmatpush1.msra.mxu0 %v17
  %67 = vmatprep.subr.mxu0 0.0
  %68 = vmatpush1.msra.mxu0 %v18
  %69 = vmatprep.subr.mxu0 0.0
  %70 = vmatpush1.msra.mxu0 %v19
  %71 = vmatprep.subr.mxu0 0.0
  %72 = vmatpush1.msra.mxu0 %v20
  %73 = vmatprep.subr.mxu0 0.0
  %74 = vmatpush1.msra.mxu0 %v21
  %75 = vmatprep.subr.mxu0 0.0
  %76 = vmatpush1.msra.mxu0 %v22
  %77 = vmatprep.subr.mxu0 0.0
  %78 = vmatpush1.msra.mxu0 %v23
  %79 = vmatprep.subr.mxu0 0.0
  %80 = vmatpush1.msra.mxu0 %v24
  %81 = vmatprep.subr.mxu0 0.0
  %82 = vmatpush1.msra.mxu0 %v25
  %83 = vmatprep.subr.mxu0 0.0
  %84 = vmatpush1.msra.mxu0 %v26
  %85 = vmatprep.subr.mxu0 0.0
  %86 = vmatpush1.msra.mxu0 %v27
  %87 = vmatprep.subr.mxu0 0.0
  %88 = vmatpush1.msra.mxu0 %v28
  %89 = vmatprep.subr.mxu0 0.0
  %90 = vmatpush1.msra.mxu0 %v29
  %91 = vmatprep.subr.mxu0 0.0
  %92 = vmatpush1.msra.mxu0 %v30
  %93 = vmatprep.subr.mxu0 0.0
  %94 = vmatpush1.msra.mxu0 %v31
  %95 = vmatprep.subr.mxu0 0.0
  %96 = vmatpush1.msra.mxu0 %v57
  %97 = vmatprep.subr.mxu0 0.0
  %98 = vmatpush1.msra.mxu0 0.0
  %99 = vmatprep.subr.mxu0 0.0
  %100 = vmatpush1.msra.mxu0 0.0
  %101 = vmatprep.subr.mxu0 0.0
  %102 = vmatpush1.msra.mxu0 0.0
  %103 = vmatprep.subr.mxu0 0.0
  %104 = vmatpush1.msra.mxu0 0.0
  %105 = vmatprep.subr.mxu0 0.0
  %106 = vmatpush1.msra.mxu0 0.0
  %107 = vmatprep.subr.mxu0 0.0
  %108 = vmatpush1.msra.mxu0 0.0
  %109 = vmatprep.subr.mxu0 0.0
  %110 = vmatpush1.msra.mxu0 0.0
  %111 = vmatprep.subr.mxu0 0.0
  %112 = vmatpush1.msra.mxu0 0.0
  %113 = vmatprep.subr.mxu0 0.0
  %114 = vmatpush1.msra.mxu0 0.0
  %115 = vmatprep.subr.mxu0 0.0
  %116 = vmatpush1.msra.mxu0 0.0
  %117 = vmatprep.subr.mxu0 0.0
  %118 = vmatpush1.msra.mxu0 0.0
  %119 = vmatprep.subr.mxu0 0.0
  %120 = vmatpush1.msra.mxu0 0.0
  %121 = vmatprep.subr.mxu0 0.0
  %122 = vmatpush1.msra.mxu0 0.0
  %123 = vmatprep.mubr.f32.mxu0 %v44
  %124 = vmatmul.mubr.f32.gmra.mrb[0].mxu0 %v34
  %v125 = vpop.f32.mrb[0].mxu0
  %v126 = vadd.f32 0.0, %v125
  %v127 = vpop.f32.mrb[0].mxu0
  %128 = vmatprep.mubr.f32.mxu0 %v47
  %129 = vmatmul.mubr.f32.gmra.mrb[0].mxu0 %v36
  %v130 = vpop.f32.mrb[0].mxu0
  %v131 = vadd.f32 0.0, %v130
  %v132 = vpop.f32.mrb[0].mxu0
  %133 = vmatprep.mubr.f32.mxu0 %v50
  %134 = vmatmul.mubr.f32.gmra.mrb[0].mxu0 %v38
  %v135 = vpop.f32.mrb[0].mxu0
  %v136 = vadd.f32 0.0, %v135
  %v137 = vpop.f32.mrb[0].mxu0
  %138 = vmatprep.mubr.f32.mxu0 %v53
  %139 = vmatmul.mubr.f32.gmra.mrb[0].mxu0 %v40
  %v140 = vpop.f32.mrb[0].mxu0
  %v141 = vadd.f32 0.0, %v140
  %v142 = vpop.f32.mrb[0].mxu0
  %143 = vdwg.mxu0
  %s144 = scalar_lea.vmem %s0, 128
  %v145 = vld [vmem:[%s144] sm:$0xff]
  %v146 = vld [vmem:[%s144 + $0x8] sm:$0xff]
  %v147 = vld [vmem:[%s144 + $0x10] sm:$0xff]
  %v148 = vld [vmem:[%s144 + $0x18] sm:$0xff]
  %v149 = vld [vmem:[%s144 + $0x20] sm:$0xff]
  %v150 = vld [vmem:[%s144 + $0x28] sm:$0xff]
  %v151 = vld [vmem:[%s144 + $0x30] sm:$0x1]
  %v152 = vld [vmem:[%s144 + $0x38] sm:$0x1]
  %v154 = vsel %vm42, %v146, 0
  %v157 = vsel %vm42, %v148, 0
  %v160 = vsel %vm42, %v150, 0
  %v163 = vsel %vm42, %v152, 0
  %165 = vmatprep.subr.mxu0 0.0
  %166 = vmatpush1.msra.mxu0 %v14
  %167 = vmatprep.subr.mxu0 0.0
  %168 = vmatpush1.msra.mxu0 %v15
  %169 = vmatprep.subr.mxu0 0.0
  %170 = vmatpush1.msra.mxu0 %v16
  %171 = vmatprep.subr.mxu0 0.0
  %172 = vmatpush1.msra.mxu0 %v17
  %173 = vmatprep.subr.mxu0 0.0
  %174 = vmatpush1.msra.mxu0 %v18
  %175 = vmatprep.subr.mxu0 0.0
  %176 = vmatpush1.msra.mxu0 %v19
  %177 = vmatprep.subr.mxu0 0.0
  %178 = vmatpush1.msra.mxu0 %v20
  %179 = vmatprep.subr.mxu0 0.0
  %180 = vmatpush1.msra.mxu0 %v21
  %181 = vmatprep.subr.mxu0 0.0
  %182 = vmatpush1.msra.mxu0 %v22
  %183 = vmatprep.subr.mxu0 0.0
  %184 = vmatpush1.msra.mxu0 %v23
  %185 = vmatprep.subr.mxu0 0.0
  %186 = vmatpush1.msra.mxu0 %v24
  %187 = vmatprep.subr.mxu0 0.0
  %188 = vmatpush1.msra.mxu0 %v25
  %189 = vmatprep.subr.mxu0 0.0
  %190 = vmatpush1.msra.mxu0 %v26
  %191 = vmatprep.subr.mxu0 0.0
  %192 = vmatpush1.msra.mxu0 %v27
  %193 = vmatprep.subr.mxu0 0.0
  %194 = vmatpush1.msra.mxu0 %v28
  %195 = vmatprep.subr.mxu0 0.0
  %196 = vmatpush1.msra.mxu0 %v29
  %197 = vmatprep.subr.mxu0 0.0
  %198 = vmatpush1.msra.mxu0 %v30
  %199 = vmatprep.subr.mxu0 0.0
  %200 = vmatpush1.msra.mxu0 %v31
  %201 = vmatprep.subr.mxu0 0.0
  %202 = vmatpush1.msra.mxu0 %v57
  %203 = vmatprep.subr.mxu0 0.0
  %204 = vmatpush1.msra.mxu0 0.0
  %205 = vmatprep.subr.mxu0 0.0
  %206 = vmatpush1.msra.mxu0 0.0
  %207 = vmatprep.subr.mxu0 0.0
  %208 = vmatpush1.msra.mxu0 0.0
  %209 = vmatprep.subr.mxu0 0.0
  %210 = vmatpush1.msra.mxu0 0.0
  %211 = vmatprep.subr.mxu0 0.0
  %212 = vmatpush1.msra.mxu0 0.0
  %213 = vmatprep.subr.mxu0 0.0
  %214 = vmatpush1.msra.mxu0 0.0
  %215 = vmatprep.subr.mxu0 0.0
  %216 = vmatpush1.msra.mxu0 0.0
  %217 = vmatprep.subr.mxu0 0.0
  %218 = vmatpush1.msra.mxu0 0.0
  %219 = vmatprep.subr.mxu0 0.0
  %220 = vmatpush1.msra.mxu0 0.0
  %221 = vmatprep.subr.mxu0 0.0
  %222 = vmatpush1.msra.mxu0 0.0
  %223 = vmatprep.subr.mxu0 0.0
  %224 = vmatpush1.msra.mxu0 0.0
  %225 = vmatprep.subr.mxu0 0.0
  %226 = vmatpush1.msra.mxu0 0.0
  %227 = vmatprep.subr.mxu0 0.0
  %228 = vmatpush1.msra.mxu0 0.0
  %229 = vmatprep.mubr.f32.mxu0 %v154
  %230 = vmatmul.mubr.f32.gmra.mrb[0].mxu0 %v145
  %v231 = vpop.f32.mrb[0].mxu0
  %v232 = vadd.f32 0.0, %v231
  %v233 = vpop.f32.mrb[0].mxu0
  %234 = vmatprep.mubr.f32.mxu0 %v157
  %235 = vmatmul.mubr.f32.gmra.mrb[0].mxu0 %v147
  %v236 = vpop.f32.mrb[0].mxu0
  %v237 = vadd.f32 0.0, %v236
  %v238 = vpop.f32.mrb[0].mxu0
  %239 = vmatprep.mubr.f32.mxu0 %v160
  %240 = vmatmul.mubr.f32.gmra.mrb[0].mxu0 %v149
  %v241 = vpop.f32.mrb[0].mxu0
  %v242 = vadd.f32 0.0, %v241
  %v243 = vpop.f32.mrb[0].mxu0
  %244 = vmatprep.mubr.f32.mxu0 %v163
  %245 = vmatmul.mubr.f32.gmra.mrb[0].mxu0 %v151
  %v246 = vpop.f32.mrb[0].mxu0
  %v247 = vadd.f32 0.0, %v246
  %v248 = vpop.f32.mrb[0].mxu0
  %249 = vdwg.mxu0
  %v250 = vmax.f32 %v126, %v232
  %v251 = vmax.f32 %v131, %v237
  %v252 = vmax.f32 %v136, %v242
  %v253 = vmax.f32 %v141, %v247
  %s254 = scalar_lea.vmem %s0, 256
  %v255 = vld [vmem:[%s254] sm:$0xff]
  %v256 = vld [vmem:[%s254 + $0x8] sm:$0xff]
  %v257 = vld [vmem:[%s254 + $0x10] sm:$0xff]
  %v258 = vld [vmem:[%s254 + $0x18] sm:$0xff]
  %v259 = vld [vmem:[%s254 + $0x20] sm:$0xff]
  %v260 = vld [vmem:[%s254 + $0x28] sm:$0xff]
  %v261 = vld [vmem:[%s254 + $0x30] sm:$0x1]
  %v262 = vld [vmem:[%s254 + $0x38] sm:$0x1]
  %v264 = vsel %vm42, %v256, 0
  %v267 = vsel %vm42, %v258, 0
  %v270 = vsel %vm42, %v260, 0
  %v273 = vsel %vm42, %v262, 0
  %275 = vmatprep.subr.mxu0 0.0
  %276 = vmatpush1.msra.mxu0 %v14
  %277 = vmatprep.subr.mxu0 0.0
  %278 = vmatpush1.msra.mxu0 %v15
  %279 = vmatprep.subr.mxu0 0.0
  %280 = vmatpush1.msra.mxu0 %v16
  %281 = vmatprep.subr.mxu0 0.0
  %282 = vmatpush1.msra.mxu0 %v17
  %283 = vmatprep.subr.mxu0 0.0
  %284 = vmatpush1.msra.mxu0 %v18
  %285 = vmatprep.subr.mxu0 0.0
  %286 = vmatpush1.msra.mxu0 %v19
  %287 = vmatprep.subr.mxu0 0.0
  %288 = vmatpush1.msra.mxu0 %v20
  %289 = vmatprep.subr.mxu0 0.0
  %290 = vmatpush1.msra.mxu0 %v21
  %291 = vmatprep.subr.mxu0 0.0
  %292 = vmatpush1.msra.mxu0 %v22
  %293 = vmatprep.subr.mxu0 0.0
  %294 = vmatpush1.msra.mxu0 %v23
  %295 = vmatprep.subr.mxu0 0.0
  %296 = vmatpush1.msra.mxu0 %v24
  %297 = vmatprep.subr.mxu0 0.0
  %298 = vmatpush1.msra.mxu0 %v25
  %299 = vmatprep.subr.mxu0 0.0
  %300 = vmatpush1.msra.mxu0 %v26
  %301 = vmatprep.subr.mxu0 0.0
  %302 = vmatpush1.msra.mxu0 %v27
  %303 = vmatprep.subr.mxu0 0.0
  %304 = vmatpush1.msra.mxu0 %v28
  %305 = vmatprep.subr.mxu0 0.0
  %306 = vmatpush1.msra.mxu0 %v29
  %307 = vmatprep.subr.mxu0 0.0
  %308 = vmatpush1.msra.mxu0 %v30
  %309 = vmatprep.subr.mxu0 0.0
  %310 = vmatpush1.msra.mxu0 %v31
  %311 = vmatprep.subr.mxu0 0.0
  %312 = vmatpush1.msra.mxu0 %v57
  %313 = vmatprep.subr.mxu0 0.0
  %314 = vmatpush1.msra.mxu0 0.0
  %315 = vmatprep.subr.mxu0 0.0
  %316 = vmatpush1.msra.mxu0 0.0
  %317 = vmatprep.subr.mxu0 0.0
  %318 = vmatpush1.msra.mxu0 0.0
  %319 = vmatprep.subr.mxu0 0.0
  %320 = vmatpush1.msra.mxu0 0.0
  %321 = vmatprep.subr.mxu0 0.0
  %322 = vmatpush1.msra.mxu0 0.0
  %323 = vmatprep.subr.mxu0 0.0
  %324 = vmatpush1.msra.mxu0 0.0
  %325 = vmatprep.subr.mxu0 0.0
  %326 = vmatpush1.msra.mxu0 0.0
  %327 = vmatprep.subr.mxu0 0.0
  %328 = vmatpush1.msra.mxu0 0.0
  %329 = vmatprep.subr.mxu0 0.0
  %330 = vmatpush1.msra.mxu0 0.0
  %331 = vmatprep.subr.mxu0 0.0
  %332 = vmatpush1.msra.mxu0 0.0
  %333 = vmatprep.subr.mxu0 0.0
  %334 = vmatpush1.msra.mxu0 0.0
  %335 = vmatprep.subr.mxu0 0.0
  %336 = vmatpush1.msra.mxu0 0.0
  %337 = vmatprep.subr.mxu0 0.0
  %338 = vmatpush1.msra.mxu0 0.0
  %339 = vmatprep.mubr.f32.mxu0 %v264
  %340 = vmatmul.mubr.f32.gmra.mrb[0].mxu0 %v255
  %v341 = vpop.f32.mrb[0].mxu0
  %v342 = vadd.f32 0.0, %v341
  %v343 = vpop.f32.mrb[0].mxu0
  %344 = vmatprep.mubr.f32.mxu0 %v267
  %345 = vmatmul.mubr.f32.gmra.mrb[0].mxu0 %v257
  %v346 = vpop.f32.mrb[0].mxu0
  %v347 = vadd.f32 0.0, %v346
  %v348 = vpop.f32.mrb[0].mxu0
  %349 = vmatprep.mubr.f32.mxu0 %v270
  %350 = vmatmul.mubr.f32.gmra.mrb[0].mxu0 %v259
  %v351 = vpop.f32.mrb[0].mxu0
  %v352 = vadd.f32 0.0, %v351
  %v353 = vpop.f32.mrb[0].mxu0
  %354 = vmatprep.mubr.f32.mxu0 %v273
  %355 = vmatmul.mubr.f32.gmra.mrb[0].mxu0 %v261
  %v356 = vpop.f32.mrb[0].mxu0
  %v357 = vadd.f32 0.0, %v356
  %v358 = vpop.f32.mrb[0].mxu0
  %359 = vdwg.mxu0
  %v360 = vmax.f32 %v250, %v342
  %v361 = vmax.f32 %v251, %v347
  %v362 = vmax.f32 %v252, %v352
  %v363 = vmax.f32 %v253, %v357
  %s364 = scalar_lea.vmem %s0, 384
  %v365 = vld [vmem:[%s364] sm:$0xff]
  %v366 = vld [vmem:[%s364 + $0x8] sm:$0xff]
  %v367 = vld [vmem:[%s364 + $0x10] sm:$0xff]
  %v368 = vld [vmem:[%s364 + $0x18] sm:$0xff]
  %v369 = vld [vmem:[%s364 + $0x20] sm:$0xff]
  %v370 = vld [vmem:[%s364 + $0x28] sm:$0xff]
  %v371 = vld [vmem:[%s364 + $0x30] sm:$0x1]
  %v372 = vld [vmem:[%s364 + $0x38] sm:$0x1]
  %v374 = vsel %vm42, %v366, 0
  %v377 = vsel %vm42, %v368, 0
  %v380 = vsel %vm42, %v370, 0
  %v383 = vsel %vm42, %v372, 0
  %385 = vmatprep.subr.mxu0 0.0
  %386 = vmatpush1.msra.mxu0 %v14
  %387 = vmatprep.subr.mxu0 0.0
  %388 = vmatpush1.msra.mxu0 %v15
  %389 = vmatprep.subr.mxu0 0.0
  %390 = vmatpush1.msra.mxu0 %v16
  %391 = vmatprep.subr.mxu0 0.0
  %392 = vmatpush1.msra.mxu0 %v17
  %393 = vmatprep.subr.mxu0 0.0
  %394 = vmatpush1.msra.mxu0 %v18
  %395 = vmatprep.subr.mxu0 0.0
  %396 = vmatpush1.msra.mxu0 %v19
  %397 = vmatprep.subr.mxu0 0.0
  %398 = vmatpush1.msra.mxu0 %v20
  %399 = vmatprep.subr.mxu0 0.0
  %400 = vmatpush1.msra.mxu0 %v21
  %401 = vmatprep.subr.mxu0 0.0
  %402 = vmatpush1.msra.mxu0 %v22
  %403 = vmatprep.subr.mxu0 0.0
  %404 = vmatpush1.msra.mxu0 %v23
  %405 = vmatprep.subr.mxu0 0.0
  %406 = vmatpush1.msra.mxu0 %v24
  %407 = vmatprep.subr.mxu0 0.0
  %408 = vmatpush1.msra.mxu0 %v25
  %409 = vmatprep.subr.mxu0 0.0
  %410 = vmatpush1.msra.mxu0 %v26
  %411 = vmatprep.subr.mxu0 0.0
  %412 = vmatpush1.msra.mxu0 %v27
  %413 = vmatprep.subr.mxu0 0.0
  %414 = vmatpush1.msra.mxu0 %v28
  %415 = vmatprep.subr.mxu0 0.0
  %416 = vmatpush1.msra.mxu0 %v29
  %417 = vmatprep.subr.mxu0 0.0
  %418 = vmatpush1.msra.mxu0 %v30
  %419 = vmatprep.subr.mxu0 0.0
  %420 = vmatpush1.msra.mxu0 %v31
  %421 = vmatprep.subr.mxu0 0.0
  %422 = vmatpush1.msra.mxu0 %v57
  %423 = vmatprep.subr.mxu0 0.0
  %424 = vmatpush1.msra.mxu0 0.0
  %425 = vmatprep.subr.mxu0 0.0
  %426 = vmatpush1.msra.mxu0 0.0
  %427 = vmatprep.subr.mxu0 0.0
  %428 = vmatpush1.msra.mxu0 0.0
  %429 = vmatprep.subr.mxu0 0.0
  %430 = vmatpush1.msra.mxu0 0.0
  %431 = vmatprep.subr.mxu0 0.0
  %432 = vmatpush1.msra.mxu0 0.0
  %433 = vmatprep.subr.mxu0 0.0
  %434 = vmatpush1.msra.mxu0 0.0
  %435 = vmatprep.subr.mxu0 0.0
  %436 = vmatpush1.msra.mxu0 0.0
  %437 = vmatprep.subr.mxu0 0.0
  %438 = vmatpush1.msra.mxu0 0.0
  %439 = vmatprep.subr.mxu0 0.0
  %440 = vmatpush1.msra.mxu0 0.0
  %441 = vmatprep.subr.mxu0 0.0
  %442 = vmatpush1.msra.mxu0 0.0
  %443 = vmatprep.subr.mxu0 0.0
  %444 = vmatpush1.msra.mxu0 0.0
  %445 = vmatprep.subr.mxu0 0.0
  %446 = vmatpush1.msra.mxu0 0.0
  %447 = vmatprep.subr.mxu0 0.0
  %448 = vmatpush1.msra.mxu0 0.0
  %449 = vmatprep.mubr.f32.mxu0 %v374
  %450 = vmatmul.mubr.f32.gmra.mrb[0].mxu0 %v365
  %v451 = vpop.f32.mrb[0].mxu0
  %v452 = vadd.f32 0.0, %v451
  %v453 = vpop.f32.mrb[0].mxu0
  %454 = vmatprep.mubr.f32.mxu0 %v377
  %455 = vmatmul.mubr.f32.gmra.mrb[0].mxu0 %v367
  %v456 = vpop.f32.mrb[0].mxu0
  %v457 = vadd.f32 0.0, %v456
  %v458 = vpop.f32.mrb[0].mxu0
  %459 = vmatprep.mubr.f32.mxu0 %v380
  %460 = vmatmul.mubr.f32.gmra.mrb[0].mxu0 %v369
  %v461 = vpop.f32.mrb[0].mxu0
  %v462 = vadd.f32 0.0, %v461
  %v463 = vpop.f32.mrb[0].mxu0
  %464 = vmatprep.mubr.f32.mxu0 %v383
  %465 = vmatmul.mubr.f32.gmra.mrb[0].mxu0 %v371
  %v466 = vpop.f32.mrb[0].mxu0
  %v467 = vadd.f32 0.0, %v466
  %v468 = vpop.f32.mrb[0].mxu0
  %469 = vdwg.mxu0
  %v470 = vmax.f32 %v360, %v452
  %v471 = vmax.f32 %v361, %v457
  %v472 = vmax.f32 %v362, %v462
  %v473 = vmax.f32 %v363, %v467
  %v475 = vlaneseq
  %v476 = vshrl.u32 %v475, 7
  %v477 = vsub.s32 0, %v476
  %v478 = vrot.slane %v33, %v477
  %v480 = vadd.f32 %v470, %v478
  %v481 = vadd.f32 %v471, %v478
  %v482 = vadd.f32 %v472, %v478
  %v483 = vadd.f32 %v473, %v478
  %v484 = vmax.f32 %v480, 0.0
  %v485 = vmax.f32 %v481, 0.0
  %v486 = vmax.f32 %v482, 0.0
  %v487 = vmax.f32 %v483, 0.0
  %vm488 = vcmask 130048
  %489 = vst.msk [vmem:[%s3] sm:$0xff] %vm488, %v484
  %490 = vst.msk [vmem:[%s3 + $0x8] sm:$0xff] %vm488, %v485
  %491 = vst.msk [vmem:[%s3 + $0x10] sm:$0xff] %vm488, %v486
  %vm492 = vcmask 122880
  %493 = vst.msk [vmem:[%s3 + $0x18] sm:$0x1] %vm492, %v487
  %s494 = scalar_lea.vmem %s0, 64
  %v495 = vld [vmem:[%s494] sm:$0xff]
  %v496 = vld [vmem:[%s494 + $0x8] sm:$0xff]
  %v497 = vld [vmem:[%s494 + $0x10] sm:$0xff]
  %v498 = vld [vmem:[%s494 + $0x18] sm:$0xff]
  %v499 = vld [vmem:[%s494 + $0x20] sm:$0xff]
  %v500 = vld [vmem:[%s494 + $0x28] sm:$0xff]
  %v501 = vld [vmem:[%s494 + $0x30] sm:$0x1]
  %v502 = vld [vmem:[%s494 + $0x38] sm:$0x1]
  %v504 = vsel %vm42, %v496, 0
  %v507 = vsel %vm42, %v498, 0
  %v510 = vsel %vm42, %v500, 0
  %v513 = vsel %vm42, %v502, 0
  %515 = vmatprep.subr.mxu0 0.0
  %516 = vmatpush1.msra.mxu0 %v14
  %517 = vmatprep.subr.mxu0 0.0
  %518 = vmatpush1.msra.mxu0 %v15
  %519 = vmatprep.subr.mxu0 0.0
  %520 = vmatpush1.msra.mxu0 %v16
  %521 = vmatprep.subr.mxu0 0.0
  %522 = vmatpush1.msra.mxu0 %v17
  %523 = vmatprep.subr.mxu0 0.0
  %524 = vmatpush1.msra.mxu0 %v18
  %525 = vmatprep.subr.mxu0 0.0
  %526 = vmatpush1.msra.mxu0 %v19
  %527 = vmatprep.subr.mxu0 0.0
  %528 = vmatpush1.msra.mxu0 %v20
  %529 = vmatprep.subr.mxu0 0.0
  %530 = vmatpush1.msra.mxu0 %v21
  %531 = vmatprep.subr.mxu0 0.0
  %532 = vmatpush1.msra.mxu0 %v22
  %533 = vmatprep.subr.mxu0 0.0
  %534 = vmatpush1.msra.mxu0 %v23
  %535 = vmatprep.subr.mxu0 0.0
  %536 = vmatpush1.msra.mxu0 %v24
  %537 = vmatprep.subr.mxu0 0.0
  %538 = vmatpush1.msra.mxu0 %v25
  %539 = vmatprep.subr.mxu0 0.0
  %540 = vmatpush1.msra.mxu0 %v26
  %541 = vmatprep.subr.mxu0 0.0
  %542 = vmatpush1.msra.mxu0 %v27
  %543 = vmatprep.subr.mxu0 0.0
  %544 = vmatpush1.msra.mxu0 %v28
  %545 = vmatprep.subr.mxu0 0.0
  %546 = vmatpush1.msra.mxu0 %v29
  %547 = vmatprep.subr.mxu0 0.0
  %548 = vmatpush1.msra.mxu0 %v30
  %549 = vmatprep.subr.mxu0 0.0
  %550 = vmatpush1.msra.mxu0 %v31
  %551 = vmatprep.subr.mxu0 0.0
  %552 = vmatpush1.msra.mxu0 %v57
  %553 = vmatprep.subr.mxu0 0.0
  %554 = vmatpush1.msra.mxu0 0.0
  %555 = vmatprep.subr.mxu0 0.0
  %556 = vmatpush1.msra.mxu0 0.0
  %557 = vmatprep.subr.mxu0 0.0
  %558 = vmatpush1.msra.mxu0 0.0
  %559 = vmatprep.subr.mxu0 0.0
  %560 = vmatpush1.msra.mxu0 0.0
  %561 = vmatprep.subr.mxu0 0.0
  %562 = vmatpush1.msra.mxu0 0.0
  %563 = vmatprep.subr.mxu0 0.0
  %564 = vmatpush1.msra.mxu0 0.0
  %565 = vmatprep.subr.mxu0 0.0
  %566 = vmatpush1.msra.mxu0 0.0
  %567 = vmatprep.subr.mxu0 0.0
  %568 = vmatpush1.msra.mxu0 0.0
  %569 = vmatprep.subr.mxu0 0.0
  %570 = vmatpush1.msra.mxu0 0.0
  %571 = vmatprep.subr.mxu0 0.0
  %572 = vmatpush1.msra.mxu0 0.0
  %573 = vmatprep.subr.mxu0 0.0
  %574 = vmatpush1.msra.mxu0 0.0
  %575 = vmatprep.subr.mxu0 0.0
  %576 = vmatpush1.msra.mxu0 0.0
  %577 = vmatprep.subr.mxu0 0.0
  %578 = vmatpush1.msra.mxu0 0.0
  %579 = vmatprep.mubr.f32.mxu0 %v504
  %580 = vmatmul.mubr.f32.gmra.mrb[0].mxu0 %v495
  %v581 = vpop.f32.mrb[0].mxu0
  %v582 = vadd.f32 0.0, %v581
  %v583 = vpop.f32.mrb[0].mxu0
  %584 = vmatprep.mubr.f32.mxu0 %v507
  %585 = vmatmul.mubr.f32.gmra.mrb[0].mxu0 %v497
  %v586 = vpop.f32.mrb[0].mxu0
  %v587 = vadd.f32 0.0, %v586
  %v588 = vpop.f32.mrb[0].mxu0
  %589 = vmatprep.mubr.f32.mxu0 %v510
  %590 = vmatmul.mubr.f32.gmra.mrb[0].mxu0 %v499
  %v591 = vpop.f32.mrb[0].mxu0
  %v592 = vadd.f32 0.0, %v591
  %v593 = vpop.f32.mrb[0].mxu0
  %594 = vmatprep.mubr.f32.mxu0 %v513
  %595 = vmatmul.mubr.f32.gmra.mrb[0].mxu0 %v501
  %v596 = vpop.f32.mrb[0].mxu0
  %v597 = vadd.f32 0.0, %v596
  %v598 = vpop.f32.mrb[0].mxu0
  %599 = vdwg.mxu0
  %s600 = scalar_lea.vmem %s0, 192
  %v601 = vld [vmem:[%s600] sm:$0xff]
  %v602 = vld [vmem:[%s600 + $0x8] sm:$0xff]
  %v603 = vld [vmem:[%s600 + $0x10] sm:$0xff]
  %v604 = vld [vmem:[%s600 + $0x18] sm:$0xff]
  %v605 = vld [vmem:[%s600 + $0x20] sm:$0xff]
  %v606 = vld [vmem:[%s600 + $0x28] sm:$0xff]
  %v607 = vld [vmem:[%s600 + $0x30] sm:$0x1]
  %v608 = vld [vmem:[%s600 + $0x38] sm:$0x1]
  %v610 = vsel %vm42, %v602, 0
  %v613 = vsel %vm42, %v604, 0
  %v616 = vsel %vm42, %v606, 0
  %v619 = vsel %vm42, %v608, 0
  %621 = vmatprep.subr.mxu0 0.0
  %622 = vmatpush1.msra.mxu0 %v14
  %623 = vmatprep.subr.mxu0 0.0
  %624 = vmatpush1.msra.mxu0 %v15
  %625 = vmatprep.subr.mxu0 0.0
  %626 = vmatpush1.msra.mxu0 %v16
  %627 = vmatprep.subr.mxu0 0.0
  %628 = vmatpush1.msra.mxu0 %v17
  %629 = vmatprep.subr.mxu0 0.0
  %630 = vmatpush1.msra.mxu0 %v18
  %631 = vmatprep.subr.mxu0 0.0
  %632 = vmatpush1.msra.mxu0 %v19
  %633 = vmatprep.subr.mxu0 0.0
  %634 = vmatpush1.msra.mxu0 %v20
  %635 = vmatprep.subr.mxu0 0.0
  %636 = vmatpush1.msra.mxu0 %v21
  %637 = vmatprep.subr.mxu0 0.0
  %638 = vmatpush1.msra.mxu0 %v22
  %639 = vmatprep.subr.mxu0 0.0
  %640 = vmatpush1.msra.mxu0 %v23
  %641 = vmatprep.subr.mxu0 0.0
  %642 = vmatpush1.msra.mxu0 %v24
  %643 = vmatprep.subr.mxu0 0.0
  %644 = vmatpush1.msra.mxu0 %v25
  %645 = vmatprep.subr.mxu0 0.0
  %646 = vmatpush1.msra.mxu0 %v26
  %647 = vmatprep.subr.mxu0 0.0
  %648 = vmatpush1.msra.mxu0 %v27
  %649 = vmatprep.subr.mxu0 0.0
  %650 = vmatpush1.msra.mxu0 %v28
  %651 = vmatprep.subr.mxu0 0.0
  %652 = vmatpush1.msra.mxu0 %v29
  %653 = vmatprep.subr.mxu0 0.0
  %654 = vmatpush1.msra.mxu0 %v30
  %655 = vmatprep.subr.mxu0 0.0
  %656 = vmatpush1.msra.mxu0 %v31
  %657 = vmatprep.subr.mxu0 0.0
  %658 = vmatpush1.msra.mxu0 %v57
  %659 = vmatprep.subr.mxu0 0.0
  %660 = vmatpush1.msra.mxu0 0.0
  %661 = vmatprep.subr.mxu0 0.0
  %662 = vmatpush1.msra.mxu0 0.0
  %663 = vmatprep.subr.mxu0 0.0
  %664 = vmatpush1.msra.mxu0 0.0
  %665 = vmatprep.subr.mxu0 0.0
  %666 = vmatpush1.msra.mxu0 0.0
  %667 = vmatprep.subr.mxu0 0.0
  %668 = vmatpush1.msra.mxu0 0.0
  %669 = vmatprep.subr.mxu0 0.0
  %670 = vmatpush1.msra.mxu0 0.0
  %671 = vmatprep.subr.mxu0 0.0
  %672 = vmatpush1.msra.mxu0 0.0
  %673 = vmatprep.subr.mxu0 0.0
  %674 = vmatpush1.msra.mxu0 0.0
  %675 = vmatprep.subr.mxu0 0.0
  %676 = vmatpush1.msra.mxu0 0.0
  %677 = vmatprep.subr.mxu0 0.0
  %678 = vmatpush1.msra.mxu0 0.0
  %679 = vmatprep.subr.mxu0 0.0
  %680 = vmatpush1.msra.mxu0 0.0
  %681 = vmatprep.subr.mxu0 0.0
  %682 = vmatpush1.msra.mxu0 0.0
  %683 = vmatprep.subr.mxu0 0.0
  %684 = vmatpush1.msra.mxu0 0.0
  %685 = vmatprep.mubr.f32.mxu0 %v610
  %686 = vmatmul.mubr.f32.gmra.mrb[0].mxu0 %v601
  %v687 = vpop.f32.mrb[0].mxu0
  %v688 = vadd.f32 0.0, %v687
  %v689 = vpop.f32.mrb[0].mxu0
  %690 = vmatprep.mubr.f32.mxu0 %v613
  %691 = vmatmul.mubr.f32.gmra.mrb[0].mxu0 %v603
  %v692 = vpop.f32.mrb[0].mxu0
  %v693 = vadd.f32 0.0, %v692
  %v694 = vpop.f32.mrb[0].mxu0
  %695 = vmatprep.mubr.f32.mxu0 %v616
  %696 = vmatmul.mubr.f32.gmra.mrb[0].mxu0 %v605
  %v697 = vpop.f32.mrb[0].mxu0
  %v698 = vadd.f32 0.0, %v697
  %v699 = vpop.f32.mrb[0].mxu0
  %700 = vmatprep.mubr.f32.mxu0 %v619
  %701 = vmatmul.mubr.f32.gmra.mrb[0].mxu0 %v607
  %v702 = vpop.f32.mrb[0].mxu0
  %v703 = vadd.f32 0.0, %v702
  %v704 = vpop.f32.mrb[0].mxu0
  %705 = vdwg.mxu0
  %v706 = vmax.f32 %v582, %v688
  %v707 = vmax.f32 %v587, %v693
  %v708 = vmax.f32 %v592, %v698
  %v709 = vmax.f32 %v597, %v703
  %s710 = scalar_lea.vmem %s0, 320
  %v711 = vld [vmem:[%s710] sm:$0xff]
  %v712 = vld [vmem:[%s710 + $0x8] sm:$0xff]
  %v713 = vld [vmem:[%s710 + $0x10] sm:$0xff]
  %v714 = vld [vmem:[%s710 + $0x18] sm:$0xff]
  %v715 = vld [vmem:[%s710 + $0x20] sm:$0xff]
  %v716 = vld [vmem:[%s710 + $0x28] sm:$0xff]
  %v717 = vld [vmem:[%s710 + $0x30] sm:$0x1]
  %v718 = vld [vmem:[%s710 + $0x38] sm:$0x1]
  %v720 = vsel %vm42, %v712, 0
  %v723 = vsel %vm42, %v714, 0
  %v726 = vsel %vm42, %v716, 0
  %v729 = vsel %vm42, %v718, 0
  %731 = vmatprep.subr.mxu0 0.0
  %732 = vmatpush1.msra.mxu0 %v14
  %733 = vmatprep.subr.mxu0 0.0
  %734 = vmatpush1.msra.mxu0 %v15
  %735 = vmatprep.subr.mxu0 0.0
  %736 = vmatpush1.msra.mxu0 %v16
  %737 = vmatprep.subr.mxu0 0.0
  %738 = vmatpush1.msra.mxu0 %v17
  %739 = vmatprep.subr.mxu0 0.0
  %740 = vmatpush1.msra.mxu0 %v18
  %741 = vmatprep.subr.mxu0 0.0
  %742 = vmatpush1.msra.mxu0 %v19
  %743 = vmatprep.subr.mxu0 0.0
  %744 = vmatpush1.msra.mxu0 %v20
  %745 = vmatprep.subr.mxu0 0.0
  %746 = vmatpush1.msra.mxu0 %v21
  %747 = vmatprep.subr.mxu0 0.0
  %748 = vmatpush1.msra.mxu0 %v22
  %749 = vmatprep.subr.mxu0 0.0
  %750 = vmatpush1.msra.mxu0 %v23
  %751 = vmatprep.subr.mxu0 0.0
  %752 = vmatpush1.msra.mxu0 %v24
  %753 = vmatprep.subr.mxu0 0.0
  %754 = vmatpush1.msra.mxu0 %v25
  %755 = vmatprep.subr.mxu0 0.0
  %756 = vmatpush1.msra.mxu0 %v26
  %757 = vmatprep.subr.mxu0 0.0
  %758 = vmatpush1.msra.mxu0 %v27
  %759 = vmatprep.subr.mxu0 0.0
  %760 = vmatpush1.msra.mxu0 %v28
  %761 = vmatprep.subr.mxu0 0.0
  %762 = vmatpush1.msra.mxu0 %v29
  %763 = vmatprep.subr.mxu0 0.0
  %764 = vmatpush1.msra.mxu0 %v30
  %765 = vmatprep.subr.mxu0 0.0
  %766 = vmatpush1.msra.mxu0 %v31
  %767 = vmatprep.subr.mxu0 0.0
  %768 = vmatpush1.msra.mxu0 %v57
  %769 = vmatprep.subr.mxu0 0.0
  %770 = vmatpush1.msra.mxu0 0.0
  %771 = vmatprep.subr.mxu0 0.0
  %772 = vmatpush1.msra.mxu0 0.0
  %773 = vmatprep.subr.mxu0 0.0
  %774 = vmatpush1.msra.mxu0 0.0
  %775 = vmatprep.subr.mxu0 0.0
  %776 = vmatpush1.msra.mxu0 0.0
  %777 = vmatprep.subr.mxu0 0.0
  %778 = vmatpush1.msra.mxu0 0.0
  %779 = vmatprep.subr.mxu0 0.0
  %780 = vmatpush1.msra.mxu0 0.0
  %781 = vmatprep.subr.mxu0 0.0
  %782 = vmatpush1.msra.mxu0 0.0
  %783 = vmatprep.subr.mxu0 0.0
  %784 = vmatpush1.msra.mxu0 0.0
  %785 = vmatprep.subr.mxu0 0.0
  %786 = vmatpush1.msra.mxu0 0.0
  %787 = vmatprep.subr.mxu0 0.0
  %788 = vmatpush1.msra.mxu0 0.0
  %789 = vmatprep.subr.mxu0 0.0
  %790 = vmatpush1.msra.mxu0 0.0
  %791 = vmatprep.subr.mxu0 0.0
  %792 = vmatpush1.msra.mxu0 0.0
  %793 = vmatprep.subr.mxu0 0.0
  %794 = vmatpush1.msra.mxu0 0.0
  %795 = vmatprep.mubr.f32.mxu0 %v720
  %796 = vmatmul.mubr.f32.gmra.mrb[0].mxu0 %v711
  %v797 = vpop.f32.mrb[0].mxu0
  %v798 = vadd.f32 0.0, %v797
  %v799 = vpop.f32.mrb[0].mxu0
  %800 = vmatprep.mubr.f32.mxu0 %v723
  %801 = vmatmul.mubr.f32.gmra.mrb[0].mxu0 %v713
  %v802 = vpop.f32.mrb[0].mxu0
  %v803 = vadd.f32 0.0, %v802
  %v804 = vpop.f32.mrb[0].mxu0
  %805 = vmatprep.mubr.f32.mxu0 %v726
  %806 = vmatmul.mubr.f32.gmra.mrb[0].mxu0 %v715
  %v807 = vpop.f32.mrb[0].mxu0
  %v808 = vadd.f32 0.0, %v807
  %v809 = vpop.f32.mrb[0].mxu0
  %810 = vmatprep.mubr.f32.mxu0 %v729
  %811 = vmatmul.mubr.f32.gmra.mrb[0].mxu0 %v717
  %v812 = vpop.f32.mrb[0].mxu0
  %v813 = vadd.f32 0.0, %v812
  %v814 = vpop.f32.mrb[0].mxu0
  %815 = vdwg.mxu0
  %v816 = vmax.f32 %v706, %v798
  %v817 = vmax.f32 %v707, %v803
  %v818 = vmax.f32 %v708, %v808
  %v819 = vmax.f32 %v709, %v813
  %s820 = scalar_lea.vmem %s0, 448
  %v821 = vld [vmem:[%s820] sm:$0xff]
  %v822 = vld [vmem:[%s820 + $0x8] sm:$0xff]
  %v823 = vld [vmem:[%s820 + $0x10] sm:$0xff]
  %v824 = vld [vmem:[%s820 + $0x18] sm:$0xff]
  %v825 = vld [vmem:[%s820 + $0x20] sm:$0xff]
  %v826 = vld [vmem:[%s820 + $0x28] sm:$0xff]
  %v827 = vld [vmem:[%s820 + $0x30] sm:$0x1]
  %v828 = vld [vmem:[%s820 + $0x38] sm:$0x1]
  %v830 = vsel %vm42, %v822, 0
  %v833 = vsel %vm42, %v824, 0
  %v836 = vsel %vm42, %v826, 0
  %v839 = vsel %vm42, %v828, 0
  %841 = vmatprep.subr.mxu0 0.0
  %842 = vmatpush1.msra.mxu0 %v14
  %843 = vmatprep.subr.mxu0 0.0
  %844 = vmatpush1.msra.mxu0 %v15
  %845 = vmatprep.subr.mxu0 0.0
  %846 = vmatpush1.msra.mxu0 %v16
  %847 = vmatprep.subr.mxu0 0.0
  %848 = vmatpush1.msra.mxu0 %v17
  %849 = vmatprep.subr.mxu0 0.0
  %850 = vmatpush1.msra.mxu0 %v18
  %851 = vmatprep.subr.mxu0 0.0
  %852 = vmatpush1.msra.mxu0 %v19
  %853 = vmatprep.subr.mxu0 0.0
  %854 = vmatpush1.msra.mxu0 %v20
  %855 = vmatprep.subr.mxu0 0.0
  %856 = vmatpush1.msra.mxu0 %v21
  %857 = vmatprep.subr.mxu0 0.0
  %858 = vmatpush1.msra.mxu0 %v22
  %859 = vmatprep.subr.mxu0 0.0
  %860 = vmatpush1.msra.mxu0 %v23
  %861 = vmatprep.subr.mxu0 0.0
  %862 = vmatpush1.msra.mxu0 %v24
  %863 = vmatprep.subr.mxu0 0.0
  %864 = vmatpush1.msra.mxu0 %v25
  %865 = vmatprep.subr.mxu0 0.0
  %866 = vmatpush1.msra.mxu0 %v26
  %867 = vmatprep.subr.mxu0 0.0
  %868 = vmatpush1.msra.mxu0 %v27
  %869 = vmatprep.subr.mxu0 0.0
  %870 = vmatpush1.msra.mxu0 %v28
  %871 = vmatprep.subr.mxu0 0.0
  %872 = vmatpush1.msra.mxu0 %v29
  %873 = vmatprep.subr.mxu0 0.0
  %874 = vmatpush1.msra.mxu0 %v30
  %875 = vmatprep.subr.mxu0 0.0
  %876 = vmatpush1.msra.mxu0 %v31
  %877 = vmatprep.subr.mxu0 0.0
  %878 = vmatpush1.msra.mxu0 %v57
  %879 = vmatprep.subr.mxu0 0.0
  %880 = vmatpush1.msra.mxu0 0.0
  %881 = vmatprep.subr.mxu0 0.0
  %882 = vmatpush1.msra.mxu0 0.0
  %883 = vmatprep.subr.mxu0 0.0
  %884 = vmatpush1.msra.mxu0 0.0
  %885 = vmatprep.subr.mxu0 0.0
  %886 = vmatpush1.msra.mxu0 0.0
  %887 = vmatprep.subr.mxu0 0.0
  %888 = vmatpush1.msra.mxu0 0.0
  %889 = vmatprep.subr.mxu0 0.0
  %890 = vmatpush1.msra.mxu0 0.0
  %891 = vmatprep.subr.mxu0 0.0
  %892 = vmatpush1.msra.mxu0 0.0
  %893 = vmatprep.subr.mxu0 0.0
  %894 = vmatpush1.msra.mxu0 0.0
  %895 = vmatprep.subr.mxu0 0.0
  %896 = vmatpush1.msra.mxu0 0.0
  %897 = vmatprep.subr.mxu0 0.0
  %898 = vmatpush1.msra.mxu0 0.0
  %899 = vmatprep.subr.mxu0 0.0
  %900 = vmatpush1.msra.mxu0 0.0
  %901 = vmatprep.subr.mxu0 0.0
  %902 = vmatpush1.msra.mxu0 0.0
  %903 = vmatprep.subr.mxu0 0.0
  %904 = vmatpush1.msra.mxu0 0.0
  %905 = vmatprep.mubr.f32.mxu0 %v830
  %906 = vmatmul.mubr.f32.gmra.mrb[0].mxu0 %v821
  %v907 = vpop.f32.mrb[0].mxu0
  %v908 = vadd.f32 0.0, %v907
  %v909 = vpop.f32.mrb[0].mxu0
  %910 = vmatprep.mubr.f32.mxu0 %v833
  %911 = vmatmul.mubr.f32.gmra.mrb[0].mxu0 %v823
  %v912 = vpop.f32.mrb[0].mxu0
  %v913 = vadd.f32 0.0, %v912
  %v914 = vpop.f32.mrb[0].mxu0
  %915 = vmatprep.mubr.f32.mxu0 %v836
  %916 = vmatmul.mubr.f32.gmra.mrb[0].mxu0 %v825
  %v917 = vpop.f32.mrb[0].mxu0
  %v918 = vadd.f32 0.0, %v917
  %v919 = vpop.f32.mrb[0].mxu0
  %920 = vmatprep.mubr.f32.mxu0 %v839
  %921 = vmatmul.mubr.f32.gmra.mrb[0].mxu0 %v827
  %v922 = vpop.f32.mrb[0].mxu0
  %v923 = vadd.f32 0.0, %v922
  %v924 = vpop.f32.mrb[0].mxu0
  %925 = vdwg.mxu0
  %v926 = vmax.f32 %v816, %v908
  %v927 = vmax.f32 %v817, %v913
  %v928 = vmax.f32 %v818, %v918
  %v929 = vmax.f32 %v819, %v923
  %v930 = vadd.f32 %v926, %v478
  %v931 = vadd.f32 %v927, %v478
  %v932 = vadd.f32 %v928, %v478
  %v933 = vadd.f32 %v929, %v478
  %v934 = vmax.f32 %v930, 0.0
  %v935 = vmax.f32 %v931, 0.0
  %v936 = vmax.f32 %v932, 0.0
  %v937 = vmax.f32 %v933, 0.0
  %s938 = scalar_lea.vmem %s3, 32
  %939 = vst.msk [vmem:[%s938] sm:$0xff] %vm488, %v934
  %940 = vst.msk [vmem:[%s938 + $0x8] sm:$0xff] %vm488, %v935
  %941 = vst.msk [vmem:[%s938 + $0x10] sm:$0xff] %vm488, %v936
  %942 = vst.msk [vmem:[%s938 + $0x18] sm:$0x1] %vm492, %v937
  // Predicated region
  $region14: #{net_forward.4} parent=0 // pred_check
    _
  $region15: #{net_forward.4} parent=0 // pred_check_branch
    %944 = sbr.rel (0) target = $region17
  $region16: #{net_forward.4} parent=0 // pred_region
    _
  $region17: #{net_forward.4} parent=0 // pred_fallthru
    _
  // Predicated region
  $region18: #{net_forward.4} parent=0 // pred_check
    _
  $region19: #{net_forward.4} parent=0 // pred_check_branch
    %946 = sbr.rel (0) target = $region21
  $region20: #{net_forward.4} parent=0 // pred_region
    _
  $region21: #{net_forward.4} parent=0 // pred_fallthru
    _

</llo_original>
